<compile_context>
chip_gen: v7x
topology: tpu7x:2x2x1
jax: 0.10.0
libtpu: 0.0.40
codegen_flags: <defaults>
</compile_context>

<pallas_src>
import numpy as np
import jax
import jax.numpy as jnp
from jax.experimental import pallas as pl
from jax.experimental.pallas import tpu as pltpu

KSIZE = 5
PAD = (KSIZE - 1) // 2

# Matmul input dtype. f32 keeps the self-test tight; on v6e/v7x flip this to
# jnp.bfloat16 (inputs only -- accumulation stays f32) for ~2x MXU throughput
# and half the VMEM/HBM footprint of activations/weights.
COMPUTE_DTYPE = jnp.float32


# ----------------------------------------------------------------------------
# Fused 5-layer Conv1d(k=5, same) + folded-BN + (tanh) kernel.
# One grid step per batch element.  Intermediate activations live in two
# ping-pong VMEM scratch buffers of shape (T + 2*PAD, C_max); the first/last
# PAD rows are kept zero so the edge taps of every layer read zeros
# (equivalent to 'same' zero padding), and columns are sliced per-layer to the
# actual channel width.
# ----------------------------------------------------------------------------
def make_postnet_kernel(T, c_dims, activations):
    n_layers = len(activations)

    def mm(a, b):
        if COMPUTE_DTYPE != jnp.float32:
            a = a.astype(COMPUTE_DTYPE)
            b = b.astype(COMPUTE_DTYPE)
        return jnp.dot(a, b, preferred_element_type=jnp.float32)

    def kernel(x_ref, *refs):
        w_refs = [refs[3 * l + 0] for l in range(n_layers)]
        s_refs = [refs[3 * l + 1] for l in range(n_layers)]
        b_refs = [refs[3 * l + 2] for l in range(n_layers)]
        out_ref = refs[3 * n_layers]
        buf_a = refs[3 * n_layers + 1]
        buf_b = refs[3 * n_layers + 2]

        c_max = buf_a.shape[1]
        zeros_edge = jnp.zeros((PAD, c_max), jnp.float32)
        # Zero the halo rows of both ping-pong buffers (done every grid step:
        # scratch is per-core and uninitialized on the first step of each core).
        buf_a[0:PAD, :] = zeros_edge
        buf_a[T + PAD:T + 2 * PAD, :] = zeros_edge
        buf_b[0:PAD, :] = zeros_edge
        buf_b[T + PAD:T + 2 * PAD, :] = zeros_edge

        # Load the input activation for this batch element into buffer A.
        c_in0 = c_dims[0]
        buf_a[PAD:PAD + T, 0:c_in0] = x_ref[0]

        bufs = [buf_a, buf_b]
        for l in range(n_layers):                       # static unroll (5 layers)
            src = bufs[l % 2]
            dst = bufs[(l + 1) % 2]
            c_in = c_dims[l]
            c_out = c_dims[l + 1]
            w = w_refs[l]

            # k=5 conv as 5 shifted MXU matmuls; acc init with the first tap.
            acc = mm(src[0:T, 0:c_in], w[0])
            for k in range(1, KSIZE):                   # static unroll over taps
                acc = acc + mm(src[k:k + T, 0:c_in], w[k])

            # Folded BatchNorm (eval) applied once after the tap loop.
            y = acc * s_refs[l][...] + b_refs[l][...]
            if activations[l] == 'tanh':
                y = jnp.tanh(y)
            # Dropout (eval) == identity.

            if l == n_layers - 1:
                out_ref[0] = y.astype(out_ref.dtype)
            else:
                dst[PAD:PAD + T, 0:c_out] = y

    return kernel


def postnet_forward(x_bct, layer_params):
    """x_bct: (B, mel_dim, T) in PyTorch NCT layout.

    layer_params: list of (w_kio, scale, bias, nonlinear) per layer,
      w_kio: (K, C_in, C_out), scale/bias: (1, C_out), nonlinear: 'tanh' | None.
    Returns (B, mel_dim, T).
    """
    B, c_in0, T = x_bct.shape
    c_dims = [c_in0] + [w.shape[2] for (w, _, _, _) in layer_params]
    activations = [nl for (_, _, _, nl) in layer_params]
    c_out = c_dims[-1]
    c_max = max(c_dims)

    x_btc = jnp.transpose(x_bct, (0, 2, 1))             # -> (B, T, C), once

    kernel = make_postnet_kernel(T, c_dims, activations)

    in_specs = [pl.BlockSpec((1, T, c_dims[0]), lambda b: (b, 0, 0))]
    flat_args = [x_btc]
    for (w, s, bias, _) in layer_params:
        in_specs.append(pl.BlockSpec(w.shape, lambda b: (0, 0, 0)))
        in_specs.append(pl.BlockSpec(s.shape, lambda b: (0, 0)))
        in_specs.append(pl.BlockSpec(bias.shape, lambda b: (0, 0)))
        flat_args += [w, s, bias]

    out_btc = pl.pallas_call(
        kernel,
        out_shape=jax.ShapeDtypeStruct((B, T, c_out), jnp.float32),
        grid=(B,),
        in_specs=in_specs,
        out_specs=pl.BlockSpec((1, T, c_out), lambda b: (b, 0, 0)),
        scratch_shapes=[
            pltpu.VMEM((T + 2 * PAD, c_max), jnp.float32),
            pltpu.VMEM((T + 2 * PAD, c_max), jnp.float32),
        ],
        compiler_params=pltpu.CompilerParams(
            dimension_semantics=("parallel",),
            vmem_limit_bytes=48 * 1024 * 1024),
    )(*flat_args)

    return jnp.transpose(out_btc, (0, 2, 1))            # back to (B, C, T)


# ----------------------------------------------------------------------------
# Pure-numpy reference for verification
# ----------------------------------------------------------------------------
def postnet_reference(x_bct, layer_params):
    x = np.transpose(np.asarray(x_bct), (0, 2, 1)).astype(np.float32)
    B, T, _ = x.shape
    for (w_kio, scale, bias, nl) in layer_params:
        w = np.asarray(w_kio)
        c_out = w.shape[2]
        xpad = np.pad(x, ((0, 0), (PAD, PAD), (0, 0)))
        acc = np.zeros((B, T, c_out), np.float32)
        for k in range(KSIZE):
            acc += np.einsum('bti,io->bto', xpad[:, k:k + T, :], w[k])
        y = acc * np.asarray(scale) + np.asarray(bias)
        if nl == 'tanh':
            y = np.tanh(y)
        x = y.astype(np.float32)
    return np.transpose(x, (0, 2, 1))


# ----------------------------------------------------------------------------
# Deterministic parameter construction (PyTorch-layout weights, BN folded)
# ----------------------------------------------------------------------------
def make_params(key, mel_dim, hidden, num_convs=5):
    channels = [mel_dim] + [hidden] * (num_convs - 1) + [mel_dim]
    nonlinears = ['tanh'] * (num_convs - 1) + [None]
    keys = jax.random.split(key, num_convs * 6)
    params = []
    ki = 0
    for l in range(num_convs):
        c_in, c_out = channels[l], channels[l + 1]
        # PyTorch Conv1d weight (C_out, C_in, K) -> kernel layout (K, C_in, C_out)
        w_oik = jax.random.normal(keys[ki], (c_out, c_in, KSIZE), jnp.float32) * 0.1; ki += 1
        w_kio = jnp.transpose(w_oik, (2, 1, 0))
        conv_bias = jax.random.normal(keys[ki], (c_out,), jnp.float32) * 0.1; ki += 1
        gamma = 1.0 + 0.1 * jax.random.normal(keys[ki], (c_out,), jnp.float32); ki += 1
        beta = 0.1 * jax.random.normal(keys[ki], (c_out,), jnp.float32); ki += 1
        running_mean = 0.1 * jax.random.normal(keys[ki], (c_out,), jnp.float32); ki += 1
        running_var = 1.0 + 0.1 * jax.random.uniform(keys[ki], (c_out,), jnp.float32); ki += 1
        bn_scale = gamma / jnp.sqrt(running_var + 1e-5)
        scale = bn_scale.reshape(1, c_out)
        bias = ((conv_bias - running_mean) * bn_scale + beta).reshape(1, c_out)
        params.append((w_kio, scale, bias, nonlinears[l]))
    return params


if __name__ == "__main__":
    # Small shapes consistent with the module: Postnet(mel_dim) with a reduced
    # hidden width (production uses hidden=512, mel_dim~80).
    B, MEL, T, HIDDEN = 2, 16, 40, 64

    key = jax.random.PRNGKey(0)
    kx, kp = jax.random.split(key)
    x = jax.random.normal(kx, (B, MEL, T), jnp.float32)   # PyTorch NCT layout

    layer_params = make_params(kp, MEL, HIDDEN, num_convs=5)

    out = postnet_forward(x, layer_params)
    out = jax.block_until_ready(out)

    ref = postnet_reference(x, layer_params)
    np.testing.assert_allclose(np.asarray(out), ref, rtol=1e-3, atol=1e-3)

    print("KERNEL_OK")
</pallas_src>

<mosaic_0001>
module attributes {stable_mosaic.version = 11 : i64} {
  func.func @kernel(%arg0: i32, %arg1: memref<1x40x16xf32, #tpu.memory_space<vmem>>, %arg2: memref<5x16x64xf32, #tpu.memory_space<vmem>>, %arg3: memref<1x64xf32, #tpu.memory_space<vmem>>, %arg4: memref<1x64xf32, #tpu.memory_space<vmem>>, %arg5: memref<5x64x64xf32, #tpu.memory_space<vmem>>, %arg6: memref<1x64xf32, #tpu.memory_space<vmem>>, %arg7: memref<1x64xf32, #tpu.memory_space<vmem>>, %arg8: memref<5x64x64xf32, #tpu.memory_space<vmem>>, %arg9: memref<1x64xf32, #tpu.memory_space<vmem>>, %arg10: memref<1x64xf32, #tpu.memory_space<vmem>>, %arg11: memref<5x64x64xf32, #tpu.memory_space<vmem>>, %arg12: memref<1x64xf32, #tpu.memory_space<vmem>>, %arg13: memref<1x64xf32, #tpu.memory_space<vmem>>, %arg14: memref<5x64x16xf32, #tpu.memory_space<vmem>>, %arg15: memref<1x16xf32, #tpu.memory_space<vmem>>, %arg16: memref<1x16xf32, #tpu.memory_space<vmem>>, %arg17: memref<1x40x16xf32, #tpu.memory_space<vmem>>, %arg18: memref<44x64xf32, #tpu.memory_space<vmem>>, %arg19: memref<44x64xf32, #tpu.memory_space<vmem>>) attributes {dimension_semantics = [#tpu.dimension_semantics<parallel>], iteration_bounds = array<i64: 2>, scalar_prefetch = 0 : i64, scratch_operands = 2 : i64, tpu.core_type = #tpu.core_type<tc>, window_params = [{transform_indices = @transform_0, window_bounds = array<i64: 1, 40, 16>}, {pipeline_mode = #tpu.pipeline_mode<synchronous>, transform_indices = @transform_1, window_bounds = array<i64: 5, 16, 64>}, {pipeline_mode = #tpu.pipeline_mode<synchronous>, transform_indices = @transform_2, window_bounds = array<i64: 1, 64>}, {pipeline_mode = #tpu.pipeline_mode<synchronous>, transform_indices = @transform_3, window_bounds = array<i64: 1, 64>}, {pipeline_mode = #tpu.pipeline_mode<synchronous>, transform_indices = @transform_4, window_bounds = array<i64: 5, 64, 64>}, {pipeline_mode = #tpu.pipeline_mode<synchronous>, transform_indices = @transform_5, window_bounds = array<i64: 1, 64>}, {pipeline_mode = #tpu.pipeline_mode<synchronous>, transform_indices = @transform_6, window_bounds = array<i64: 1, 64>}, {pipeline_mode = #tpu.pipeline_mode<synchronous>, transform_indices = @transform_7, window_bounds = array<i64: 5, 64, 64>}, {pipeline_mode = #tpu.pipeline_mode<synchronous>, transform_indices = @transform_8, window_bounds = array<i64: 1, 64>}, {pipeline_mode = #tpu.pipeline_mode<synchronous>, transform_indices = @transform_9, window_bounds = array<i64: 1, 64>}, {pipeline_mode = #tpu.pipeline_mode<synchronous>, transform_indices = @transform_10, window_bounds = array<i64: 5, 64, 64>}, {pipeline_mode = #tpu.pipeline_mode<synchronous>, transform_indices = @transform_11, window_bounds = array<i64: 1, 64>}, {pipeline_mode = #tpu.pipeline_mode<synchronous>, transform_indices = @transform_12, window_bounds = array<i64: 1, 64>}, {pipeline_mode = #tpu.pipeline_mode<synchronous>, transform_indices = @transform_13, window_bounds = array<i64: 5, 64, 16>}, {pipeline_mode = #tpu.pipeline_mode<synchronous>, transform_indices = @transform_14, window_bounds = array<i64: 1, 16>}, {pipeline_mode = #tpu.pipeline_mode<synchronous>, transform_indices = @transform_15, window_bounds = array<i64: 1, 16>}, {transform_indices = @transform_16, window_bounds = array<i64: 1, 40, 16>}]} {
    %cst = arith.constant 0.000000e+00 : f32
    %0 = vector.broadcast %cst : f32 to vector<2x64xf32>
    %c0 = arith.constant 0 : index
    %c0_0 = arith.constant 0 : index
    %1 = vector.load %arg18[%c0, %c0_0] : memref<44x64xf32, #tpu.memory_space<vmem>>, vector<2x64xf32>
    tpu.vector_store %arg18[%c0, %c0_0], %0 {strides = array<i32>} : memref<44x64xf32, #tpu.memory_space<vmem>>, vector<2x64xf32>,
    %c42 = arith.constant 42 : index
    %c0_1 = arith.constant 0 : index
    %2 = vector.load %arg18[%c42, %c0_1] : memref<44x64xf32, #tpu.memory_space<vmem>>, vector<2x64xf32>
    tpu.vector_store %arg18[%c42, %c0_1], %0 {strides = array<i32>} : memref<44x64xf32, #tpu.memory_space<vmem>>, vector<2x64xf32>,
    %c0_2 = arith.constant 0 : index
    %c0_3 = arith.constant 0 : index
    %3 = vector.load %arg19[%c0_2, %c0_3] : memref<44x64xf32, #tpu.memory_space<vmem>>, vector<2x64xf32>
    tpu.vector_store %arg19[%c0_2, %c0_3], %0 {strides = array<i32>} : memref<44x64xf32, #tpu.memory_space<vmem>>, vector<2x64xf32>,
    %c42_4 = arith.constant 42 : index
    %c0_5 = arith.constant 0 : index
    %4 = vector.load %arg19[%c42_4, %c0_5] : memref<44x64xf32, #tpu.memory_space<vmem>>, vector<2x64xf32>
    tpu.vector_store %arg19[%c42_4, %c0_5], %0 {strides = array<i32>} : memref<44x64xf32, #tpu.memory_space<vmem>>, vector<2x64xf32>,
    %c0_6 = arith.constant 0 : index
    %c0_7 = arith.constant 0 : index
    %c0_8 = arith.constant 0 : index
    %5 = vector.load %arg1[%c0_6, %c0_7, %c0_8] : memref<1x40x16xf32, #tpu.memory_space<vmem>>, vector<1x40x16xf32>
    %6 = vector.shape_cast %5 : vector<1x40x16xf32> to vector<40x16xf32>
    %c2 = arith.constant 2 : index
    %c0_9 = arith.constant 0 : index
    %7 = vector.load %arg18[%c2, %c0_9] : memref<44x64xf32, #tpu.memory_space<vmem>>, vector<40x16xf32>
    tpu.vector_store %arg18[%c2, %c0_9], %6 {strides = array<i32>} : memref<44x64xf32, #tpu.memory_space<vmem>>, vector<40x16xf32>,
    %c0_10 = arith.constant 0 : index
    %c0_11 = arith.constant 0 : index
    %8 = vector.load %arg18[%c0_10, %c0_11] : memref<44x64xf32, #tpu.memory_space<vmem>>, vector<40x16xf32>
    %c0_12 = arith.constant 0 : index
    %c0_13 = arith.constant 0 : index
    %c0_14 = arith.constant 0 : index
    %9 = vector.load %arg2[%c0_12, %c0_13, %c0_14] : memref<5x16x64xf32, #tpu.memory_space<vmem>>, vector<1x16x64xf32>
    %10 = vector.shape_cast %9 : vector<1x16x64xf32> to vector<16x64xf32>
    %cst_15 = arith.constant dense<0.000000e+00> : vector<40x64xf32>
    %11 = tpu.matmul %8, %10, %cst_15 {dimension_numbers = #tpu.dot_dimension_numbers<[1], [0], [0], [1], [0, 0, 1, 1], [], []>} : vector<40x16xf32>, vector<16x64xf32>, vector<40x64xf32> -> vector<40x64xf32>
    %c1 = arith.constant 1 : index
    %c0_16 = arith.constant 0 : index
    %12 = vector.load %arg18[%c1, %c0_16] : memref<44x64xf32, #tpu.memory_space<vmem>>, vector<40x16xf32>
    %c1_17 = arith.constant 1 : index
    %c0_18 = arith.constant 0 : index
    %c0_19 = arith.constant 0 : index
    %13 = vector.load %arg2[%c1_17, %c0_18, %c0_19] : memref<5x16x64xf32, #tpu.memory_space<vmem>>, vector<1x16x64xf32>
    %14 = vector.shape_cast %13 : vector<1x16x64xf32> to vector<16x64xf32>
    %cst_20 = arith.constant dense<0.000000e+00> : vector<40x64xf32>
    %15 = tpu.matmul %12, %14, %cst_20 {dimension_numbers = #tpu.dot_dimension_numbers<[1], [0], [0], [1], [0, 0, 1, 1], [], []>} : vector<40x16xf32>, vector<16x64xf32>, vector<40x64xf32> -> vector<40x64xf32>
    %16 = arith.addf %11, %15 : vector<40x64xf32>
    %c2_21 = arith.constant 2 : index
    %c0_22 = arith.constant 0 : index
    %17 = vector.load %arg18[%c2_21, %c0_22] : memref<44x64xf32, #tpu.memory_space<vmem>>, vector<40x16xf32>
    %c2_23 = arith.constant 2 : index
    %c0_24 = arith.constant 0 : index
    %c0_25 = arith.constant 0 : index
    %18 = vector.load %arg2[%c2_23, %c0_24, %c0_25] : memref<5x16x64xf32, #tpu.memory_space<vmem>>, vector<1x16x64xf32>
    %19 = vector.shape_cast %18 : vector<1x16x64xf32> to vector<16x64xf32>
    %cst_26 = arith.constant dense<0.000000e+00> : vector<40x64xf32>
    %20 = tpu.matmul %17, %19, %cst_26 {dimension_numbers = #tpu.dot_dimension_numbers<[1], [0], [0], [1], [0, 0, 1, 1], [], []>} : vector<40x16xf32>, vector<16x64xf32>, vector<40x64xf32> -> vector<40x64xf32>
    %21 = arith.addf %16, %20 : vector<40x64xf32>
    %c3 = arith.constant 3 : index
    %c0_27 = arith.constant 0 : index
    %22 = vector.load %arg18[%c3, %c0_27] : memref<44x64xf32, #tpu.memory_space<vmem>>, vector<40x16xf32>
    %c3_28 = arith.constant 3 : index
    %c0_29 = arith.constant 0 : index
    %c0_30 = arith.constant 0 : index
    %23 = vector.load %arg2[%c3_28, %c0_29, %c0_30] : memref<5x16x64xf32, #tpu.memory_space<vmem>>, vector<1x16x64xf32>
    %24 = vector.shape_cast %23 : vector<1x16x64xf32> to vector<16x64xf32>
    %cst_31 = arith.constant dense<0.000000e+00> : vector<40x64xf32>
    %25 = tpu.matmul %22, %24, %cst_31 {dimension_numbers = #tpu.dot_dimension_numbers<[1], [0], [0], [1], [0, 0, 1, 1], [], []>} : vector<40x16xf32>, vector<16x64xf32>, vector<40x64xf32> -> vector<40x64xf32>
    %26 = arith.addf %21, %25 : vector<40x64xf32>
    %c4 = arith.constant 4 : index
    %c0_32 = arith.constant 0 : index
    %27 = vector.load %arg18[%c4, %c0_32] : memref<44x64xf32, #tpu.memory_space<vmem>>, vector<40x16xf32>
    %c4_33 = arith.constant 4 : index
    %c0_34 = arith.constant 0 : index
    %c0_35 = arith.constant 0 : index
    %28 = vector.load %arg2[%c4_33, %c0_34, %c0_35] : memref<5x16x64xf32, #tpu.memory_space<vmem>>, vector<1x16x64xf32>
    %29 = vector.shape_cast %28 : vector<1x16x64xf32> to vector<16x64xf32>
    %cst_36 = arith.constant dense<0.000000e+00> : vector<40x64xf32>
    %30 = tpu.matmul %27, %29, %cst_36 {dimension_numbers = #tpu.dot_dimension_numbers<[1], [0], [0], [1], [0, 0, 1, 1], [], []>} : vector<40x16xf32>, vector<16x64xf32>, vector<40x64xf32> -> vector<40x64xf32>
    %31 = arith.addf %26, %30 : vector<40x64xf32>
    %c0_37 = arith.constant 0 : index
    %c0_38 = arith.constant 0 : index
    %32 = vector.load %arg3[%c0_37, %c0_38] : memref<1x64xf32, #tpu.memory_space<vmem>>, vector<1x64xf32>
    %33 = vector.broadcast %32 : vector<1x64xf32> to vector<40x64xf32>
    %34 = arith.mulf %31, %33 : vector<40x64xf32>
    %c0_39 = arith.constant 0 : index
    %c0_40 = arith.constant 0 : index
    %35 = vector.load %arg4[%c0_39, %c0_40] : memref<1x64xf32, #tpu.memory_space<vmem>>, vector<1x64xf32>
    %36 = vector.broadcast %35 : vector<1x64xf32> to vector<40x64xf32>
    %37 = arith.addf %34, %36 : vector<40x64xf32>
    %38 = math.tanh %37 : vector<40x64xf32>
    %c2_41 = arith.constant 2 : index
    %c0_42 = arith.constant 0 : index
    %39 = vector.load %arg19[%c2_41, %c0_42] : memref<44x64xf32, #tpu.memory_space<vmem>>, vector<40x64xf32>
    tpu.vector_store %arg19[%c2_41, %c0_42], %38 {strides = array<i32>} : memref<44x64xf32, #tpu.memory_space<vmem>>, vector<40x64xf32>,
    %c0_43 = arith.constant 0 : index
    %c0_44 = arith.constant 0 : index
    %40 = vector.load %arg19[%c0_43, %c0_44] : memref<44x64xf32, #tpu.memory_space<vmem>>, vector<40x64xf32>
    %c0_45 = arith.constant 0 : index
    %c0_46 = arith.constant 0 : index
    %c0_47 = arith.constant 0 : index
    %41 = vector.load %arg5[%c0_45, %c0_46, %c0_47] : memref<5x64x64xf32, #tpu.memory_space<vmem>>, vector<1x64x64xf32>
    %42 = vector.shape_cast %41 : vector<1x64x64xf32> to vector<64x64xf32>
    %cst_48 = arith.constant dense<0.000000e+00> : vector<40x64xf32>
    %43 = tpu.matmul %40, %42, %cst_48 {dimension_numbers = #tpu.dot_dimension_numbers<[1], [0], [0], [1], [0, 0, 1, 1], [], []>} : vector<40x64xf32>, vector<64x64xf32>, vector<40x64xf32> -> vector<40x64xf32>
    %c1_49 = arith.constant 1 : index
    %c0_50 = arith.constant 0 : index
    %44 = vector.load %arg19[%c1_49, %c0_50] : memref<44x64xf32, #tpu.memory_space<vmem>>, vector<40x64xf32>
    %c1_51 = arith.constant 1 : index
    %c0_52 = arith.constant 0 : index
    %c0_53 = arith.constant 0 : index
    %45 = vector.load %arg5[%c1_51, %c0_52, %c0_53] : memref<5x64x64xf32, #tpu.memory_space<vmem>>, vector<1x64x64xf32>
    %46 = vector.shape_cast %45 : vector<1x64x64xf32> to vector<64x64xf32>
    %cst_54 = arith.constant dense<0.000000e+00> : vector<40x64xf32>
    %47 = tpu.matmul %44, %46, %cst_54 {dimension_numbers = #tpu.dot_dimension_numbers<[1], [0], [0], [1], [0, 0, 1, 1], [], []>} : vector<40x64xf32>, vector<64x64xf32>, vector<40x64xf32> -> vector<40x64xf32>
    %48 = arith.addf %43, %47 : vector<40x64xf32>
    %c2_55 = arith.constant 2 : index
    %c0_56 = arith.constant 0 : index
    %49 = vector.load %arg19[%c2_55, %c0_56] : memref<44x64xf32, #tpu.memory_space<vmem>>, vector<40x64xf32>
    %c2_57 = arith.constant 2 : index
    %c0_58 = arith.constant 0 : index
    %c0_59 = arith.constant 0 : index
    %50 = vector.load %arg5[%c2_57, %c0_58, %c0_59] : memref<5x64x64xf32, #tpu.memory_space<vmem>>, vector<1x64x64xf32>
    %51 = vector.shape_cast %50 : vector<1x64x64xf32> to vector<64x64xf32>
    %cst_60 = arith.constant dense<0.000000e+00> : vector<40x64xf32>
    %52 = tpu.matmul %49, %51, %cst_60 {dimension_numbers = #tpu.dot_dimension_numbers<[1], [0], [0], [1], [0, 0, 1, 1], [], []>} : vector<40x64xf32>, vector<64x64xf32>, vector<40x64xf32> -> vector<40x64xf32>
    %53 = arith.addf %48, %52 : vector<40x64xf32>
    %c3_61 = arith.constant 3 : index
    %c0_62 = arith.constant 0 : index
    %54 = vector.load %arg19[%c3_61, %c0_62] : memref<44x64xf32, #tpu.memory_space<vmem>>, vector<40x64xf32>
    %c3_63 = arith.constant 3 : index
    %c0_64 = arith.constant 0 : index
    %c0_65 = arith.constant 0 : index
    %55 = vector.load %arg5[%c3_63, %c0_64, %c0_65] : memref<5x64x64xf32, #tpu.memory_space<vmem>>, vector<1x64x64xf32>
    %56 = vector.shape_cast %55 : vector<1x64x64xf32> to vector<64x64xf32>
    %cst_66 = arith.constant dense<0.000000e+00> : vector<40x64xf32>
    %57 = tpu.matmul %54, %56, %cst_66 {dimension_numbers = #tpu.dot_dimension_numbers<[1], [0], [0], [1], [0, 0, 1, 1], [], []>} : vector<40x64xf32>, vector<64x64xf32>, vector<40x64xf32> -> vector<40x64xf32>
    %58 = arith.addf %53, %57 : vector<40x64xf32>
    %c4_67 = arith.constant 4 : index
    %c0_68 = arith.constant 0 : index
    %59 = vector.load %arg19[%c4_67, %c0_68] : memref<44x64xf32, #tpu.memory_space<vmem>>, vector<40x64xf32>
    %c4_69 = arith.constant 4 : index
    %c0_70 = arith.constant 0 : index
    %c0_71 = arith.constant 0 : index
    %60 = vector.load %arg5[%c4_69, %c0_70, %c0_71] : memref<5x64x64xf32, #tpu.memory_space<vmem>>, vector<1x64x64xf32>
    %61 = vector.shape_cast %60 : vector<1x64x64xf32> to vector<64x64xf32>
    %cst_72 = arith.constant dense<0.000000e+00> : vector<40x64xf32>
    %62 = tpu.matmul %59, %61, %cst_72 {dimension_numbers = #tpu.dot_dimension_numbers<[1], [0], [0], [1], [0, 0, 1, 1], [], []>} : vector<40x64xf32>, vector<64x64xf32>, vector<40x64xf32> -> vector<40x64xf32>
    %63 = arith.addf %58, %62 : vector<40x64xf32>
    %c0_73 = arith.constant 0 : index
    %c0_74 = arith.constant 0 : index
    %64 = vector.load %arg6[%c0_73, %c0_74] : memref<1x64xf32, #tpu.memory_space<vmem>>, vector<1x64xf32>
    %65 = vector.broadcast %64 : vector<1x64xf32> to vector<40x64xf32>
    %66 = arith.mulf %63, %65 : vector<40x64xf32>
    %c0_75 = arith.constant 0 : index
    %c0_76 = arith.constant 0 : index
    %67 = vector.load %arg7[%c0_75, %c0_76] : memref<1x64xf32, #tpu.memory_space<vmem>>, vector<1x64xf32>
    %68 = vector.broadcast %67 : vector<1x64xf32> to vector<40x64xf32>
    %69 = arith.addf %66, %68 : vector<40x64xf32>
    %70 = math.tanh %69 : vector<40x64xf32>
    %c2_77 = arith.constant 2 : index
    %c0_78 = arith.constant 0 : index
    %71 = vector.load %arg18[%c2_77, %c0_78] : memref<44x64xf32, #tpu.memory_space<vmem>>, vector<40x64xf32>
    tpu.vector_store %arg18[%c2_77, %c0_78], %70 {strides = array<i32>} : memref<44x64xf32, #tpu.memory_space<vmem>>, vector<40x64xf32>,
    %c0_79 = arith.constant 0 : index
    %c0_80 = arith.constant 0 : index
    %72 = vector.load %arg18[%c0_79, %c0_80] : memref<44x64xf32, #tpu.memory_space<vmem>>, vector<40x64xf32>
    %c0_81 = arith.constant 0 : index
    %c0_82 = arith.constant 0 : index
    %c0_83 = arith.constant 0 : index
    %73 = vector.load %arg8[%c0_81, %c0_82, %c0_83] : memref<5x64x64xf32, #tpu.memory_space<vmem>>, vector<1x64x64xf32>
    %74 = vector.shape_cast %73 : vector<1x64x64xf32> to vector<64x64xf32>
    %cst_84 = arith.constant dense<0.000000e+00> : vector<40x64xf32>
    %75 = tpu.matmul %72, %74, %cst_84 {dimension_numbers = #tpu.dot_dimension_numbers<[1], [0], [0], [1], [0, 0, 1, 1], [], []>} : vector<40x64xf32>, vector<64x64xf32>, vector<40x64xf32> -> vector<40x64xf32>
    %c1_85 = arith.constant 1 : index
    %c0_86 = arith.constant 0 : index
    %76 = vector.load %arg18[%c1_85, %c0_86] : memref<44x64xf32, #tpu.memory_space<vmem>>, vector<40x64xf32>
    %c1_87 = arith.constant 1 : index
    %c0_88 = arith.constant 0 : index
    %c0_89 = arith.constant 0 : index
    %77 = vector.load %arg8[%c1_87, %c0_88, %c0_89] : memref<5x64x64xf32, #tpu.memory_space<vmem>>, vector<1x64x64xf32>
    %78 = vector.shape_cast %77 : vector<1x64x64xf32> to vector<64x64xf32>
    %cst_90 = arith.constant dense<0.000000e+00> : vector<40x64xf32>
    %79 = tpu.matmul %76, %78, %cst_90 {dimension_numbers = #tpu.dot_dimension_numbers<[1], [0], [0], [1], [0, 0, 1, 1], [], []>} : vector<40x64xf32>, vector<64x64xf32>, vector<40x64xf32> -> vector<40x64xf32>
    %80 = arith.addf %75, %79 : vector<40x64xf32>
    %c2_91 = arith.constant 2 : index
    %c0_92 = arith.constant 0 : index
    %81 = vector.load %arg18[%c2_91, %c0_92] : memref<44x64xf32, #tpu.memory_space<vmem>>, vector<40x64xf32>
    %c2_93 = arith.constant 2 : index
    %c0_94 = arith.constant 0 : index
    %c0_95 = arith.constant 0 : index
    %82 = vector.load %arg8[%c2_93, %c0_94, %c0_95] : memref<5x64x64xf32, #tpu.memory_space<vmem>>, vector<1x64x64xf32>
    %83 = vector.shape_cast %82 : vector<1x64x64xf32> to vector<64x64xf32>
    %cst_96 = arith.constant dense<0.000000e+00> : vector<40x64xf32>
    %84 = tpu.matmul %81, %83, %cst_96 {dimension_numbers = #tpu.dot_dimension_numbers<[1], [0], [0], [1], [0, 0, 1, 1], [], []>} : vector<40x64xf32>, vector<64x64xf32>, vector<40x64xf32> -> vector<40x64xf32>
    %85 = arith.addf %80, %84 : vector<40x64xf32>
    %c3_97 = arith.constant 3 : index
    %c0_98 = arith.constant 0 : index
    %86 = vector.load %arg18[%c3_97, %c0_98] : memref<44x64xf32, #tpu.memory_space<vmem>>, vector<40x64xf32>
    %c3_99 = arith.constant 3 : index
    %c0_100 = arith.constant 0 : index
    %c0_101 = arith.constant 0 : index
    %87 = vector.load %arg8[%c3_99, %c0_100, %c0_101] : memref<5x64x64xf32, #tpu.memory_space<vmem>>, vector<1x64x64xf32>
    %88 = vector.shape_cast %87 : vector<1x64x64xf32> to vector<64x64xf32>
    %cst_102 = arith.constant dense<0.000000e+00> : vector<40x64xf32>
    %89 = tpu.matmul %86, %88, %cst_102 {dimension_numbers = #tpu.dot_dimension_numbers<[1], [0], [0], [1], [0, 0, 1, 1], [], []>} : vector<40x64xf32>, vector<64x64xf32>, vector<40x64xf32> -> vector<40x64xf32>
    %90 = arith.addf %85, %89 : vector<40x64xf32>
    %c4_103 = arith.constant 4 : index
    %c0_104 = arith.constant 0 : index
    %91 = vector.load %arg18[%c4_103, %c0_104] : memref<44x64xf32, #tpu.memory_space<vmem>>, vector<40x64xf32>
    %c4_105 = arith.constant 4 : index
    %c0_106 = arith.constant 0 : index
    %c0_107 = arith.constant 0 : index
    %92 = vector.load %arg8[%c4_105, %c0_106, %c0_107] : memref<5x64x64xf32, #tpu.memory_space<vmem>>, vector<1x64x64xf32>
    %93 = vector.shape_cast %92 : vector<1x64x64xf32> to vector<64x64xf32>
    %cst_108 = arith.constant dense<0.000000e+00> : vector<40x64xf32>
    %94 = tpu.matmul %91, %93, %cst_108 {dimension_numbers = #tpu.dot_dimension_numbers<[1], [0], [0], [1], [0, 0, 1, 1], [], []>} : vector<40x64xf32>, vector<64x64xf32>, vector<40x64xf32> -> vector<40x64xf32>
    %95 = arith.addf %90, %94 : vector<40x64xf32>
    %c0_109 = arith.constant 0 : index
    %c0_110 = arith.constant 0 : index
    %96 = vector.load %arg9[%c0_109, %c0_110] : memref<1x64xf32, #tpu.memory_space<vmem>>, vector<1x64xf32>
    %97 = vector.broadcast %96 : vector<1x64xf32> to vector<40x64xf32>
    %98 = arith.mulf %95, %97 : vector<40x64xf32>
    %c0_111 = arith.constant 0 : index
    %c0_112 = arith.constant 0 : index
    %99 = vector.load %arg10[%c0_111, %c0_112] : memref<1x64xf32, #tpu.memory_space<vmem>>, vector<1x64xf32>
    %100 = vector.broadcast %99 : vector<1x64xf32> to vector<40x64xf32>
    %101 = arith.addf %98, %100 : vector<40x64xf32>
    %102 = math.tanh %101 : vector<40x64xf32>
    %c2_113 = arith.constant 2 : index
    %c0_114 = arith.constant 0 : index
    %103 = vector.load %arg19[%c2_113, %c0_114] : memref<44x64xf32, #tpu.memory_space<vmem>>, vector<40x64xf32>
    tpu.vector_store %arg19[%c2_113, %c0_114], %102 {strides = array<i32>} : memref<44x64xf32, #tpu.memory_space<vmem>>, vector<40x64xf32>,
    %c0_115 = arith.constant 0 : index
    %c0_116 = arith.constant 0 : index
    %104 = vector.load %arg19[%c0_115, %c0_116] : memref<44x64xf32, #tpu.memory_space<vmem>>, vector<40x64xf32>
    %c0_117 = arith.constant 0 : index
    %c0_118 = arith.constant 0 : index
    %c0_119 = arith.constant 0 : index
    %105 = vector.load %arg11[%c0_117, %c0_118, %c0_119] : memref<5x64x64xf32, #tpu.memory_space<vmem>>, vector<1x64x64xf32>
    %106 = vector.shape_cast %105 : vector<1x64x64xf32> to vector<64x64xf32>
    %cst_120 = arith.constant dense<0.000000e+00> : vector<40x64xf32>
    %107 = tpu.matmul %104, %106, %cst_120 {dimension_numbers = #tpu.dot_dimension_numbers<[1], [0], [0], [1], [0, 0, 1, 1], [], []>} : vector<40x64xf32>, vector<64x64xf32>, vector<40x64xf32> -> vector<40x64xf32>
    %c1_121 = arith.constant 1 : index
    %c0_122 = arith.constant 0 : index
    %108 = vector.load %arg19[%c1_121, %c0_122] : memref<44x64xf32, #tpu.memory_space<vmem>>, vector<40x64xf32>
    %c1_123 = arith.constant 1 : index
    %c0_124 = arith.constant 0 : index
    %c0_125 = arith.constant 0 : index
    %109 = vector.load %arg11[%c1_123, %c0_124, %c0_125] : memref<5x64x64xf32, #tpu.memory_space<vmem>>, vector<1x64x64xf32>
    %110 = vector.shape_cast %109 : vector<1x64x64xf32> to vector<64x64xf32>
    %cst_126 = arith.constant dense<0.000000e+00> : vector<40x64xf32>
    %111 = tpu.matmul %108, %110, %cst_126 {dimension_numbers = #tpu.dot_dimension_numbers<[1], [0], [0], [1], [0, 0, 1, 1], [], []>} : vector<40x64xf32>, vector<64x64xf32>, vector<40x64xf32> -> vector<40x64xf32>
    %112 = arith.addf %107, %111 : vector<40x64xf32>
    %c2_127 = arith.constant 2 : index
    %c0_128 = arith.constant 0 : index
    %113 = vector.load %arg19[%c2_127, %c0_128] : memref<44x64xf32, #tpu.memory_space<vmem>>, vector<40x64xf32>
    %c2_129 = arith.constant 2 : index
    %c0_130 = arith.constant 0 : index
    %c0_131 = arith.constant 0 : index
    %114 = vector.load %arg11[%c2_129, %c0_130, %c0_131] : memref<5x64x64xf32, #tpu.memory_space<vmem>>, vector<1x64x64xf32>
    %115 = vector.shape_cast %114 : vector<1x64x64xf32> to vector<64x64xf32>
    %cst_132 = arith.constant dense<0.000000e+00> : vector<40x64xf32>
    %116 = tpu.matmul %113, %115, %cst_132 {dimension_numbers = #tpu.dot_dimension_numbers<[1], [0], [0], [1], [0, 0, 1, 1], [], []>} : vector<40x64xf32>, vector<64x64xf32>, vector<40x64xf32> -> vector<40x64xf32>
    %117 = arith.addf %112, %116 : vector<40x64xf32>
    %c3_133 = arith.constant 3 : index
    %c0_134 = arith.constant 0 : index
    %118 = vector.load %arg19[%c3_133, %c0_134] : memref<44x64xf32, #tpu.memory_space<vmem>>, vector<40x64xf32>
    %c3_135 = arith.constant 3 : index
    %c0_136 = arith.constant 0 : index
    %c0_137 = arith.constant 0 : index
    %119 = vector.load %arg11[%c3_135, %c0_136, %c0_137] : memref<5x64x64xf32, #tpu.memory_space<vmem>>, vector<1x64x64xf32>
    %120 = vector.shape_cast %119 : vector<1x64x64xf32> to vector<64x64xf32>
    %cst_138 = arith.constant dense<0.000000e+00> : vector<40x64xf32>
    %121 = tpu.matmul %118, %120, %cst_138 {dimension_numbers = #tpu.dot_dimension_numbers<[1], [0], [0], [1], [0, 0, 1, 1], [], []>} : vector<40x64xf32>, vector<64x64xf32>, vector<40x64xf32> -> vector<40x64xf32>
    %122 = arith.addf %117, %121 : vector<40x64xf32>
    %c4_139 = arith.constant 4 : index
    %c0_140 = arith.constant 0 : index
    %123 = vector.load %arg19[%c4_139, %c0_140] : memref<44x64xf32, #tpu.memory_space<vmem>>, vector<40x64xf32>
    %c4_141 = arith.constant 4 : index
    %c0_142 = arith.constant 0 : index
    %c0_143 = arith.constant 0 : index
    %124 = vector.load %arg11[%c4_141, %c0_142, %c0_143] : memref<5x64x64xf32, #tpu.memory_space<vmem>>, vector<1x64x64xf32>
    %125 = vector.shape_cast %124 : vector<1x64x64xf32> to vector<64x64xf32>
    %cst_144 = arith.constant dense<0.000000e+00> : vector<40x64xf32>
    %126 = tpu.matmul %123, %125, %cst_144 {dimension_numbers = #tpu.dot_dimension_numbers<[1], [0], [0], [1], [0, 0, 1, 1], [], []>} : vector<40x64xf32>, vector<64x64xf32>, vector<40x64xf32> -> vector<40x64xf32>
    %127 = arith.addf %122, %126 : vector<40x64xf32>
    %c0_145 = arith.constant 0 : index
    %c0_146 = arith.constant 0 : index
    %128 = vector.load %arg12[%c0_145, %c0_146] : memref<1x64xf32, #tpu.memory_space<vmem>>, vector<1x64xf32>
    %129 = vector.broadcast %128 : vector<1x64xf32> to vector<40x64xf32>
    %130 = arith.mulf %127, %129 : vector<40x64xf32>
    %c0_147 = arith.constant 0 : index
    %c0_148 = arith.constant 0 : index
    %131 = vector.load %arg13[%c0_147, %c0_148] : memref<1x64xf32, #tpu.memory_space<vmem>>, vector<1x64xf32>
    %132 = vector.broadcast %131 : vector<1x64xf32> to vector<40x64xf32>
    %133 = arith.addf %130, %132 : vector<40x64xf32>
    %134 = math.tanh %133 : vector<40x64xf32>
    %c2_149 = arith.constant 2 : index
    %c0_150 = arith.constant 0 : index
    %135 = vector.load %arg18[%c2_149, %c0_150] : memref<44x64xf32, #tpu.memory_space<vmem>>, vector<40x64xf32>
    tpu.vector_store %arg18[%c2_149, %c0_150], %134 {strides = array<i32>} : memref<44x64xf32, #tpu.memory_space<vmem>>, vector<40x64xf32>,
    %c0_151 = arith.constant 0 : index
    %c0_152 = arith.constant 0 : index
    %136 = vector.load %arg18[%c0_151, %c0_152] : memref<44x64xf32, #tpu.memory_space<vmem>>, vector<40x64xf32>
    %c0_153 = arith.constant 0 : index
    %c0_154 = arith.constant 0 : index
    %c0_155 = arith.constant 0 : index
    %137 = vector.load %arg14[%c0_153, %c0_154, %c0_155] : memref<5x64x16xf32, #tpu.memory_space<vmem>>, vector<1x64x16xf32>
    %138 = vector.shape_cast %137 : vector<1x64x16xf32> to vector<64x16xf32>
    %cst_156 = arith.constant dense<0.000000e+00> : vector<40x16xf32>
    %139 = tpu.matmul %136, %138, %cst_156 {dimension_numbers = #tpu.dot_dimension_numbers<[1], [0], [0], [1], [0, 0, 1, 1], [], []>} : vector<40x64xf32>, vector<64x16xf32>, vector<40x16xf32> -> vector<40x16xf32>
    %c1_157 = arith.constant 1 : index
    %c0_158 = arith.constant 0 : index
    %140 = vector.load %arg18[%c1_157, %c0_158] : memref<44x64xf32, #tpu.memory_space<vmem>>, vector<40x64xf32>
    %c1_159 = arith.constant 1 : index
    %c0_160 = arith.constant 0 : index
    %c0_161 = arith.constant 0 : index
    %141 = vector.load %arg14[%c1_159, %c0_160, %c0_161] : memref<5x64x16xf32, #tpu.memory_space<vmem>>, vector<1x64x16xf32>
    %142 = vector.shape_cast %141 : vector<1x64x16xf32> to vector<64x16xf32>
    %cst_162 = arith.constant dense<0.000000e+00> : vector<40x16xf32>
    %143 = tpu.matmul %140, %142, %cst_162 {dimension_numbers = #tpu.dot_dimension_numbers<[1], [0], [0], [1], [0, 0, 1, 1], [], []>} : vector<40x64xf32>, vector<64x16xf32>, vector<40x16xf32> -> vector<40x16xf32>
    %144 = arith.addf %139, %143 : vector<40x16xf32>
    %c2_163 = arith.constant 2 : index
    %c0_164 = arith.constant 0 : index
    %145 = vector.load %arg18[%c2_163, %c0_164] : memref<44x64xf32, #tpu.memory_space<vmem>>, vector<40x64xf32>
    %c2_165 = arith.constant 2 : index
    %c0_166 = arith.constant 0 : index
    %c0_167 = arith.constant 0 : index
    %146 = vector.load %arg14[%c2_165, %c0_166, %c0_167] : memref<5x64x16xf32, #tpu.memory_space<vmem>>, vector<1x64x16xf32>
    %147 = vector.shape_cast %146 : vector<1x64x16xf32> to vector<64x16xf32>
    %cst_168 = arith.constant dense<0.000000e+00> : vector<40x16xf32>
    %148 = tpu.matmul %145, %147, %cst_168 {dimension_numbers = #tpu.dot_dimension_numbers<[1], [0], [0], [1], [0, 0, 1, 1], [], []>} : vector<40x64xf32>, vector<64x16xf32>, vector<40x16xf32> -> vector<40x16xf32>
    %149 = arith.addf %144, %148 : vector<40x16xf32>
    %c3_169 = arith.constant 3 : index
    %c0_170 = arith.constant 0 : index
    %150 = vector.load %arg18[%c3_169, %c0_170] : memref<44x64xf32, #tpu.memory_space<vmem>>, vector<40x64xf32>
    %c3_171 = arith.constant 3 : index
    %c0_172 = arith.constant 0 : index
    %c0_173 = arith.constant 0 : index
    %151 = vector.load %arg14[%c3_171, %c0_172, %c0_173] : memref<5x64x16xf32, #tpu.memory_space<vmem>>, vector<1x64x16xf32>
    %152 = vector.shape_cast %151 : vector<1x64x16xf32> to vector<64x16xf32>
    %cst_174 = arith.constant dense<0.000000e+00> : vector<40x16xf32>
    %153 = tpu.matmul %150, %152, %cst_174 {dimension_numbers = #tpu.dot_dimension_numbers<[1], [0], [0], [1], [0, 0, 1, 1], [], []>} : vector<40x64xf32>, vector<64x16xf32>, vector<40x16xf32> -> vector<40x16xf32>
    %154 = arith.addf %149, %153 : vector<40x16xf32>
    %c4_175 = arith.constant 4 : index
    %c0_176 = arith.constant 0 : index
    %155 = vector.load %arg18[%c4_175, %c0_176] : memref<44x64xf32, #tpu.memory_space<vmem>>, vector<40x64xf32>
    %c4_177 = arith.constant 4 : index
    %c0_178 = arith.constant 0 : index
    %c0_179 = arith.constant 0 : index
    %156 = vector.load %arg14[%c4_177, %c0_178, %c0_179] : memref<5x64x16xf32, #tpu.memory_space<vmem>>, vector<1x64x16xf32>
    %157 = vector.shape_cast %156 : vector<1x64x16xf32> to vector<64x16xf32>
    %cst_180 = arith.constant dense<0.000000e+00> : vector<40x16xf32>
    %158 = tpu.matmul %155, %157, %cst_180 {dimension_numbers = #tpu.dot_dimension_numbers<[1], [0], [0], [1], [0, 0, 1, 1], [], []>} : vector<40x64xf32>, vector<64x16xf32>, vector<40x16xf32> -> vector<40x16xf32>
    %159 = arith.addf %154, %158 : vector<40x16xf32>
    %c0_181 = arith.constant 0 : index
    %c0_182 = arith.constant 0 : index
    %160 = vector.load %arg15[%c0_181, %c0_182] : memref<1x16xf32, #tpu.memory_space<vmem>>, vector<1x16xf32>
    %161 = vector.broadcast %160 : vector<1x16xf32> to vector<40x16xf32>
    %162 = arith.mulf %159, %161 : vector<40x16xf32>
    %c0_183 = arith.constant 0 : index
    %c0_184 = arith.constant 0 : index
    %163 = vector.load %arg16[%c0_183, %c0_184] : memref<1x16xf32, #tpu.memory_space<vmem>>, vector<1x16xf32>
    %164 = vector.broadcast %163 : vector<1x16xf32> to vector<40x16xf32>
    %165 = arith.addf %162, %164 : vector<40x16xf32>
    %c0_185 = arith.constant 0 : index
    %c0_186 = arith.constant 0 : index
    %c0_187 = arith.constant 0 : index
    %166 = vector.load %arg17[%c0_185, %c0_186, %c0_187] : memref<1x40x16xf32, #tpu.memory_space<vmem>>, vector<1x40x16xf32>
    %167 = vector.shape_cast %166 : vector<1x40x16xf32> to vector<40x16xf32>
    %168 = vector.shape_cast %165 : vector<40x16xf32> to vector<1x40x16xf32>
    tpu.vector_store %arg17[%c0_185, %c0_186, %c0_187], %168 {strides = array<i32>} : memref<1x40x16xf32, #tpu.memory_space<vmem>>, vector<1x40x16xf32>,
    return
  }
  func.func @transform_0(%arg0: i32) -> (i32, i32, i32) {
    %c0_i32 = arith.constant 0 : i32
    %c0_i32_0 = arith.constant 0 : i32
    %c0_i32_1 = arith.constant 0 : i32
    return %arg0, %c0_i32, %c0_i32_0 : i32, i32, i32
  }
  func.func @transform_1(%arg0: i32) -> (i32, i32, i32) {
    %c0_i32 = arith.constant 0 : i32
    %c0_i32_0 = arith.constant 0 : i32
    %c0_i32_1 = arith.constant 0 : i32
    %c0_i32_2 = arith.constant 0 : i32
    return %c0_i32, %c0_i32_0, %c0_i32_1 : i32, i32, i32
  }
  func.func @transform_2(%arg0: i32) -> (i32, i32) {
    %c0_i32 = arith.constant 0 : i32
    %c0_i32_0 = arith.constant 0 : i32
    %c0_i32_1 = arith.constant 0 : i32
    return %c0_i32, %c0_i32_0 : i32, i32
  }
  func.func @transform_3(%arg0: i32) -> (i32, i32) {
    %c0_i32 = arith.constant 0 : i32
    %c0_i32_0 = arith.constant 0 : i32
    %c0_i32_1 = arith.constant 0 : i32
    return %c0_i32, %c0_i32_0 : i32, i32
  }
  func.func @transform_4(%arg0: i32) -> (i32, i32, i32) {
    %c0_i32 = arith.constant 0 : i32
    %c0_i32_0 = arith.constant 0 : i32
    %c0_i32_1 = arith.constant 0 : i32
    %c0_i32_2 = arith.constant 0 : i32
    return %c0_i32, %c0_i32_0, %c0_i32_1 : i32, i32, i32
  }
  func.func @transform_5(%arg0: i32) -> (i32, i32) {
    %c0_i32 = arith.constant 0 : i32
    %c0_i32_0 = arith.constant 0 : i32
    %c0_i32_1 = arith.constant 0 : i32
    return %c0_i32, %c0_i32_0 : i32, i32
  }
  func.func @transform_6(%arg0: i32) -> (i32, i32) {
    %c0_i32 = arith.constant 0 : i32
    %c0_i32_0 = arith.constant 0 : i32
    %c0_i32_1 = arith.constant 0 : i32
    return %c0_i32, %c0_i32_0 : i32, i32
  }
  func.func @transform_7(%arg0: i32) -> (i32, i32, i32) {
    %c0_i32 = arith.constant 0 : i32
    %c0_i32_0 = arith.constant 0 : i32
    %c0_i32_1 = arith.constant 0 : i32
    %c0_i32_2 = arith.constant 0 : i32
    return %c0_i32, %c0_i32_0, %c0_i32_1 : i32, i32, i32
  }
  func.func @transform_8(%arg0: i32) -> (i32, i32) {
    %c0_i32 = arith.constant 0 : i32
    %c0_i32_0 = arith.constant 0 : i32
    %c0_i32_1 = arith.constant 0 : i32
    return %c0_i32, %c0_i32_0 : i32, i32
  }
  func.func @transform_9(%arg0: i32) -> (i32, i32) {
    %c0_i32 = arith.constant 0 : i32
    %c0_i32_0 = arith.constant 0 : i32
    %c0_i32_1 = arith.constant 0 : i32
    return %c0_i32, %c0_i32_0 : i32, i32
  }
  func.func @transform_10(%arg0: i32) -> (i32, i32, i32) {
    %c0_i32 = arith.constant 0 : i32
    %c0_i32_0 = arith.constant 0 : i32
    %c0_i32_1 = arith.constant 0 : i32
    %c0_i32_2 = arith.constant 0 : i32
    return %c0_i32, %c0_i32_0, %c0_i32_1 : i32, i32, i32
  }
  func.func @transform_11(%arg0: i32) -> (i32, i32) {
    %c0_i32 = arith.constant 0 : i32
    %c0_i32_0 = arith.constant 0 : i32
    %c0_i32_1 = arith.constant 0 : i32
    return %c0_i32, %c0_i32_0 : i32, i32
  }
  func.func @transform_12(%arg0: i32) -> (i32, i32) {
    %c0_i32 = arith.constant 0 : i32
    %c0_i32_0 = arith.constant 0 : i32
    %c0_i32_1 = arith.constant 0 : i32
    return %c0_i32, %c0_i32_0 : i32, i32
  }
  func.func @transform_13(%arg0: i32) -> (i32, i32, i32) {
    %c0_i32 = arith.constant 0 : i32
    %c0_i32_0 = arith.constant 0 : i32
    %c0_i32_1 = arith.constant 0 : i32
    %c0_i32_2 = arith.constant 0 : i32
    return %c0_i32, %c0_i32_0, %c0_i32_1 : i32, i32, i32
  }
  func.func @transform_14(%arg0: i32) -> (i32, i32) {
    %c0_i32 = arith.constant 0 : i32
    %c0_i32_0 = arith.constant 0 : i32
    %c0_i32_1 = arith.constant 0 : i32
    return %c0_i32, %c0_i32_0 : i32, i32
  }
  func.func @transform_15(%arg0: i32) -> (i32, i32) {
    %c0_i32 = arith.constant 0 : i32
    %c0_i32_0 = arith.constant 0 : i32
    %c0_i32_1 = arith.constant 0 : i32
    return %c0_i32, %c0_i32_0 : i32, i32
  }
  func.func @transform_16(%arg0: i32) -> (i32, i32, i32) {
    %c0_i32 = arith.constant 0 : i32
    %c0_i32_0 = arith.constant 0 : i32
    %c0_i32_1 = arith.constant 0 : i32
    return %arg0, %c0_i32, %c0_i32_0 : i32, i32, i32
  }
}

</mosaic_0001>

<llo_original>
// kernel: tpu_custom_call.1
$region0: #{tpu_custom_call.1}
  #allocation0 [shape = 'u32[]', space=smem, size = 0x4, offset = 0x4, fixed_abs, tag = 'smem constant byte address 0x4 - core index']
  #allocation1 [shape = 'u32[144,128]{1,0:T(1,128)}', space=vmem, size = 0x12000, scoped, tag = 'internal scratch']
  #allocation2 [shape = 'f32[44,64]{1,0:T(8,128)}', space=vmem, size = 0x6000, scoped, tag = 'scratch operand']
  #allocation3 [shape = 'f32[44,64]{1,0:T(8,128)}', space=vmem, size = 0x6000, scoped, tag = 'scratch operand']
  %s0 = inlined_call_operand.vmem [shape: f32[2,40,16], index: 0, kind: input, shape index: {}]
  %s1 = inlined_call_operand.vmem [shape: f32[5,16,64], index: 1, kind: input, shape index: {}]
  %s2 = inlined_call_operand.vmem [shape: f32[1,64], index: 2, kind: input, shape index: {}]
  %s3 = inlined_call_operand.vmem [shape: f32[1,64], index: 3, kind: input, shape index: {}]
  %s4 = inlined_call_operand.vmem [shape: f32[5,64,64], index: 4, kind: input, shape index: {}]
  %s5 = inlined_call_operand.vmem [shape: f32[1,64], index: 5, kind: input, shape index: {}]
  %s6 = inlined_call_operand.vmem [shape: f32[1,64], index: 6, kind: input, shape index: {}]
  %s7 = inlined_call_operand.hbm [shape: f32[5,64,64], index: 7, kind: input, shape index: {}]
  %s8 = inlined_call_operand.vmem [shape: f32[1,64], index: 8, kind: input, shape index: {}]
  %s9 = inlined_call_operand.vmem [shape: f32[1,64], index: 9, kind: input, shape index: {}]
  %s10 = inlined_call_operand.hbm [shape: f32[5,64,64], index: 10, kind: input, shape index: {}]
  %s11 = inlined_call_operand.vmem [shape: f32[1,64], index: 11, kind: input, shape index: {}]
  %s12 = inlined_call_operand.vmem [shape: f32[1,64], index: 12, kind: input, shape index: {}]
  %s13 = inlined_call_operand.vmem [shape: f32[5,64,16], index: 13, kind: input, shape index: {}]
  %s14 = inlined_call_operand.vmem [shape: f32[1,16], index: 14, kind: input, shape index: {}]
  %s15 = inlined_call_operand.vmem [shape: f32[1,16], index: 15, kind: input, shape index: {}]
  %s16 = inlined_call_operand.vmem [shape: f32[2,40,16], index: 16, kind: output, shape index: {}]
  %s17 = sld [smem:[#allocation0]]
  $region105: #{tpu_custom_call.1} parent=0
    _
  %s19 = ssub.s32 1, %s17
  %s20 = scalar_select 0, %s19, %s17
  $region1: #{tpu_custom_call.1} parent=0
    #allocation4 [shape = 'u8[163840]{0}', space=vmem, size = 0x28000, scoped, tag = 'input window, operand 7, single buffered']
    #allocation5 [shape = 's32[2]{0}', space=sflag, size = 0x8, scoped, tag = 'scoped memory for tpu_custom_call.1']
    #allocation6 [shape = 'u8[163840]{0}', space=vmem, size = 0x28000, scoped, tag = 'input window, operand 10, single buffered']
    #allocation7 [shape = 's32[1]{0}', space=sflag, size = 0x4, scoped, tag = 'scoped memory for tpu_custom_call.1']
    %21 = vsyncpa [#allocation5], 0
    %22 = vsyncpa [#allocation7], 0
    loop: start=0, step=1, limit=4
    $region2: #{tpu_custom_call.1} parent=1 // loop_pre_header
      _
    $region3: #{tpu_custom_call.1} parent=1 // loop_header
      %s24 = sphi 0, %s28
      %p25 = scmp.ge.s32.totalorder %s24, 4
      %s34 = sphi 0, %s36
      %s37 = sphi 0, %s34
      %s38 = sphi 0, %s37
      %s54 = sphi 0, %s38
      %s58 = sphi 0, %s58
      %s60 = sphi 0, %s58
      %s61 = sphi 0, %s60
      %s75 = sphi 0, %s61
      %s79 = sphi 0, %s79
      %s81 = sphi 0, %s79
      %s82 = sphi 0, %s81
      %s96 = sphi 0, %s82
      %s100 = sphi 0, %s100
      %s102 = sphi 0, %s100
      %s103 = sphi 0, %s102
      %s117 = sphi 0, %s103
      %s121 = sphi 0, %s121
      %s123 = sphi 0, %s121
      %s124 = sphi 0, %s123
      %s138 = sphi 0, %s124
      %s142 = sphi 0, %s142
      %s144 = sphi 0, %s142
      %s145 = sphi 0, %s144
      %s159 = sphi 0, %s145
      %s163 = sphi 0, %s163
      %s165 = sphi 0, %s163
      %s166 = sphi 0, %s165
      %s180 = sphi 0, %s166
      %s184 = sphi 0, %s184
      %s186 = sphi 0, %s184
      %s187 = sphi 0, %s186
      %s201 = sphi 0, %s187
      %s205 = sphi 0, %s205
      %s207 = sphi 0, %s205
      %s208 = sphi 0, %s207
      %s222 = sphi 0, %s208
      %s226 = sphi 0, %s226
      %s228 = sphi 0, %s226
      %s229 = sphi 0, %s228
      %s243 = sphi 0, %s229
      %s247 = sphi 0, %s247
      %s249 = sphi 0, %s247
      %s250 = sphi 0, %s249
      %s264 = sphi 0, %s250
      %s268 = sphi 0, %s268
      %s270 = sphi 0, %s268
      %s271 = sphi 0, %s270
      %s285 = sphi 0, %s271
      %s289 = sphi 0, %s289
      %s291 = sphi 0, %s289
      %s292 = sphi 0, %s291
      %s306 = sphi 0, %s292
      %s310 = sphi 0, %s310
      %s312 = sphi 0, %s310
      %s313 = sphi 0, %s312
      %s327 = sphi 0, %s313
      %s331 = sphi 0, %s331
      %s333 = sphi 0, %s331
      %s334 = sphi 0, %s333
      %s348 = sphi 0, %s334
      %s352 = sphi 0, %s352
      %s354 = sphi 0, %s352
      %s355 = sphi 0, %s354
      %s369 = sphi 0, %s355
      %s375 = sphi 0, %s377
      %s378 = sphi 0, %s375
      %s379 = sphi 0, %s378
      %s395 = sphi 0, %s379
    $region4: #{tpu_custom_call.1} parent=1 // loop_header_branch
      %27 = sbr.rel (%p25) target = $region8
    $region5: #{tpu_custom_call.1} parent=1 // loop_body
      %s29 = ssub.s32 %s24, 1
      %s30 = ssub.s32 %s24, 2
      %s31 = sadd.s32 %s24, 1
      %s32 = ssub.s32 %s24, %s31
      %p33 = scmp.eq.s32.totalorder %s32, 0
      %s35 = sadd.s32 %s34, 1
      %s36 = scalar_select %p33, %s34, %s35
      %p39 = pneg %p33
      %p40 = scmp.eq.s32.totalorder %s24, 1
      %p41 = por %p39, %p40
      %p42 = scmp.ne.s32.totalorder %s34, %s37
      %p43 = scmp.eq.s32.totalorder %s24, 0
      %p44 = por %p42, %p43
      %p45 = scmp.ne.s32.totalorder %s34, %s37
      %p46 = scmp.eq.s32.totalorder %s29, 1
      %p47 = por %p45, %p46
      %p48 = scmp.ne.s32.totalorder %s37, %s38
      %p49 = scmp.eq.s32.totalorder %s29, 0
      %p50 = por %p48, %p49
      %p51 = scmp.ne.s32.totalorder %s37, %s38
      %p52 = scmp.eq.s32.totalorder %s30, 1
      %p53 = por %p51, %p52
      %p55 = scmp.ne.s32.totalorder %s38, %s54
      %p56 = scmp.eq.s32.totalorder %s30, 0
      %p57 = por %p55, %p56
      %s59 = sadd.s32 %s58, 1
      %p62 = scmp.eq.s32.totalorder %s24, 1
      %p63 = scmp.ne.s32.totalorder %s58, %s60
      %p64 = scmp.eq.s32.totalorder %s24, 0
      %p65 = por %p63, %p64
      %p66 = scmp.ne.s32.totalorder %s58, %s60
      %p67 = scmp.eq.s32.totalorder %s29, 1
      %p68 = por %p66, %p67
      %p69 = scmp.ne.s32.totalorder %s60, %s61
      %p70 = scmp.eq.s32.totalorder %s29, 0
      %p71 = por %p69, %p70
      %p72 = scmp.ne.s32.totalorder %s60, %s61
      %p73 = scmp.eq.s32.totalorder %s30, 1
      %p74 = por %p72, %p73
      %p76 = scmp.ne.s32.totalorder %s61, %s75
      %p77 = scmp.eq.s32.totalorder %s30, 0
      %p78 = por %p76, %p77
      %s80 = sadd.s32 %s79, 1
      %p83 = scmp.eq.s32.totalorder %s24, 1
      %p84 = scmp.ne.s32.totalorder %s79, %s81
      %p85 = scmp.eq.s32.totalorder %s24, 0
      %p86 = por %p84, %p85
      %p87 = scmp.ne.s32.totalorder %s79, %s81
      %p88 = scmp.eq.s32.totalorder %s29, 1
      %p89 = por %p87, %p88
      %p90 = scmp.ne.s32.totalorder %s81, %s82
      %p91 = scmp.eq.s32.totalorder %s29, 0
      %p92 = por %p90, %p91
      %p93 = scmp.ne.s32.totalorder %s81, %s82
      %p94 = scmp.eq.s32.totalorder %s30, 1
      %p95 = por %p93, %p94
      %p97 = scmp.ne.s32.totalorder %s82, %s96
      %p98 = scmp.eq.s32.totalorder %s30, 0
      %p99 = por %p97, %p98
      %s101 = sadd.s32 %s100, 1
      %p104 = scmp.eq.s32.totalorder %s24, 1
      %p105 = scmp.ne.s32.totalorder %s100, %s102
      %p106 = scmp.eq.s32.totalorder %s24, 0
      %p107 = por %p105, %p106
      %p108 = scmp.ne.s32.totalorder %s100, %s102
      %p109 = scmp.eq.s32.totalorder %s29, 1
      %p110 = por %p108, %p109
      %p111 = scmp.ne.s32.totalorder %s102, %s103
      %p112 = scmp.eq.s32.totalorder %s29, 0
      %p113 = por %p111, %p112
      %p114 = scmp.ne.s32.totalorder %s102, %s103
      %p115 = scmp.eq.s32.totalorder %s30, 1
      %p116 = por %p114, %p115
      %p118 = scmp.ne.s32.totalorder %s103, %s117
      %p119 = scmp.eq.s32.totalorder %s30, 0
      %p120 = por %p118, %p119
      %s122 = sadd.s32 %s121, 1
      %p125 = scmp.eq.s32.totalorder %s24, 1
      %p126 = scmp.ne.s32.totalorder %s121, %s123
      %p127 = scmp.eq.s32.totalorder %s24, 0
      %p128 = por %p126, %p127
      %p129 = scmp.ne.s32.totalorder %s121, %s123
      %p130 = scmp.eq.s32.totalorder %s29, 1
      %p131 = por %p129, %p130
      %p132 = scmp.ne.s32.totalorder %s123, %s124
      %p133 = scmp.eq.s32.totalorder %s29, 0
      %p134 = por %p132, %p133
      %p135 = scmp.ne.s32.totalorder %s123, %s124
      %p136 = scmp.eq.s32.totalorder %s30, 1
      %p137 = por %p135, %p136
      %p139 = scmp.ne.s32.totalorder %s124, %s138
      %p140 = scmp.eq.s32.totalorder %s30, 0
      %p141 = por %p139, %p140
      %s143 = sadd.s32 %s142, 1
      %p146 = scmp.eq.s32.totalorder %s24, 1
      %p147 = scmp.ne.s32.totalorder %s142, %s144
      %p148 = scmp.eq.s32.totalorder %s24, 0
      %p149 = por %p147, %p148
      %p150 = scmp.ne.s32.totalorder %s142, %s144
      %p151 = scmp.eq.s32.totalorder %s29, 1
      %p152 = por %p150, %p151
      %p153 = scmp.ne.s32.totalorder %s144, %s145
      %p154 = scmp.eq.s32.totalorder %s29, 0
      %p155 = por %p153, %p154
      %p156 = scmp.ne.s32.totalorder %s144, %s145
      %p157 = scmp.eq.s32.totalorder %s30, 1
      %p158 = por %p156, %p157
      %p160 = scmp.ne.s32.totalorder %s145, %s159
      %p161 = scmp.eq.s32.totalorder %s30, 0
      %p162 = por %p160, %p161
      %s164 = sadd.s32 %s163, 1
      %p167 = scmp.eq.s32.totalorder %s24, 1
      %p168 = scmp.ne.s32.totalorder %s163, %s165
      %p169 = scmp.eq.s32.totalorder %s24, 0
      %p170 = por %p168, %p169
      %p171 = scmp.ne.s32.totalorder %s163, %s165
      %p172 = scmp.eq.s32.totalorder %s29, 1
      %p173 = por %p171, %p172
      %p174 = scmp.ne.s32.totalorder %s165, %s166
      %p175 = scmp.eq.s32.totalorder %s29, 0
      %p176 = por %p174, %p175
      %p177 = scmp.ne.s32.totalorder %s165, %s166
      %p178 = scmp.eq.s32.totalorder %s30, 1
      %p179 = por %p177, %p178
      %p181 = scmp.ne.s32.totalorder %s166, %s180
      %p182 = scmp.eq.s32.totalorder %s30, 0
      %p183 = por %p181, %p182
      %s185 = sadd.s32 %s184, 1
      %p188 = scmp.eq.s32.totalorder %s24, 1
      %p189 = scmp.ne.s32.totalorder %s184, %s186
      %p190 = scmp.eq.s32.totalorder %s24, 0
      %p191 = por %p189, %p190
      %p192 = scmp.ne.s32.totalorder %s184, %s186
      %p193 = scmp.eq.s32.totalorder %s29, 1
      %p194 = por %p192, %p193
      %p195 = scmp.ne.s32.totalorder %s186, %s187
      %p196 = scmp.eq.s32.totalorder %s29, 0
      %p197 = por %p195, %p196
      %p198 = scmp.ne.s32.totalorder %s186, %s187
      %p199 = scmp.eq.s32.totalorder %s30, 1
      %p200 = por %p198, %p199
      %p202 = scmp.ne.s32.totalorder %s187, %s201
      %p203 = scmp.eq.s32.totalorder %s30, 0
      %p204 = por %p202, %p203
      %s206 = sadd.s32 %s205, 1
      %p209 = scmp.eq.s32.totalorder %s24, 1
      %p210 = scmp.ne.s32.totalorder %s205, %s207
      %p211 = scmp.eq.s32.totalorder %s24, 0
      %p212 = por %p210, %p211
      %p213 = scmp.ne.s32.totalorder %s205, %s207
      %p214 = scmp.eq.s32.totalorder %s29, 1
      %p215 = por %p213, %p214
      %p216 = scmp.ne.s32.totalorder %s207, %s208
      %p217 = scmp.eq.s32.totalorder %s29, 0
      %p218 = por %p216, %p217
      %p219 = scmp.ne.s32.totalorder %s207, %s208
      %p220 = scmp.eq.s32.totalorder %s30, 1
      %p221 = por %p219, %p220
      %p223 = scmp.ne.s32.totalorder %s208, %s222
      %p224 = scmp.eq.s32.totalorder %s30, 0
      %p225 = por %p223, %p224
      %s227 = sadd.s32 %s226, 1
      %p230 = scmp.eq.s32.totalorder %s24, 1
      %p231 = scmp.ne.s32.totalorder %s226, %s228
      %p232 = scmp.eq.s32.totalorder %s24, 0
      %p233 = por %p231, %p232
      %p234 = scmp.ne.s32.totalorder %s226, %s228
      %p235 = scmp.eq.s32.totalorder %s29, 1
      %p236 = por %p234, %p235
      %p237 = scmp.ne.s32.totalorder %s228, %s229
      %p238 = scmp.eq.s32.totalorder %s29, 0
      %p239 = por %p237, %p238
      %p240 = scmp.ne.s32.totalorder %s228, %s229
      %p241 = scmp.eq.s32.totalorder %s30, 1
      %p242 = por %p240, %p241
      %p244 = scmp.ne.s32.totalorder %s229, %s243
      %p245 = scmp.eq.s32.totalorder %s30, 0
      %p246 = por %p244, %p245
      %s248 = sadd.s32 %s247, 1
      %p251 = scmp.eq.s32.totalorder %s24, 1
      %p252 = scmp.ne.s32.totalorder %s247, %s249
      %p253 = scmp.eq.s32.totalorder %s24, 0
      %p254 = por %p252, %p253
      %p255 = scmp.ne.s32.totalorder %s247, %s249
      %p256 = scmp.eq.s32.totalorder %s29, 1
      %p257 = por %p255, %p256
      %p258 = scmp.ne.s32.totalorder %s249, %s250
      %p259 = scmp.eq.s32.totalorder %s29, 0
      %p260 = por %p258, %p259
      %p261 = scmp.ne.s32.totalorder %s249, %s250
      %p262 = scmp.eq.s32.totalorder %s30, 1
      %p263 = por %p261, %p262
      %p265 = scmp.ne.s32.totalorder %s250, %s264
      %p266 = scmp.eq.s32.totalorder %s30, 0
      %p267 = por %p265, %p266
      %s269 = sadd.s32 %s268, 1
      %p272 = scmp.eq.s32.totalorder %s24, 1
      %p273 = scmp.ne.s32.totalorder %s268, %s270
      %p274 = scmp.eq.s32.totalorder %s24, 0
      %p275 = por %p273, %p274
      %p276 = scmp.ne.s32.totalorder %s268, %s270
      %p277 = scmp.eq.s32.totalorder %s29, 1
      %p278 = por %p276, %p277
      %p279 = scmp.ne.s32.totalorder %s270, %s271
      %p280 = scmp.eq.s32.totalorder %s29, 0
      %p281 = por %p279, %p280
      %p282 = scmp.ne.s32.totalorder %s270, %s271
      %p283 = scmp.eq.s32.totalorder %s30, 1
      %p284 = por %p282, %p283
      %p286 = scmp.ne.s32.totalorder %s271, %s285
      %p287 = scmp.eq.s32.totalorder %s30, 0
      %p288 = por %p286, %p287
      %s290 = sadd.s32 %s289, 1
      %p293 = scmp.eq.s32.totalorder %s24, 1
      %p294 = scmp.ne.s32.totalorder %s289, %s291
      %p295 = scmp.eq.s32.totalorder %s24, 0
      %p296 = por %p294, %p295
      %p297 = scmp.ne.s32.totalorder %s289, %s291
      %p298 = scmp.eq.s32.totalorder %s29, 1
      %p299 = por %p297, %p298
      %p300 = scmp.ne.s32.totalorder %s291, %s292
      %p301 = scmp.eq.s32.totalorder %s29, 0
      %p302 = por %p300, %p301
      %p303 = scmp.ne.s32.totalorder %s291, %s292
      %p304 = scmp.eq.s32.totalorder %s30, 1
      %p305 = por %p303, %p304
      %p307 = scmp.ne.s32.totalorder %s292, %s306
      %p308 = scmp.eq.s32.totalorder %s30, 0
      %p309 = por %p307, %p308
      %s311 = sadd.s32 %s310, 1
      %p314 = scmp.eq.s32.totalorder %s24, 1
      %p315 = scmp.ne.s32.totalorder %s310, %s312
      %p316 = scmp.eq.s32.totalorder %s24, 0
      %p317 = por %p315, %p316
      %p318 = scmp.ne.s32.totalorder %s310, %s312
      %p319 = scmp.eq.s32.totalorder %s29, 1
      %p320 = por %p318, %p319
      %p321 = scmp.ne.s32.totalorder %s312, %s313
      %p322 = scmp.eq.s32.totalorder %s29, 0
      %p323 = por %p321, %p322
      %p324 = scmp.ne.s32.totalorder %s312, %s313
      %p325 = scmp.eq.s32.totalorder %s30, 1
      %p326 = por %p324, %p325
      %p328 = scmp.ne.s32.totalorder %s313, %s327
      %p329 = scmp.eq.s32.totalorder %s30, 0
      %p330 = por %p328, %p329
      %s332 = sadd.s32 %s331, 1
      %p335 = scmp.eq.s32.totalorder %s24, 1
      %p336 = scmp.ne.s32.totalorder %s331, %s333
      %p337 = scmp.eq.s32.totalorder %s24, 0
      %p338 = por %p336, %p337
      %p339 = scmp.ne.s32.totalorder %s331, %s333
      %p340 = scmp.eq.s32.totalorder %s29, 1
      %p341 = por %p339, %p340
      %p342 = scmp.ne.s32.totalorder %s333, %s334
      %p343 = scmp.eq.s32.totalorder %s29, 0
      %p344 = por %p342, %p343
      %p345 = scmp.ne.s32.totalorder %s333, %s334
      %p346 = scmp.eq.s32.totalorder %s30, 1
      %p347 = por %p345, %p346
      %p349 = scmp.ne.s32.totalorder %s334, %s348
      %p350 = scmp.eq.s32.totalorder %s30, 0
      %p351 = por %p349, %p350
      %s353 = sadd.s32 %s352, 1
      %p356 = scmp.eq.s32.totalorder %s24, 1
      %p357 = scmp.ne.s32.totalorder %s352, %s354
      %p358 = scmp.eq.s32.totalorder %s24, 0
      %p359 = por %p357, %p358
      %p360 = scmp.ne.s32.totalorder %s352, %s354
      %p361 = scmp.eq.s32.totalorder %s29, 1
      %p362 = por %p360, %p361
      %p363 = scmp.ne.s32.totalorder %s354, %s355
      %p364 = scmp.eq.s32.totalorder %s29, 0
      %p365 = por %p363, %p364
      %p366 = scmp.ne.s32.totalorder %s354, %s355
      %p367 = scmp.eq.s32.totalorder %s30, 1
      %p368 = por %p366, %p367
      %p370 = scmp.ne.s32.totalorder %s355, %s369
      %p371 = scmp.eq.s32.totalorder %s30, 0
      %p372 = por %p370, %p371
      %s373 = ssub.s32 %s24, %s31
      %p374 = scmp.eq.s32.totalorder %s373, 0
      %s376 = sadd.s32 %s375, 1
      %s377 = scalar_select %p374, %s375, %s376
      %p380 = pneg %p374
      %p381 = scmp.eq.s32.totalorder %s24, 1
      %p382 = por %p380, %p381
      %p383 = scmp.ne.s32.totalorder %s375, %s378
      %p384 = scmp.eq.s32.totalorder %s24, 0
      %p385 = por %p383, %p384
      %p386 = scmp.ne.s32.totalorder %s375, %s378
      %p387 = scmp.eq.s32.totalorder %s29, 1
      %p388 = por %p386, %p387
      %p389 = scmp.ne.s32.totalorder %s378, %s379
      %p390 = scmp.eq.s32.totalorder %s29, 0
      %p391 = por %p389, %p390
      %p392 = scmp.ne.s32.totalorder %s378, %s379
      %p393 = scmp.eq.s32.totalorder %s30, 1
      %p394 = por %p392, %p393
      %p396 = scmp.ne.s32.totalorder %s379, %s395
      %p397 = scmp.eq.s32.totalorder %s30, 0
      %p398 = por %p396, %p397
      %p399 = scmp.le.s32.totalorder 1, %s24
      %p400 = scmp.lt.s32.totalorder %s24, 3
      %p401 = pnand %p399, %p400
      %p402 = pneg %p401
      // Predicated region
      $region9: #{tpu_custom_call.1} parent=5 // pred_check
        _
      $region10: #{tpu_custom_call.1} parent=5 // pred_check_branch
        %404 = sbr.rel (%p401) target = $region12
      $region11: #{tpu_custom_call.1} parent=5 // pred_region
        %s405 = ssub.s32 %s24, 1
        // Predicated region
        $region13: #{tpu_custom_call.1} parent=11 // pred_check
          %p406 = pneg %p71
        $region14: #{tpu_custom_call.1} parent=11 // pred_check_branch
          %408 = sbr.rel (%p406) target = $region16
        $region15: #{tpu_custom_call.1} parent=11 // pred_region
          _
        $region16: #{tpu_custom_call.1} parent=11 // pred_fallthru
          _
        // Predicated region
        $region17: #{tpu_custom_call.1} parent=11 // pred_check
          %p409 = pneg %p92
        $region18: #{tpu_custom_call.1} parent=11 // pred_check_branch
          %411 = sbr.rel (%p409) target = $region20
        $region19: #{tpu_custom_call.1} parent=11 // pred_region
          _
        $region20: #{tpu_custom_call.1} parent=11 // pred_fallthru
          _
        // Predicated region
        $region21: #{tpu_custom_call.1} parent=11 // pred_check
          %p412 = pneg %p113
        $region22: #{tpu_custom_call.1} parent=11 // pred_check_branch
          %414 = sbr.rel (%p412) target = $region24
        $region23: #{tpu_custom_call.1} parent=11 // pred_region
          _
        $region24: #{tpu_custom_call.1} parent=11 // pred_fallthru
          _
        // Predicated region
        $region25: #{tpu_custom_call.1} parent=11 // pred_check
          %p415 = pneg %p134
        $region26: #{tpu_custom_call.1} parent=11 // pred_check_branch
          %417 = sbr.rel (%p415) target = $region28
        $region27: #{tpu_custom_call.1} parent=11 // pred_region
          _
        $region28: #{tpu_custom_call.1} parent=11 // pred_fallthru
          _
        // Predicated region
        $region29: #{tpu_custom_call.1} parent=11 // pred_check
          %p418 = pneg %p155
        $region30: #{tpu_custom_call.1} parent=11 // pred_check_branch
          %420 = sbr.rel (%p418) target = $region32
        $region31: #{tpu_custom_call.1} parent=11 // pred_region
          _
        $region32: #{tpu_custom_call.1} parent=11 // pred_fallthru
          _
        // Predicated region
        $region33: #{tpu_custom_call.1} parent=11 // pred_check
          %p421 = pneg %p176
        $region34: #{tpu_custom_call.1} parent=11 // pred_check_branch
          %423 = sbr.rel (%p421) target = $region36
        $region35: #{tpu_custom_call.1} parent=11 // pred_region
          _
        $region36: #{tpu_custom_call.1} parent=11 // pred_fallthru
          _
        // Predicated region
        $region37: #{tpu_custom_call.1} parent=11 // pred_check
          %p424 = pneg %p197
        $region38: #{tpu_custom_call.1} parent=11 // pred_check_branch
          %426 = sbr.rel (%p424) target = $region40
        $region39: #{tpu_custom_call.1} parent=11 // pred_region
          %s428 = ssub.s32 5120, 5120
          %429 = vsyncadd [#allocation5], %s428
          %s430 = sshll.u32 [#allocation4], 4
          %s431 = int_to_ptr.vmem [resolvable:$true] %s430
          %436 = dma.hbm_to_vmem [thread:$0]  %s7, 5120, %s431, [#allocation5], 128, 128, 8
        $region40: #{tpu_custom_call.1} parent=11 // pred_fallthru
          _
        // Predicated region
        $region41: #{tpu_custom_call.1} parent=11 // pred_check
          %p437 = pneg %p218
        $region42: #{tpu_custom_call.1} parent=11 // pred_check_branch
          %439 = sbr.rel (%p437) target = $region44
        $region43: #{tpu_custom_call.1} parent=11 // pred_region
          _
        $region44: #{tpu_custom_call.1} parent=11 // pred_fallthru
          _
        // Predicated region
        $region45: #{tpu_custom_call.1} parent=11 // pred_check
          %p440 = pneg %p239
        $region46: #{tpu_custom_call.1} parent=11 // pred_check_branch
          %442 = sbr.rel (%p440) target = $region48
        $region47: #{tpu_custom_call.1} parent=11 // pred_region
          _
        $region48: #{tpu_custom_call.1} parent=11 // pred_fallthru
          _
        // Predicated region
        $region49: #{tpu_custom_call.1} parent=11 // pred_check
          %p443 = pneg %p260
        $region50: #{tpu_custom_call.1} parent=11 // pred_check_branch
          %445 = sbr.rel (%p443) target = $region52
        $region51: #{tpu_custom_call.1} parent=11 // pred_region
          %s447 = ssub.s32 5120, 5120
          %448 = vsyncadd [#allocation7], %s447
          %s449 = sshll.u32 [#allocation6], 4
          %s450 = int_to_ptr.vmem [resolvable:$true] %s449
          %455 = dma.hbm_to_vmem [thread:$0]  %s10, 5120, %s450, [#allocation7], 128, 128, 8
        $region52: #{tpu_custom_call.1} parent=11 // pred_fallthru
          _
        // Predicated region
        $region53: #{tpu_custom_call.1} parent=11 // pred_check
          %p456 = pneg %p281
        $region54: #{tpu_custom_call.1} parent=11 // pred_check_branch
          %458 = sbr.rel (%p456) target = $region56
        $region55: #{tpu_custom_call.1} parent=11 // pred_region
          _
        $region56: #{tpu_custom_call.1} parent=11 // pred_fallthru
          _
        // Predicated region
        $region57: #{tpu_custom_call.1} parent=11 // pred_check
          %p459 = pneg %p302
        $region58: #{tpu_custom_call.1} parent=11 // pred_check_branch
          %461 = sbr.rel (%p459) target = $region60
        $region59: #{tpu_custom_call.1} parent=11 // pred_region
          _
        $region60: #{tpu_custom_call.1} parent=11 // pred_fallthru
          _
        // Predicated region
        $region61: #{tpu_custom_call.1} parent=11 // pred_check
          %p462 = pneg %p323
        $region62: #{tpu_custom_call.1} parent=11 // pred_check_branch
          %464 = sbr.rel (%p462) target = $region64
        $region63: #{tpu_custom_call.1} parent=11 // pred_region
          _
        $region64: #{tpu_custom_call.1} parent=11 // pred_fallthru
          _
        // Predicated region
        $region65: #{tpu_custom_call.1} parent=11 // pred_check
          %p465 = pneg %p344
        $region66: #{tpu_custom_call.1} parent=11 // pred_check_branch
          %467 = sbr.rel (%p465) target = $region68
        $region67: #{tpu_custom_call.1} parent=11 // pred_region
          _
        $region68: #{tpu_custom_call.1} parent=11 // pred_fallthru
          _
        // Predicated region
        $region69: #{tpu_custom_call.1} parent=11 // pred_check
          %p468 = pneg %p365
        $region70: #{tpu_custom_call.1} parent=11 // pred_check_branch
          %470 = sbr.rel (%p468) target = $region72
        $region71: #{tpu_custom_call.1} parent=11 // pred_region
          _
        $region72: #{tpu_custom_call.1} parent=11 // pred_fallthru
          _
      $region12: #{tpu_custom_call.1} parent=5 // pred_fallthru
        _
      %p471 = scmp.lt.s32.totalorder %s24, 2
      // Predicated region
      $region73: #{tpu_custom_call.1} parent=5 // pred_check
        %p472 = pneg %p471
      $region74: #{tpu_custom_call.1} parent=5 // pred_check_branch
        %474 = sbr.rel (%p472) target = $region76
      $region75: #{tpu_custom_call.1} parent=5 // pred_region
        // Predicated region
        $region77: #{tpu_custom_call.1} parent=75 // pred_check
          %p475 = pneg %p44
        $region78: #{tpu_custom_call.1} parent=75 // pred_check_branch
          %477 = sbr.rel (%p475) target = $region80
        $region79: #{tpu_custom_call.1} parent=75 // pred_region
          %p478 = scmp.lt.s32.totalorder %s24, 1
          %s479 = scalar_select %p478, %s24, 1
          %s480 = smul.addr %s479, 5
          %s481 = smul.addr %s480, 8
          %s482 = scalar_lea.vmem %s0, %s481
        $region80: #{tpu_custom_call.1} parent=75 // pred_fallthru
          _
      $region76: #{tpu_custom_call.1} parent=5 // pred_fallthru
        _
      %p483 = scmp.le.s32.totalorder 1, %s24
      %p484 = scmp.lt.s32.totalorder %s24, 3
      %p485 = pnand %p483, %p484
      %p486 = pneg %p485
      // Predicated region
      $region81: #{tpu_custom_call.1} parent=5 // pred_check
        _
      $region82: #{tpu_custom_call.1} parent=5 // pred_check_branch
        %488 = sbr.rel (%p485) target = $region84
      $region83: #{tpu_custom_call.1} parent=5 // pred_region
        %s489 = ssub.s32 %s24, 1
        // Predicated region
        $region85: #{tpu_custom_call.1} parent=83 // pred_check
          %p490 = pneg %p197
        $region86: #{tpu_custom_call.1} parent=83 // pred_check_branch
          %492 = sbr.rel (%p490) target = $region88
        $region87: #{tpu_custom_call.1} parent=83 // pred_region
          %493 = dma.done [#allocation5], 5120
        $region88: #{tpu_custom_call.1} parent=83 // pred_fallthru
          _
        // Predicated region
        $region89: #{tpu_custom_call.1} parent=83 // pred_check
          %p494 = pneg %p260
        $region90: #{tpu_custom_call.1} parent=83 // pred_check_branch
          %496 = sbr.rel (%p494) target = $region92
        $region91: #{tpu_custom_call.1} parent=83 // pred_region
          %497 = dma.done [#allocation7], 5120
        $region92: #{tpu_custom_call.1} parent=83 // pred_fallthru
          _
        %p498 = scmp.lt.s32.totalorder %s29, 1
        %s499 = scalar_select %p498, %s29, 1
        %s500 = smul.addr %s499, 5
        %s501 = smul.addr %s500, 8
        %s502 = scalar_lea.vmem %s0, %s501
        %p503 = pneg %p50
        %p504 = pneg %p47
        %p505 = pneg %p71
        %p506 = pneg %p68
        %p507 = pneg %p92
        %p508 = pneg %p89
        %p509 = pneg %p113
        %p510 = pneg %p110
        %p511 = pneg %p134
        %p512 = pneg %p131
        %p513 = pneg %p155
        %p514 = pneg %p152
        %p515 = pneg %p176
        %p516 = pneg %p173
        %p517 = pneg %p197
        %p518 = pneg %p194
        %p519 = pneg %p218
        %p520 = pneg %p215
        %p521 = pneg %p239
        %p522 = pneg %p236
        %p523 = pneg %p260
        %p524 = pneg %p257
        %p525 = pneg %p281
        %p526 = pneg %p278
        %p527 = pneg %p302
        %p528 = pneg %p299
        %p529 = pneg %p323
        %p530 = pneg %p320
        %p531 = pneg %p344
        %p532 = pneg %p341
        %p533 = pneg %p365
        %p534 = pneg %p362
        %p535 = pneg %p391
        %p536 = pneg %p388
        %p537 = scmp.lt.s32.totalorder %s29, 1
        %s538 = scalar_select %p537, %s29, 1
        %s539 = smul.addr %s538, 5
        %s540 = smul.addr %s539, 8
        %s541 = scalar_lea.vmem %s16, %s540
        %p542 = scmp.lt.s32.totalorder %s29, 1
        %s543 = scalar_select %p542, %s29, 1
        %s544 = smul.addr %s543, 5
        %s545 = smul.addr %s544, 8
        %s546 = scalar_lea.vmem %s0, %s545
        %p547 = scmp.lt.s32.totalorder %s29, 1
        %s548 = scalar_select %p547, %s29, 1
        %s549 = smul.addr %s548, 5
        %s550 = smul.addr %s549, 8
        %s551 = scalar_lea.vmem %s16, %s550
        %vm552 = vcmask 517120
        %553 = vst.msk [vmem:[#allocation2] sm:$0x3] %vm552, 0.0
        %554 = vst.msk [vmem:[#allocation2 + $0x2a] sm:$0x3] %vm552, 0.0
        %555 = vst.msk [vmem:[#allocation3] sm:$0x3] %vm552, 0.0
        %556 = vst.msk [vmem:[#allocation3 + $0x2a] sm:$0x3] %vm552, 0.0
        %v557 = vld [vmem:[%s546] sm:$0xff]
        %v558 = vld [vmem:[%s546 + $0x8] sm:$0xff]
        %v559 = vld [vmem:[%s546 + $0x10] sm:$0xff]
        %v560 = vld [vmem:[%s546 + $0x18] sm:$0xff]
        %v561 = vld [vmem:[%s546 + $0x20] sm:$0xff]
        %vm562 = vcmask 130048
        %563 = vst.msk [vmem:[#allocation2 + $0x2] sm:$0xff] %vm562, %v557
        %564 = vst.msk [vmem:[#allocation2 + $0xa] sm:$0xff] %vm562, %v558
        %565 = vst.msk [vmem:[#allocation2 + $0x12] sm:$0xff] %vm562, %v559
        %566 = vst.msk [vmem:[#allocation2 + $0x1a] sm:$0xff] %vm562, %v560
        %567 = vst.msk [vmem:[#allocation2 + $0x22] sm:$0xff] %vm562, %v561
        %v568 = vld [vmem:[#allocation2] sm:$0xff]
        %v569 = vld [vmem:[#allocation2 + $0x8] sm:$0xff]
        %v570 = vld [vmem:[#allocation2 + $0x10] sm:$0xff]
        %v571 = vld [vmem:[#allocation2 + $0x18] sm:$0xff]
        %v572 = vld [vmem:[#allocation2 + $0x20] sm:$0xff]
        %v573 = vld [vmem:[%s1] sm:$0xff]
        %v574 = vld [vmem:[%s1 + $0x8] sm:$0xff]
        %v575 = vld [vmem:[#allocation2 + $0x1] sm:$0xff]
        %v576 = vld [vmem:[#allocation2 + $0x9] sm:$0xff]
        %v577 = vld [vmem:[#allocation2 + $0x11] sm:$0xff]
        %v578 = vld [vmem:[#allocation2 + $0x19] sm:$0xff]
        %v579 = vld [vmem:[#allocation2 + $0x21] sm:$0xff]
        %s580 = scalar_lea.vmem %s1, 16
        %v581 = vld [vmem:[%s580] sm:$0xff]
        %v582 = vld [vmem:[%s580 + $0x8] sm:$0xff]
        %v584 = vsel %vm562, %v575, 0
        %v587 = vsel %vm562, %v576, 0
        %v590 = vsel %vm562, %v577, 0
        %v593 = vsel %vm562, %v578, 0
        %v596 = vsel %vm562, %v579, 0
        %598 = vmatprep.subr.mxu0 0.0
        %599 = vmatpush1.msra.mxu0 %v581
        %600 = vmatprep.subr.mxu0 0.0
        %601 = vmatpush1.msra.mxu0 %v582
        %602 = vmatprep.subr.mxu0 0.0
        %603 = vmatpush1.msra.mxu0 0.0
        %604 = vmatprep.subr.mxu0 0.0
        %605 = vmatpush1.msra.mxu0 0.0
        %606 = vmatprep.subr.mxu0 0.0
        %607 = vmatpush1.msra.mxu0 0.0
        %608 = vmatprep.subr.mxu0 0.0
        %609 = vmatpush1.msra.mxu0 0.0
        %610 = vmatprep.subr.mxu0 0.0
        %611 = vmatpush1.msra.mxu0 0.0
        %612 = vmatprep.subr.mxu0 0.0
        %613 = vmatpush1.msra.mxu0 0.0
        %614 = vmatprep.subr.mxu0 0.0
        %615 = vmatpush1.msra.mxu0 0.0
        %616 = vmatprep.subr.mxu0 0.0
        %617 = vmatpush1.msra.mxu0 0.0
        %618 = vmatprep.subr.mxu0 0.0
        %619 = vmatpush1.msra.mxu0 0.0
        %620 = vmatprep.subr.mxu0 0.0
        %621 = vmatpush1.msra.mxu0 0.0
        %622 = vmatprep.subr.mxu0 0.0
        %623 = vmatpush1.msra.mxu0 0.0
        %624 = vmatprep.subr.mxu0 0.0
        %625 = vmatpush1.msra.mxu0 0.0
        %626 = vmatprep.subr.mxu0 0.0
        %627 = vmatpush1.msra.mxu0 0.0
        %628 = vmatprep.subr.mxu0 0.0
        %629 = vmatpush1.msra.mxu0 0.0
        %630 = vmatprep.subr.mxu0 0.0
        %631 = vmatpush1.msra.mxu0 0.0
        %632 = vmatprep.subr.mxu0 0.0
        %633 = vmatpush1.msra.mxu0 0.0
        %634 = vmatprep.subr.mxu0 0.0
        %635 = vmatpush1.msra.mxu0 0.0
        %636 = vmatprep.subr.mxu0 0.0
        %637 = vmatpush1.msra.mxu0 0.0
        %638 = vmatprep.subr.mxu0 0.0
        %639 = vmatpush1.msra.mxu0 0.0
        %640 = vmatprep.subr.mxu0 0.0
        %641 = vmatpush1.msra.mxu0 0.0
        %642 = vmatprep.subr.mxu0 0.0
        %643 = vmatpush1.msra.mxu0 0.0
        %644 = vmatprep.subr.mxu0 0.0
        %645 = vmatpush1.msra.mxu0 0.0
        %646 = vmatprep.subr.mxu0 0.0
        %647 = vmatpush1.msra.mxu0 0.0
        %648 = vmatprep.subr.mxu0 0.0
        %649 = vmatpush1.msra.mxu0 0.0
        %650 = vmatprep.subr.mxu0 0.0
        %651 = vmatpush1.msra.mxu0 0.0
        %652 = vmatprep.subr.mxu0 0.0
        %653 = vmatpush1.msra.mxu0 0.0
        %654 = vmatprep.subr.mxu0 0.0
        %655 = vmatpush1.msra.mxu0 0.0
        %656 = vmatprep.subr.mxu0 0.0
        %657 = vmatpush1.msra.mxu0 0.0
        %658 = vmatprep.subr.mxu0 0.0
        %659 = vmatpush1.msra.mxu0 0.0
        %660 = vmatprep.subr.mxu0 0.0
        %661 = vmatpush1.msra.mxu0 0.0
        %662 = vmatprep.mubr.f32.mxu0 0.0
        %663 = vmatmul.mubr.f32.gmra.mrb[0].mxu0 %v584
        %v664 = vpop.f32.mrb[0].mxu0
        %v665 = vadd.f32 0.0, %v664
        %v666 = vpop.f32.mrb[0].mxu0
        %667 = vmatprep.mubr.f32.mxu0 0.0
        %668 = vmatmul.mubr.f32.gmra.mrb[0].mxu0 %v587
        %v669 = vpop.f32.mrb[0].mxu0
        %v670 = vadd.f32 0.0, %v669
        %v671 = vpop.f32.mrb[0].mxu0
        %672 = vmatprep.mubr.f32.mxu0 0.0
        %673 = vmatmul.mubr.f32.gmra.mrb[0].mxu0 %v590
        %v674 = vpop.f32.mrb[0].mxu0
        %v675 = vadd.f32 0.0, %v674
        %v676 = vpop.f32.mrb[0].mxu0
        %677 = vmatprep.mubr.f32.mxu0 0.0
        %678 = vmatmul.mubr.f32.gmra.mrb[0].mxu0 %v593
        %v679 = vpop.f32.mrb[0].mxu0
        %v680 = vadd.f32 0.0, %v679
        %v681 = vpop.f32.mrb[0].mxu0
        %682 = vmatprep.mubr.f32.mxu0 0.0
        %683 = vmatmul.mubr.f32.gmra.mrb[0].mxu0 %v596
        %v684 = vpop.f32.mrb[0].mxu0
        %v685 = vadd.f32 0.0, %v684
        %v686 = vpop.f32.mrb[0].mxu0
        %687 = vdwg.mxu0
        %v689 = vsel %vm562, %v568, 0
        %v692 = vsel %vm562, %v569, 0
        %v695 = vsel %vm562, %v570, 0
        %v698 = vsel %vm562, %v571, 0
        %v701 = vsel %vm562, %v572, 0
        %703 = vmatprep.subr.mxu0 0.0
        %704 = vmatpush1.msra.mxu0 %v573
        %705 = vmatprep.subr.mxu0 0.0
        %706 = vmatpush1.msra.mxu0 %v574
        %707 = vmatprep.subr.mxu0 0.0
        %708 = vmatpush1.msra.mxu0 0.0
        %709 = vmatprep.subr.mxu0 0.0
        %710 = vmatpush1.msra.mxu0 0.0
        %711 = vmatprep.subr.mxu0 0.0
        %712 = vmatpush1.msra.mxu0 0.0
        %713 = vmatprep.subr.mxu0 0.0
        %714 = vmatpush1.msra.mxu0 0.0
        %715 = vmatprep.subr.mxu0 0.0
        %716 = vmatpush1.msra.mxu0 0.0
        %717 = vmatprep.subr.mxu0 0.0
        %718 = vmatpush1.msra.mxu0 0.0
        %719 = vmatprep.subr.mxu0 0.0
        %720 = vmatpush1.msra.mxu0 0.0
        %721 = vmatprep.subr.mxu0 0.0
        %722 = vmatpush1.msra.mxu0 0.0
        %723 = vmatprep.subr.mxu0 0.0
        %724 = vmatpush1.msra.mxu0 0.0
        %725 = vmatprep.subr.mxu0 0.0
        %726 = vmatpush1.msra.mxu0 0.0
        %727 = vmatprep.subr.mxu0 0.0
        %728 = vmatpush1.msra.mxu0 0.0
        %729 = vmatprep.subr.mxu0 0.0
        %730 = vmatpush1.msra.mxu0 0.0
        %731 = vmatprep.subr.mxu0 0.0
        %732 = vmatpush1.msra.mxu0 0.0
        %733 = vmatprep.subr.mxu0 0.0
        %734 = vmatpush1.msra.mxu0 0.0
        %735 = vmatprep.subr.mxu0 0.0
        %736 = vmatpush1.msra.mxu0 0.0
        %737 = vmatprep.subr.mxu0 0.0
        %738 = vmatpush1.msra.mxu0 0.0
        %739 = vmatprep.subr.mxu0 0.0
        %740 = vmatpush1.msra.mxu0 0.0
        %741 = vmatprep.subr.mxu0 0.0
        %742 = vmatpush1.msra.mxu0 0.0
        %743 = vmatprep.subr.mxu0 0.0
        %744 = vmatpush1.msra.mxu0 0.0
        %745 = vmatprep.subr.mxu0 0.0
        %746 = vmatpush1.msra.mxu0 0.0
        %747 = vmatprep.subr.mxu0 0.0
        %748 = vmatpush1.msra.mxu0 0.0
        %749 = vmatprep.subr.mxu0 0.0
        %750 = vmatpush1.msra.mxu0 0.0
        %751 = vmatprep.subr.mxu0 0.0
        %752 = vmatpush1.msra.mxu0 0.0
        %753 = vmatprep.subr.mxu0 0.0
        %754 = vmatpush1.msra.mxu0 0.0
        %755 = vmatprep.subr.mxu0 0.0
        %756 = vmatpush1.msra.mxu0 0.0
        %757 = vmatprep.subr.mxu0 0.0
        %758 = vmatpush1.msra.mxu0 0.0
        %759 = vmatprep.subr.mxu0 0.0
        %760 = vmatpush1.msra.mxu0 0.0
        %761 = vmatprep.subr.mxu0 0.0
        %762 = vmatpush1.msra.mxu0 0.0
        %763 = vmatprep.subr.mxu0 0.0
        %764 = vmatpush1.msra.mxu0 0.0
        %765 = vmatprep.subr.mxu0 0.0
        %766 = vmatpush1.msra.mxu0 0.0
        %767 = vmatprep.mubr.f32.mxu0 0.0
        %768 = vmatmul.mubr.f32.gmra.mrb[0].mxu0 %v689
        %v769 = vpop.f32.mrb[0].mxu0
        %v770 = vadd.f32 %v665, %v769
        %v771 = vpop.f32.mrb[0].mxu0
        %772 = vmatprep.mubr.f32.mxu0 0.0
        %773 = vmatmul.mubr.f32.gmra.mrb[0].mxu0 %v692
        %v774 = vpop.f32.mrb[0].mxu0
        %v775 = vadd.f32 %v670, %v774
        %v776 = vpop.f32.mrb[0].mxu0
        %777 = vmatprep.mubr.f32.mxu0 0.0
        %778 = vmatmul.mubr.f32.gmra.mrb[0].mxu0 %v695
        %v779 = vpop.f32.mrb[0].mxu0
        %v780 = vadd.f32 %v675, %v779
        %v781 = vpop.f32.mrb[0].mxu0
        %782 = vmatprep.mubr.f32.mxu0 0.0
        %783 = vmatmul.mubr.f32.gmra.mrb[0].mxu0 %v698
        %v784 = vpop.f32.mrb[0].mxu0
        %v785 = vadd.f32 %v680, %v784
        %v786 = vpop.f32.mrb[0].mxu0
        %787 = vmatprep.mubr.f32.mxu0 0.0
        %788 = vmatmul.mubr.f32.gmra.mrb[0].mxu0 %v701
        %v789 = vpop.f32.mrb[0].mxu0
        %v790 = vadd.f32 %v685, %v789
        %v791 = vpop.f32.mrb[0].mxu0
        %792 = vdwg.mxu0
        %v793 = vld [vmem:[#allocation2 + $0x2] sm:$0xff]
        %v794 = vld [vmem:[#allocation2 + $0xa] sm:$0xff]
        %v795 = vld [vmem:[#allocation2 + $0x12] sm:$0xff]
        %v796 = vld [vmem:[#allocation2 + $0x1a] sm:$0xff]
        %v797 = vld [vmem:[#allocation2 + $0x22] sm:$0xff]
        %s798 = scalar_lea.vmem %s1, 32
        %v799 = vld [vmem:[%s798] sm:$0xff]
        %v800 = vld [vmem:[%s798 + $0x8] sm:$0xff]
        %v802 = vsel %vm562, %v793, 0
        %v805 = vsel %vm562, %v794, 0
        %v808 = vsel %vm562, %v795, 0
        %v811 = vsel %vm562, %v796, 0
        %v814 = vsel %vm562, %v797, 0
        %816 = vmatprep.subr.mxu0 0.0
        %817 = vmatpush1.msra.mxu0 %v799
        %818 = vmatprep.subr.mxu0 0.0
        %819 = vmatpush1.msra.mxu0 %v800
        %820 = vmatprep.subr.mxu0 0.0
        %821 = vmatpush1.msra.mxu0 0.0
        %822 = vmatprep.subr.mxu0 0.0
        %823 = vmatpush1.msra.mxu0 0.0
        %824 = vmatprep.subr.mxu0 0.0
        %825 = vmatpush1.msra.mxu0 0.0
        %826 = vmatprep.subr.mxu0 0.0
        %827 = vmatpush1.msra.mxu0 0.0
        %828 = vmatprep.subr.mxu0 0.0
        %829 = vmatpush1.msra.mxu0 0.0
        %830 = vmatprep.subr.mxu0 0.0
        %831 = vmatpush1.msra.mxu0 0.0
        %832 = vmatprep.subr.mxu0 0.0
        %833 = vmatpush1.msra.mxu0 0.0
        %834 = vmatprep.subr.mxu0 0.0
        %835 = vmatpush1.msra.mxu0 0.0
        %836 = vmatprep.subr.mxu0 0.0
        %837 = vmatpush1.msra.mxu0 0.0
        %838 = vmatprep.subr.mxu0 0.0
        %839 = vmatpush1.msra.mxu0 0.0
        %840 = vmatprep.subr.mxu0 0.0
        %841 = vmatpush1.msra.mxu0 0.0
        %842 = vmatprep.subr.mxu0 0.0
        %843 = vmatpush1.msra.mxu0 0.0
        %844 = vmatprep.subr.mxu0 0.0
        %845 = vmatpush1.msra.mxu0 0.0
        %846 = vmatprep.subr.mxu0 0.0
        %847 = vmatpush1.msra.mxu0 0.0
        %848 = vmatprep.subr.mxu0 0.0
        %849 = vmatpush1.msra.mxu0 0.0
        %850 = vmatprep.subr.mxu0 0.0
        %851 = vmatpush1.msra.mxu0 0.0
        %852 = vmatprep.subr.mxu0 0.0
        %853 = vmatpush1.msra.mxu0 0.0
        %854 = vmatprep.subr.mxu0 0.0
        %855 = vmatpush1.msra.mxu0 0.0
        %856 = vmatprep.subr.mxu0 0.0
        %857 = vmatpush1.msra.mxu0 0.0
        %858 = vmatprep.subr.mxu0 0.0
        %859 = vmatpush1.msra.mxu0 0.0
        %860 = vmatprep.subr.mxu0 0.0
        %861 = vmatpush1.msra.mxu0 0.0
        %862 = vmatprep.subr.mxu0 0.0
        %863 = vmatpush1.msra.mxu0 0.0
        %864 = vmatprep.subr.mxu0 0.0
        %865 = vmatpush1.msra.mxu0 0.0
        %866 = vmatprep.subr.mxu0 0.0
        %867 = vmatpush1.msra.mxu0 0.0
        %868 = vmatprep.subr.mxu0 0.0
        %869 = vmatpush1.msra.mxu0 0.0
        %870 = vmatprep.subr.mxu0 0.0
        %871 = vmatpush1.msra.mxu0 0.0
        %872 = vmatprep.subr.mxu0 0.0
        %873 = vmatpush1.msra.mxu0 0.0
        %874 = vmatprep.subr.mxu0 0.0
        %875 = vmatpush1.msra.mxu0 0.0
        %876 = vmatprep.subr.mxu0 0.0
        %877 = vmatpush1.msra.mxu0 0.0
        %878 = vmatprep.subr.mxu0 0.0
        %879 = vmatpush1.msra.mxu0 0.0
        %880 = vmatprep.mubr.f32.mxu0 0.0
        %881 = vmatmul.mubr.f32.gmra.mrb[0].mxu0 %v802
        %v882 = vpop.f32.mrb[0].mxu0
        %v883 = vadd.f32 0.0, %v882
        %v884 = vpop.f32.mrb[0].mxu0
        %885 = vmatprep.mubr.f32.mxu0 0.0
        %886 = vmatmul.mubr.f32.gmra.mrb[0].mxu0 %v805
        %v887 = vpop.f32.mrb[0].mxu0
        %v888 = vadd.f32 0.0, %v887
        %v889 = vpop.f32.mrb[0].mxu0
        %890 = vmatprep.mubr.f32.mxu0 0.0
        %891 = vmatmul.mubr.f32.gmra.mrb[0].mxu0 %v808
        %v892 = vpop.f32.mrb[0].mxu0
        %v893 = vadd.f32 0.0, %v892
        %v894 = vpop.f32.mrb[0].mxu0
        %895 = vmatprep.mubr.f32.mxu0 0.0
        %896 = vmatmul.mubr.f32.gmra.mrb[0].mxu0 %v811
        %v897 = vpop.f32.mrb[0].mxu0
        %v898 = vadd.f32 0.0, %v897
        %v899 = vpop.f32.mrb[0].mxu0
        %900 = vmatprep.mubr.f32.mxu0 0.0
        %901 = vmatmul.mubr.f32.gmra.mrb[0].mxu0 %v814
        %v902 = vpop.f32.mrb[0].mxu0
        %v903 = vadd.f32 0.0, %v902
        %v904 = vpop.f32.mrb[0].mxu0
        %905 = vdwg.mxu0
        %v906 = vadd.f32 %v770, %v883
        %v907 = vadd.f32 %v775, %v888
        %v908 = vadd.f32 %v780, %v893
        %v909 = vadd.f32 %v785, %v898
        %v910 = vadd.f32 %v790, %v903
        %v911 = vld [vmem:[#allocation2 + $0x3] sm:$0xff]
        %v912 = vld [vmem:[#allocation2 + $0xb] sm:$0xff]
        %v913 = vld [vmem:[#allocation2 + $0x13] sm:$0xff]
        %v914 = vld [vmem:[#allocation2 + $0x1b] sm:$0xff]
        %v915 = vld [vmem:[#allocation2 + $0x23] sm:$0xff]
        %s916 = scalar_lea.vmem %s1, 48
        %v917 = vld [vmem:[%s916] sm:$0xff]
        %v918 = vld [vmem:[%s916 + $0x8] sm:$0xff]
        %v920 = vsel %vm562, %v911, 0
        %v923 = vsel %vm562, %v912, 0
        %v926 = vsel %vm562, %v913, 0
        %v929 = vsel %vm562, %v914, 0
        %v932 = vsel %vm562, %v915, 0
        %934 = vmatprep.subr.mxu0 0.0
        %935 = vmatpush1.msra.mxu0 %v917
        %936 = vmatprep.subr.mxu0 0.0
        %937 = vmatpush1.msra.mxu0 %v918
        %938 = vmatprep.subr.mxu0 0.0
        %939 = vmatpush1.msra.mxu0 0.0
        %940 = vmatprep.subr.mxu0 0.0
        %941 = vmatpush1.msra.mxu0 0.0
        %942 = vmatprep.subr.mxu0 0.0
        %943 = vmatpush1.msra.mxu0 0.0
        %944 = vmatprep.subr.mxu0 0.0
        %945 = vmatpush1.msra.mxu0 0.0
        %946 = vmatprep.subr.mxu0 0.0
        %947 = vmatpush1.msra.mxu0 0.0
        %948 = vmatprep.subr.mxu0 0.0
        %949 = vmatpush1.msra.mxu0 0.0
        %950 = vmatprep.subr.mxu0 0.0
        %951 = vmatpush1.msra.mxu0 0.0
        %952 = vmatprep.subr.mxu0 0.0
        %953 = vmatpush1.msra.mxu0 0.0
        %954 = vmatprep.subr.mxu0 0.0
        %955 = vmatpush1.msra.mxu0 0.0
        %956 = vmatprep.subr.mxu0 0.0
        %957 = vmatpush1.msra.mxu0 0.0
        %958 = vmatprep.subr.mxu0 0.0
        %959 = vmatpush1.msra.mxu0 0.0
        %960 = vmatprep.subr.mxu0 0.0
        %961 = vmatpush1.msra.mxu0 0.0
        %962 = vmatprep.subr.mxu0 0.0
        %963 = vmatpush1.msra.mxu0 0.0
        %964 = vmatprep.subr.mxu0 0.0
        %965 = vmatpush1.msra.mxu0 0.0
        %966 = vmatprep.subr.mxu0 0.0
        %967 = vmatpush1.msra.mxu0 0.0
        %968 = vmatprep.subr.mxu0 0.0
        %969 = vmatpush1.msra.mxu0 0.0
        %970 = vmatprep.subr.mxu0 0.0
        %971 = vmatpush1.msra.mxu0 0.0
        %972 = vmatprep.subr.mxu0 0.0
        %973 = vmatpush1.msra.mxu0 0.0
        %974 = vmatprep.subr.mxu0 0.0
        %975 = vmatpush1.msra.mxu0 0.0
        %976 = vmatprep.subr.mxu0 0.0
        %977 = vmatpush1.msra.mxu0 0.0
        %978 = vmatprep.subr.mxu0 0.0
        %979 = vmatpush1.msra.mxu0 0.0
        %980 = vmatprep.subr.mxu0 0.0
        %981 = vmatpush1.msra.mxu0 0.0
        %982 = vmatprep.subr.mxu0 0.0
        %983 = vmatpush1.msra.mxu0 0.0
        %984 = vmatprep.subr.mxu0 0.0
        %985 = vmatpush1.msra.mxu0 0.0
        %986 = vmatprep.subr.mxu0 0.0
        %987 = vmatpush1.msra.mxu0 0.0
        %988 = vmatprep.subr.mxu0 0.0
        %989 = vmatpush1.msra.mxu0 0.0
        %990 = vmatprep.subr.mxu0 0.0
        %991 = vmatpush1.msra.mxu0 0.0
        %992 = vmatprep.subr.mxu0 0.0
        %993 = vmatpush1.msra.mxu0 0.0
        %994 = vmatprep.subr.mxu0 0.0
        %995 = vmatpush1.msra.mxu0 0.0
        %996 = vmatprep.subr.mxu0 0.0
        %997 = vmatpush1.msra.mxu0 0.0
        %998 = vmatprep.mubr.f32.mxu0 0.0
        %999 = vmatmul.mubr.f32.gmra.mrb[0].mxu0 %v920
        %v1000 = vpop.f32.mrb[0].mxu0
        %v1001 = vadd.f32 0.0, %v1000
        %v1002 = vpop.f32.mrb[0].mxu0
        %1003 = vmatprep.mubr.f32.mxu0 0.0
        %1004 = vmatmul.mubr.f32.gmra.mrb[0].mxu0 %v923
        %v1005 = vpop.f32.mrb[0].mxu0
        %v1006 = vadd.f32 0.0, %v1005
        %v1007 = vpop.f32.mrb[0].mxu0
        %1008 = vmatprep.mubr.f32.mxu0 0.0
        %1009 = vmatmul.mubr.f32.gmra.mrb[0].mxu0 %v926
        %v1010 = vpop.f32.mrb[0].mxu0
        %v1011 = vadd.f32 0.0, %v1010
        %v1012 = vpop.f32.mrb[0].mxu0
        %1013 = vmatprep.mubr.f32.mxu0 0.0
        %1014 = vmatmul.mubr.f32.gmra.mrb[0].mxu0 %v929
        %v1015 = vpop.f32.mrb[0].mxu0
        %v1016 = vadd.f32 0.0, %v1015
        %v1017 = vpop.f32.mrb[0].mxu0
        %1018 = vmatprep.mubr.f32.mxu0 0.0
        %1019 = vmatmul.mubr.f32.gmra.mrb[0].mxu0 %v932
        %v1020 = vpop.f32.mrb[0].mxu0
        %v1021 = vadd.f32 0.0, %v1020
        %v1022 = vpop.f32.mrb[0].mxu0
        %1023 = vdwg.mxu0
        %v1024 = vadd.f32 %v906, %v1001
        %v1025 = vadd.f32 %v907, %v1006
        %v1026 = vadd.f32 %v908, %v1011
        %v1027 = vadd.f32 %v909, %v1016
        %v1028 = vadd.f32 %v910, %v1021
        %v1029 = vld [vmem:[#allocation2 + $0x4] sm:$0xff]
        %v1030 = vld [vmem:[#allocation2 + $0xc] sm:$0xff]
        %v1031 = vld [vmem:[#allocation2 + $0x14] sm:$0xff]
        %v1032 = vld [vmem:[#allocation2 + $0x1c] sm:$0xff]
        %v1033 = vld [vmem:[#allocation2 + $0x24] sm:$0xff]
        %s1034 = scalar_lea.vmem %s1, 64
        %v1035 = vld [vmem:[%s1034] sm:$0xff]
        %v1036 = vld [vmem:[%s1034 + $0x8] sm:$0xff]
        %v1038 = vsel %vm562, %v1029, 0
        %v1041 = vsel %vm562, %v1030, 0
        %v1044 = vsel %vm562, %v1031, 0
        %v1047 = vsel %vm562, %v1032, 0
        %v1050 = vsel %vm562, %v1033, 0
        %1052 = vmatprep.subr.mxu0 0.0
        %1053 = vmatpush1.msra.mxu0 %v1035
        %1054 = vmatprep.subr.mxu0 0.0
        %1055 = vmatpush1.msra.mxu0 %v1036
        %1056 = vmatprep.subr.mxu0 0.0
        %1057 = vmatpush1.msra.mxu0 0.0
        %1058 = vmatprep.subr.mxu0 0.0
        %1059 = vmatpush1.msra.mxu0 0.0
        %1060 = vmatprep.subr.mxu0 0.0
        %1061 = vmatpush1.msra.mxu0 0.0
        %1062 = vmatprep.subr.mxu0 0.0
        %1063 = vmatpush1.msra.mxu0 0.0
        %1064 = vmatprep.subr.mxu0 0.0
        %1065 = vmatpush1.msra.mxu0 0.0
        %1066 = vmatprep.subr.mxu0 0.0
        %1067 = vmatpush1.msra.mxu0 0.0
        %1068 = vmatprep.subr.mxu0 0.0
        %1069 = vmatpush1.msra.mxu0 0.0
        %1070 = vmatprep.subr.mxu0 0.0
        %1071 = vmatpush1.msra.mxu0 0.0
        %1072 = vmatprep.subr.mxu0 0.0
        %1073 = vmatpush1.msra.mxu0 0.0
        %1074 = vmatprep.subr.mxu0 0.0
        %1075 = vmatpush1.msra.mxu0 0.0
        %1076 = vmatprep.subr.mxu0 0.0
        %1077 = vmatpush1.msra.mxu0 0.0
        %1078 = vmatprep.subr.mxu0 0.0
        %1079 = vmatpush1.msra.mxu0 0.0
        %1080 = vmatprep.subr.mxu0 0.0
        %1081 = vmatpush1.msra.mxu0 0.0
        %1082 = vmatprep.subr.mxu0 0.0
        %1083 = vmatpush1.msra.mxu0 0.0
        %1084 = vmatprep.subr.mxu0 0.0
        %1085 = vmatpush1.msra.mxu0 0.0
        %1086 = vmatprep.subr.mxu0 0.0
        %1087 = vmatpush1.msra.mxu0 0.0
        %1088 = vmatprep.subr.mxu0 0.0
        %1089 = vmatpush1.msra.mxu0 0.0
        %1090 = vmatprep.subr.mxu0 0.0
        %1091 = vmatpush1.msra.mxu0 0.0
        %1092 = vmatprep.subr.mxu0 0.0
        %1093 = vmatpush1.msra.mxu0 0.0
        %1094 = vmatprep.subr.mxu0 0.0
        %1095 = vmatpush1.msra.mxu0 0.0
        %1096 = vmatprep.subr.mxu0 0.0
        %1097 = vmatpush1.msra.mxu0 0.0
        %1098 = vmatprep.subr.mxu0 0.0
        %1099 = vmatpush1.msra.mxu0 0.0
        %1100 = vmatprep.subr.mxu0 0.0
        %1101 = vmatpush1.msra.mxu0 0.0
        %1102 = vmatprep.subr.mxu0 0.0
        %1103 = vmatpush1.msra.mxu0 0.0
        %1104 = vmatprep.subr.mxu0 0.0
        %1105 = vmatpush1.msra.mxu0 0.0
        %1106 = vmatprep.subr.mxu0 0.0
        %1107 = vmatpush1.msra.mxu0 0.0
        %1108 = vmatprep.subr.mxu0 0.0
        %1109 = vmatpush1.msra.mxu0 0.0
        %1110 = vmatprep.subr.mxu0 0.0
        %1111 = vmatpush1.msra.mxu0 0.0
        %1112 = vmatprep.subr.mxu0 0.0
        %1113 = vmatpush1.msra.mxu0 0.0
        %1114 = vmatprep.subr.mxu0 0.0
        %1115 = vmatpush1.msra.mxu0 0.0
        %1116 = vmatprep.mubr.f32.mxu0 0.0
        %1117 = vmatmul.mubr.f32.gmra.mrb[0].mxu0 %v1038
        %v1118 = vpop.f32.mrb[0].mxu0
        %v1119 = vadd.f32 0.0, %v1118
        %v1120 = vpop.f32.mrb[0].mxu0
        %1121 = vmatprep.mubr.f32.mxu0 0.0
        %1122 = vmatmul.mubr.f32.gmra.mrb[0].mxu0 %v1041
        %v1123 = vpop.f32.mrb[0].mxu0
        %v1124 = vadd.f32 0.0, %v1123
        %v1125 = vpop.f32.mrb[0].mxu0
        %1126 = vmatprep.mubr.f32.mxu0 0.0
        %1127 = vmatmul.mubr.f32.gmra.mrb[0].mxu0 %v1044
        %v1128 = vpop.f32.mrb[0].mxu0
        %v1129 = vadd.f32 0.0, %v1128
        %v1130 = vpop.f32.mrb[0].mxu0
        %1131 = vmatprep.mubr.f32.mxu0 0.0
        %1132 = vmatmul.mubr.f32.gmra.mrb[0].mxu0 %v1047
        %v1133 = vpop.f32.mrb[0].mxu0
        %v1134 = vadd.f32 0.0, %v1133
        %v1135 = vpop.f32.mrb[0].mxu0
        %1136 = vmatprep.mubr.f32.mxu0 0.0
        %1137 = vmatmul.mubr.f32.gmra.mrb[0].mxu0 %v1050
        %v1138 = vpop.f32.mrb[0].mxu0
        %v1139 = vadd.f32 0.0, %v1138
        %v1140 = vpop.f32.mrb[0].mxu0
        %1141 = vdwg.mxu0
        %v1142 = vadd.f32 %v1024, %v1119
        %v1143 = vadd.f32 %v1025, %v1124
        %v1144 = vadd.f32 %v1026, %v1129
        %v1145 = vadd.f32 %v1027, %v1134
        %v1146 = vadd.f32 %v1028, %v1139
        %v1147 = vld [vmem:[%s2] sm:$0x1]
        %v1149 = vlaneseq
        %v1150 = vshrl.u32 %v1149, 7
        %v1151 = vsub.s32 0, %v1150
        %v1152 = vrot.slane %v1147, %v1151
        %v1154 = vmul.f32 %v1142, %v1152
        %v1155 = vmul.f32 %v1143, %v1152
        %v1156 = vmul.f32 %v1144, %v1152
        %v1157 = vmul.f32 %v1145, %v1152
        %v1158 = vmul.f32 %v1146, %v1152
        %v1159 = vld [vmem:[%s3] sm:$0x1]
        %v1161 = vlaneseq
        %v1162 = vshrl.u32 %v1161, 7
        %v1163 = vsub.s32 0, %v1162
        %v1164 = vrot.slane %v1159, %v1163
        %v1166 = vadd.f32 %v1154, %v1164
        %v1167 = vadd.f32 %v1155, %v1164
        %v1168 = vadd.f32 %v1156, %v1164
        %v1169 = vadd.f32 %v1157, %v1164
        %v1170 = vadd.f32 %v1158, %v1164
        %v1171 = vtanh.pop %v1166
        %v1172 = vtanh.pop %v1167
        %v1173 = vtanh.pop %v1168
        %v1174 = vtanh.pop %v1169
        %v1175 = vtanh.pop %v1170
        %vm1176 = vcmask 523264
        %1177 = vst.msk [vmem:[#allocation3 + $0x2] sm:$0xff] %vm1176, %v1171
        %1178 = vst.msk [vmem:[#allocation3 + $0xa] sm:$0xff] %vm1176, %v1172
        %1179 = vst.msk [vmem:[#allocation3 + $0x12] sm:$0xff] %vm1176, %v1173
        %1180 = vst.msk [vmem:[#allocation3 + $0x1a] sm:$0xff] %vm1176, %v1174
        %1181 = vst.msk [vmem:[#allocation3 + $0x22] sm:$0xff] %vm1176, %v1175
        %v1182 = vld [vmem:[#allocation3] sm:$0xff]
        %v1183 = vld [vmem:[#allocation3 + $0x8] sm:$0xff]
        %v1184 = vld [vmem:[#allocation3 + $0x10] sm:$0xff]
        %v1185 = vld [vmem:[#allocation3 + $0x18] sm:$0xff]
        %v1186 = vld [vmem:[#allocation3 + $0x20] sm:$0xff]
        %v1187 = vld [vmem:[%s4] sm:$0xff]
        %v1188 = vld [vmem:[%s4 + $0x8] sm:$0xff]
        %v1189 = vld [vmem:[%s4 + $0x10] sm:$0xff]
        %v1190 = vld [vmem:[%s4 + $0x18] sm:$0xff]
        %v1191 = vld [vmem:[%s4 + $0x20] sm:$0xff]
        %v1192 = vld [vmem:[%s4 + $0x28] sm:$0xff]
        %v1193 = vld [vmem:[%s4 + $0x30] sm:$0xff]
        %v1194 = vld [vmem:[%s4 + $0x38] sm:$0xff]
        %v1195 = vld [vmem:[#allocation3 + $0x1] sm:$0xff]
        %v1196 = vld [vmem:[#allocation3 + $0x9] sm:$0xff]
        %v1197 = vld [vmem:[#allocation3 + $0x11] sm:$0xff]
        %v1198 = vld [vmem:[#allocation3 + $0x19] sm:$0xff]
        %v1199 = vld [vmem:[#allocation3 + $0x21] sm:$0xff]
        %s1200 = scalar_lea.vmem %s4, 64
        %v1201 = vld [vmem:[%s1200] sm:$0xff]
        %v1202 = vld [vmem:[%s1200 + $0x8] sm:$0xff]
        %v1203 = vld [vmem:[%s1200 + $0x10] sm:$0xff]
        %v1204 = vld [vmem:[%s1200 + $0x18] sm:$0xff]
        %v1205 = vld [vmem:[%s1200 + $0x20] sm:$0xff]
        %v1206 = vld [vmem:[%s1200 + $0x28] sm:$0xff]
        %v1207 = vld [vmem:[%s1200 + $0x30] sm:$0xff]
        %v1208 = vld [vmem:[%s1200 + $0x38] sm:$0xff]
        %v1210 = vsel %vm1176, %v1195, 0
        %v1213 = vsel %vm1176, %v1196, 0
        %v1216 = vsel %vm1176, %v1197, 0
        %v1219 = vsel %vm1176, %v1198, 0
        %v1222 = vsel %vm1176, %v1199, 0
        %1224 = vmatprep.subr.mxu0 0.0
        %1225 = vmatpush1.msra.mxu0 %v1201
        %1226 = vmatprep.subr.mxu0 0.0
        %1227 = vmatpush1.msra.mxu0 %v1202
        %1228 = vmatprep.subr.mxu0 0.0
        %1229 = vmatpush1.msra.mxu0 %v1203
        %1230 = vmatprep.subr.mxu0 0.0
        %1231 = vmatpush1.msra.mxu0 %v1204
        %1232 = vmatprep.subr.mxu0 0.0
        %1233 = vmatpush1.msra.mxu0 %v1205
        %1234 = vmatprep.subr.mxu0 0.0
        %1235 = vmatpush1.msra.mxu0 %v1206
        %1236 = vmatprep.subr.mxu0 0.0
        %1237 = vmatpush1.msra.mxu0 %v1207
        %1238 = vmatprep.subr.mxu0 0.0
        %1239 = vmatpush1.msra.mxu0 %v1208
        %1240 = vmatprep.subr.mxu0 0.0
        %1241 = vmatpush1.msra.mxu0 0.0
        %1242 = vmatprep.subr.mxu0 0.0
        %1243 = vmatpush1.msra.mxu0 0.0
        %1244 = vmatprep.subr.mxu0 0.0
        %1245 = vmatpush1.msra.mxu0 0.0
        %1246 = vmatprep.subr.mxu0 0.0
        %1247 = vmatpush1.msra.mxu0 0.0
        %1248 = vmatprep.subr.mxu0 0.0
        %1249 = vmatpush1.msra.mxu0 0.0
        %1250 = vmatprep.subr.mxu0 0.0
        %1251 = vmatpush1.msra.mxu0 0.0
        %1252 = vmatprep.subr.mxu0 0.0
        %1253 = vmatpush1.msra.mxu0 0.0
        %1254 = vmatprep.subr.mxu0 0.0
        %1255 = vmatpush1.msra.mxu0 0.0
        %1256 = vmatprep.subr.mxu0 0.0
        %1257 = vmatpush1.msra.mxu0 0.0
        %1258 = vmatprep.subr.mxu0 0.0
        %1259 = vmatpush1.msra.mxu0 0.0
        %1260 = vmatprep.subr.mxu0 0.0
        %1261 = vmatpush1.msra.mxu0 0.0
        %1262 = vmatprep.subr.mxu0 0.0
        %1263 = vmatpush1.msra.mxu0 0.0
        %1264 = vmatprep.subr.mxu0 0.0
        %1265 = vmatpush1.msra.mxu0 0.0
        %1266 = vmatprep.subr.mxu0 0.0
        %1267 = vmatpush1.msra.mxu0 0.0
        %1268 = vmatprep.subr.mxu0 0.0
        %1269 = vmatpush1.msra.mxu0 0.0
        %1270 = vmatprep.subr.mxu0 0.0
        %1271 = vmatpush1.msra.mxu0 0.0
        %1272 = vmatprep.subr.mxu0 0.0
        %1273 = vmatpush1.msra.mxu0 0.0
        %1274 = vmatprep.subr.mxu0 0.0
        %1275 = vmatpush1.msra.mxu0 0.0
        %1276 = vmatprep.subr.mxu0 0.0
        %1277 = vmatpush1.msra.mxu0 0.0
        %1278 = vmatprep.subr.mxu0 0.0
        %1279 = vmatpush1.msra.mxu0 0.0
        %1280 = vmatprep.subr.mxu0 0.0
        %1281 = vmatpush1.msra.mxu0 0.0
        %1282 = vmatprep.subr.mxu0 0.0
        %1283 = vmatpush1.msra.mxu0 0.0
        %1284 = vmatprep.subr.mxu0 0.0
        %1285 = vmatpush1.msra.mxu0 0.0
        %1286 = vmatprep.subr.mxu0 0.0
        %1287 = vmatpush1.msra.mxu0 0.0
        %1288 = vmatprep.mubr.f32.mxu0 0.0
        %1289 = vmatmul.mubr.f32.gmra.mrb[0].mxu0 %v1210
        %v1290 = vpop.f32.mrb[0].mxu0
        %v1291 = vadd.f32 0.0, %v1290
        %v1292 = vpop.f32.mrb[0].mxu0
        %1293 = vmatprep.mubr.f32.mxu0 0.0
        %1294 = vmatmul.mubr.f32.gmra.mrb[0].mxu0 %v1213
        %v1295 = vpop.f32.mrb[0].mxu0
        %v1296 = vadd.f32 0.0, %v1295
        %v1297 = vpop.f32.mrb[0].mxu0
        %1298 = vmatprep.mubr.f32.mxu0 0.0
        %1299 = vmatmul.mubr.f32.gmra.mrb[0].mxu0 %v1216
        %v1300 = vpop.f32.mrb[0].mxu0
        %v1301 = vadd.f32 0.0, %v1300
        %v1302 = vpop.f32.mrb[0].mxu0
        %1303 = vmatprep.mubr.f32.mxu0 0.0
        %1304 = vmatmul.mubr.f32.gmra.mrb[0].mxu0 %v1219
        %v1305 = vpop.f32.mrb[0].mxu0
        %v1306 = vadd.f32 0.0, %v1305
        %v1307 = vpop.f32.mrb[0].mxu0
        %1308 = vmatprep.mubr.f32.mxu0 0.0
        %1309 = vmatmul.mubr.f32.gmra.mrb[0].mxu0 %v1222
        %v1310 = vpop.f32.mrb[0].mxu0
        %v1311 = vadd.f32 0.0, %v1310
        %v1312 = vpop.f32.mrb[0].mxu0
        %1313 = vdwg.mxu0
        %v1315 = vsel %vm1176, %v1182, 0
        %v1318 = vsel %vm1176, %v1183, 0
        %v1321 = vsel %vm1176, %v1184, 0
        %v1324 = vsel %vm1176, %v1185, 0
        %v1327 = vsel %vm1176, %v1186, 0
        %1329 = vmatprep.subr.mxu0 0.0
        %1330 = vmatpush1.msra.mxu0 %v1187
        %1331 = vmatprep.subr.mxu0 0.0
        %1332 = vmatpush1.msra.mxu0 %v1188
        %1333 = vmatprep.subr.mxu0 0.0
        %1334 = vmatpush1.msra.mxu0 %v1189
        %1335 = vmatprep.subr.mxu0 0.0
        %1336 = vmatpush1.msra.mxu0 %v1190
        %1337 = vmatprep.subr.mxu0 0.0
        %1338 = vmatpush1.msra.mxu0 %v1191
        %1339 = vmatprep.subr.mxu0 0.0
        %1340 = vmatpush1.msra.mxu0 %v1192
        %1341 = vmatprep.subr.mxu0 0.0
        %1342 = vmatpush1.msra.mxu0 %v1193
        %1343 = vmatprep.subr.mxu0 0.0
        %1344 = vmatpush1.msra.mxu0 %v1194
        %1345 = vmatprep.subr.mxu0 0.0
        %1346 = vmatpush1.msra.mxu0 0.0
        %1347 = vmatprep.subr.mxu0 0.0
        %1348 = vmatpush1.msra.mxu0 0.0
        %1349 = vmatprep.subr.mxu0 0.0
        %1350 = vmatpush1.msra.mxu0 0.0
        %1351 = vmatprep.subr.mxu0 0.0
        %1352 = vmatpush1.msra.mxu0 0.0
        %1353 = vmatprep.subr.mxu0 0.0
        %1354 = vmatpush1.msra.mxu0 0.0
        %1355 = vmatprep.subr.mxu0 0.0
        %1356 = vmatpush1.msra.mxu0 0.0
        %1357 = vmatprep.subr.mxu0 0.0
        %1358 = vmatpush1.msra.mxu0 0.0
        %1359 = vmatprep.subr.mxu0 0.0
        %1360 = vmatpush1.msra.mxu0 0.0
        %1361 = vmatprep.subr.mxu0 0.0
        %1362 = vmatpush1.msra.mxu0 0.0
        %1363 = vmatprep.subr.mxu0 0.0
        %1364 = vmatpush1.msra.mxu0 0.0
        %1365 = vmatprep.subr.mxu0 0.0
        %1366 = vmatpush1.msra.mxu0 0.0
        %1367 = vmatprep.subr.mxu0 0.0
        %1368 = vmatpush1.msra.mxu0 0.0
        %1369 = vmatprep.subr.mxu0 0.0
        %1370 = vmatpush1.msra.mxu0 0.0
        %1371 = vmatprep.subr.mxu0 0.0
        %1372 = vmatpush1.msra.mxu0 0.0
        %1373 = vmatprep.subr.mxu0 0.0
        %1374 = vmatpush1.msra.mxu0 0.0
        %1375 = vmatprep.subr.mxu0 0.0
        %1376 = vmatpush1.msra.mxu0 0.0
        %1377 = vmatprep.subr.mxu0 0.0
        %1378 = vmatpush1.msra.mxu0 0.0
        %1379 = vmatprep.subr.mxu0 0.0
        %1380 = vmatpush1.msra.mxu0 0.0
        %1381 = vmatprep.subr.mxu0 0.0
        %1382 = vmatpush1.msra.mxu0 0.0
        %1383 = vmatprep.subr.mxu0 0.0
        %1384 = vmatpush1.msra.mxu0 0.0
        %1385 = vmatprep.subr.mxu0 0.0
        %1386 = vmatpush1.msra.mxu0 0.0
        %1387 = vmatprep.subr.mxu0 0.0
        %1388 = vmatpush1.msra.mxu0 0.0
        %1389 = vmatprep.subr.mxu0 0.0
        %1390 = vmatpush1.msra.mxu0 0.0
        %1391 = vmatprep.subr.mxu0 0.0
        %1392 = vmatpush1.msra.mxu0 0.0
        %1393 = vmatprep.mubr.f32.mxu0 0.0
        %1394 = vmatmul.mubr.f32.gmra.mrb[0].mxu0 %v1315
        %v1395 = vpop.f32.mrb[0].mxu0
        %v1396 = vadd.f32 %v1291, %v1395
        %v1397 = vpop.f32.mrb[0].mxu0
        %1398 = vmatprep.mubr.f32.mxu0 0.0
        %1399 = vmatmul.mubr.f32.gmra.mrb[0].mxu0 %v1318
        %v1400 = vpop.f32.mrb[0].mxu0
        %v1401 = vadd.f32 %v1296, %v1400
        %v1402 = vpop.f32.mrb[0].mxu0
        %1403 = vmatprep.mubr.f32.mxu0 0.0
        %1404 = vmatmul.mubr.f32.gmra.mrb[0].mxu0 %v1321
        %v1405 = vpop.f32.mrb[0].mxu0
        %v1406 = vadd.f32 %v1301, %v1405
        %v1407 = vpop.f32.mrb[0].mxu0
        %1408 = vmatprep.mubr.f32.mxu0 0.0
        %1409 = vmatmul.mubr.f32.gmra.mrb[0].mxu0 %v1324
        %v1410 = vpop.f32.mrb[0].mxu0
        %v1411 = vadd.f32 %v1306, %v1410
        %v1412 = vpop.f32.mrb[0].mxu0
        %1413 = vmatprep.mubr.f32.mxu0 0.0
        %1414 = vmatmul.mubr.f32.gmra.mrb[0].mxu0 %v1327
        %v1415 = vpop.f32.mrb[0].mxu0
        %v1416 = vadd.f32 %v1311, %v1415
        %v1417 = vpop.f32.mrb[0].mxu0
        %1418 = vdwg.mxu0
        %v1419 = vld [vmem:[#allocation3 + $0x2] sm:$0xff]
        %v1420 = vld [vmem:[#allocation3 + $0xa] sm:$0xff]
        %v1421 = vld [vmem:[#allocation3 + $0x12] sm:$0xff]
        %v1422 = vld [vmem:[#allocation3 + $0x1a] sm:$0xff]
        %v1423 = vld [vmem:[#allocation3 + $0x22] sm:$0xff]
        %s1424 = scalar_lea.vmem %s4, 128
        %v1425 = vld [vmem:[%s1424] sm:$0xff]
        %v1426 = vld [vmem:[%s1424 + $0x8] sm:$0xff]
        %v1427 = vld [vmem:[%s1424 + $0x10] sm:$0xff]
        %v1428 = vld [vmem:[%s1424 + $0x18] sm:$0xff]
        %v1429 = vld [vmem:[%s1424 + $0x20] sm:$0xff]
        %v1430 = vld [vmem:[%s1424 + $0x28] sm:$0xff]
        %v1431 = vld [vmem:[%s1424 + $0x30] sm:$0xff]
        %v1432 = vld [vmem:[%s1424 + $0x38] sm:$0xff]
        %v1434 = vsel %vm1176, %v1419, 0
        %v1437 = vsel %vm1176, %v1420, 0
        %v1440 = vsel %vm1176, %v1421, 0
        %v1443 = vsel %vm1176, %v1422, 0
        %v1446 = vsel %vm1176, %v1423, 0
        %1448 = vmatprep.subr.mxu0 0.0
        %1449 = vmatpush1.msra.mxu0 %v1425
        %1450 = vmatprep.subr.mxu0 0.0
        %1451 = vmatpush1.msra.mxu0 %v1426
        %1452 = vmatprep.subr.mxu0 0.0
        %1453 = vmatpush1.msra.mxu0 %v1427
        %1454 = vmatprep.subr.mxu0 0.0
        %1455 = vmatpush1.msra.mxu0 %v1428
        %1456 = vmatprep.subr.mxu0 0.0
        %1457 = vmatpush1.msra.mxu0 %v1429
        %1458 = vmatprep.subr.mxu0 0.0
        %1459 = vmatpush1.msra.mxu0 %v1430
        %1460 = vmatprep.subr.mxu0 0.0
        %1461 = vmatpush1.msra.mxu0 %v1431
        %1462 = vmatprep.subr.mxu0 0.0
        %1463 = vmatpush1.msra.mxu0 %v1432
        %1464 = vmatprep.subr.mxu0 0.0
        %1465 = vmatpush1.msra.mxu0 0.0
        %1466 = vmatprep.subr.mxu0 0.0
        %1467 = vmatpush1.msra.mxu0 0.0
        %1468 = vmatprep.subr.mxu0 0.0
        %1469 = vmatpush1.msra.mxu0 0.0
        %1470 = vmatprep.subr.mxu0 0.0
        %1471 = vmatpush1.msra.mxu0 0.0
        %1472 = vmatprep.subr.mxu0 0.0
        %1473 = vmatpush1.msra.mxu0 0.0
        %1474 = vmatprep.subr.mxu0 0.0
        %1475 = vmatpush1.msra.mxu0 0.0
        %1476 = vmatprep.subr.mxu0 0.0
        %1477 = vmatpush1.msra.mxu0 0.0
        %1478 = vmatprep.subr.mxu0 0.0
        %1479 = vmatpush1.msra.mxu0 0.0
        %1480 = vmatprep.subr.mxu0 0.0
        %1481 = vmatpush1.msra.mxu0 0.0
        %1482 = vmatprep.subr.mxu0 0.0
        %1483 = vmatpush1.msra.mxu0 0.0
        %1484 = vmatprep.subr.mxu0 0.0
        %1485 = vmatpush1.msra.mxu0 0.0
        %1486 = vmatprep.subr.mxu0 0.0
        %1487 = vmatpush1.msra.mxu0 0.0
        %1488 = vmatprep.subr.mxu0 0.0
        %1489 = vmatpush1.msra.mxu0 0.0
        %1490 = vmatprep.subr.mxu0 0.0
        %1491 = vmatpush1.msra.mxu0 0.0
        %1492 = vmatprep.subr.mxu0 0.0
        %1493 = vmatpush1.msra.mxu0 0.0
        %1494 = vmatprep.subr.mxu0 0.0
        %1495 = vmatpush1.msra.mxu0 0.0
        %1496 = vmatprep.subr.mxu0 0.0
        %1497 = vmatpush1.msra.mxu0 0.0
        %1498 = vmatprep.subr.mxu0 0.0
        %1499 = vmatpush1.msra.mxu0 0.0
        %1500 = vmatprep.subr.mxu0 0.0
        %1501 = vmatpush1.msra.mxu0 0.0
        %1502 = vmatprep.subr.mxu0 0.0
        %1503 = vmatpush1.msra.mxu0 0.0
        %1504 = vmatprep.subr.mxu0 0.0
        %1505 = vmatpush1.msra.mxu0 0.0
        %1506 = vmatprep.subr.mxu0 0.0
        %1507 = vmatpush1.msra.mxu0 0.0
        %1508 = vmatprep.subr.mxu0 0.0
        %1509 = vmatpush1.msra.mxu0 0.0
        %1510 = vmatprep.subr.mxu0 0.0
        %1511 = vmatpush1.msra.mxu0 0.0
        %1512 = vmatprep.mubr.f32.mxu0 0.0
        %1513 = vmatmul.mubr.f32.gmra.mrb[0].mxu0 %v1434
        %v1514 = vpop.f32.mrb[0].mxu0
        %v1515 = vadd.f32 0.0, %v1514
        %v1516 = vpop.f32.mrb[0].mxu0
        %1517 = vmatprep.mubr.f32.mxu0 0.0
        %1518 = vmatmul.mubr.f32.gmra.mrb[0].mxu0 %v1437
        %v1519 = vpop.f32.mrb[0].mxu0
        %v1520 = vadd.f32 0.0, %v1519
        %v1521 = vpop.f32.mrb[0].mxu0
        %1522 = vmatprep.mubr.f32.mxu0 0.0
        %1523 = vmatmul.mubr.f32.gmra.mrb[0].mxu0 %v1440
        %v1524 = vpop.f32.mrb[0].mxu0
        %v1525 = vadd.f32 0.0, %v1524
        %v1526 = vpop.f32.mrb[0].mxu0
        %1527 = vmatprep.mubr.f32.mxu0 0.0
        %1528 = vmatmul.mubr.f32.gmra.mrb[0].mxu0 %v1443
        %v1529 = vpop.f32.mrb[0].mxu0
        %v1530 = vadd.f32 0.0, %v1529
        %v1531 = vpop.f32.mrb[0].mxu0
        %1532 = vmatprep.mubr.f32.mxu0 0.0
        %1533 = vmatmul.mubr.f32.gmra.mrb[0].mxu0 %v1446
        %v1534 = vpop.f32.mrb[0].mxu0
        %v1535 = vadd.f32 0.0, %v1534
        %v1536 = vpop.f32.mrb[0].mxu0
        %1537 = vdwg.mxu0
        %v1538 = vadd.f32 %v1396, %v1515
        %v1539 = vadd.f32 %v1401, %v1520
        %v1540 = vadd.f32 %v1406, %v1525
        %v1541 = vadd.f32 %v1411, %v1530
        %v1542 = vadd.f32 %v1416, %v1535
        %v1543 = vld [vmem:[#allocation3 + $0x3] sm:$0xff]
        %v1544 = vld [vmem:[#allocation3 + $0xb] sm:$0xff]
        %v1545 = vld [vmem:[#allocation3 + $0x13] sm:$0xff]
        %v1546 = vld [vmem:[#allocation3 + $0x1b] sm:$0xff]
        %v1547 = vld [vmem:[#allocation3 + $0x23] sm:$0xff]
        %s1548 = scalar_lea.vmem %s4, 192
        %v1549 = vld [vmem:[%s1548] sm:$0xff]
        %v1550 = vld [vmem:[%s1548 + $0x8] sm:$0xff]
        %v1551 = vld [vmem:[%s1548 + $0x10] sm:$0xff]
        %v1552 = vld [vmem:[%s1548 + $0x18] sm:$0xff]
        %v1553 = vld [vmem:[%s1548 + $0x20] sm:$0xff]
        %v1554 = vld [vmem:[%s1548 + $0x28] sm:$0xff]
        %v1555 = vld [vmem:[%s1548 + $0x30] sm:$0xff]
        %v1556 = vld [vmem:[%s1548 + $0x38] sm:$0xff]
        %v1558 = vsel %vm1176, %v1543, 0
        %v1561 = vsel %vm1176, %v1544, 0
        %v1564 = vsel %vm1176, %v1545, 0
        %v1567 = vsel %vm1176, %v1546, 0
        %v1570 = vsel %vm1176, %v1547, 0
        %1572 = vmatprep.subr.mxu0 0.0
        %1573 = vmatpush1.msra.mxu0 %v1549
        %1574 = vmatprep.subr.mxu0 0.0
        %1575 = vmatpush1.msra.mxu0 %v1550
        %1576 = vmatprep.subr.mxu0 0.0
        %1577 = vmatpush1.msra.mxu0 %v1551
        %1578 = vmatprep.subr.mxu0 0.0
        %1579 = vmatpush1.msra.mxu0 %v1552
        %1580 = vmatprep.subr.mxu0 0.0
        %1581 = vmatpush1.msra.mxu0 %v1553
        %1582 = vmatprep.subr.mxu0 0.0
        %1583 = vmatpush1.msra.mxu0 %v1554
        %1584 = vmatprep.subr.mxu0 0.0
        %1585 = vmatpush1.msra.mxu0 %v1555
        %1586 = vmatprep.subr.mxu0 0.0
        %1587 = vmatpush1.msra.mxu0 %v1556
        %1588 = vmatprep.subr.mxu0 0.0
        %1589 = vmatpush1.msra.mxu0 0.0
        %1590 = vmatprep.subr.mxu0 0.0
        %1591 = vmatpush1.msra.mxu0 0.0
        %1592 = vmatprep.subr.mxu0 0.0
        %1593 = vmatpush1.msra.mxu0 0.0
        %1594 = vmatprep.subr.mxu0 0.0
        %1595 = vmatpush1.msra.mxu0 0.0
        %1596 = vmatprep.subr.mxu0 0.0
        %1597 = vmatpush1.msra.mxu0 0.0
        %1598 = vmatprep.subr.mxu0 0.0
        %1599 = vmatpush1.msra.mxu0 0.0
        %1600 = vmatprep.subr.mxu0 0.0
        %1601 = vmatpush1.msra.mxu0 0.0
        %1602 = vmatprep.subr.mxu0 0.0
        %1603 = vmatpush1.msra.mxu0 0.0
        %1604 = vmatprep.subr.mxu0 0.0
        %1605 = vmatpush1.msra.mxu0 0.0
        %1606 = vmatprep.subr.mxu0 0.0
        %1607 = vmatpush1.msra.mxu0 0.0
        %1608 = vmatprep.subr.mxu0 0.0
        %1609 = vmatpush1.msra.mxu0 0.0
        %1610 = vmatprep.subr.mxu0 0.0
        %1611 = vmatpush1.msra.mxu0 0.0
        %1612 = vmatprep.subr.mxu0 0.0
        %1613 = vmatpush1.msra.mxu0 0.0
        %1614 = vmatprep.subr.mxu0 0.0
        %1615 = vmatpush1.msra.mxu0 0.0
        %1616 = vmatprep.subr.mxu0 0.0
        %1617 = vmatpush1.msra.mxu0 0.0
        %1618 = vmatprep.subr.mxu0 0.0
        %1619 = vmatpush1.msra.mxu0 0.0
        %1620 = vmatprep.subr.mxu0 0.0
        %1621 = vmatpush1.msra.mxu0 0.0
        %1622 = vmatprep.subr.mxu0 0.0
        %1623 = vmatpush1.msra.mxu0 0.0
        %1624 = vmatprep.subr.mxu0 0.0
        %1625 = vmatpush1.msra.mxu0 0.0
        %1626 = vmatprep.subr.mxu0 0.0
        %1627 = vmatpush1.msra.mxu0 0.0
        %1628 = vmatprep.subr.mxu0 0.0
        %1629 = vmatpush1.msra.mxu0 0.0
        %1630 = vmatprep.subr.mxu0 0.0
        %1631 = vmatpush1.msra.mxu0 0.0
        %1632 = vmatprep.subr.mxu0 0.0
        %1633 = vmatpush1.msra.mxu0 0.0
        %1634 = vmatprep.subr.mxu0 0.0
        %1635 = vmatpush1.msra.mxu0 0.0
        %1636 = vmatprep.mubr.f32.mxu0 0.0
        %1637 = vmatmul.mubr.f32.gmra.mrb[0].mxu0 %v1558
        %v1638 = vpop.f32.mrb[0].mxu0
        %v1639 = vadd.f32 0.0, %v1638
        %v1640 = vpop.f32.mrb[0].mxu0
        %1641 = vmatprep.mubr.f32.mxu0 0.0
        %1642 = vmatmul.mubr.f32.gmra.mrb[0].mxu0 %v1561
        %v1643 = vpop.f32.mrb[0].mxu0
        %v1644 = vadd.f32 0.0, %v1643
        %v1645 = vpop.f32.mrb[0].mxu0
        %1646 = vmatprep.mubr.f32.mxu0 0.0
        %1647 = vmatmul.mubr.f32.gmra.mrb[0].mxu0 %v1564
        %v1648 = vpop.f32.mrb[0].mxu0
        %v1649 = vadd.f32 0.0, %v1648
        %v1650 = vpop.f32.mrb[0].mxu0
        %1651 = vmatprep.mubr.f32.mxu0 0.0
        %1652 = vmatmul.mubr.f32.gmra.mrb[0].mxu0 %v1567
        %v1653 = vpop.f32.mrb[0].mxu0
        %v1654 = vadd.f32 0.0, %v1653
        %v1655 = vpop.f32.mrb[0].mxu0
        %1656 = vmatprep.mubr.f32.mxu0 0.0
        %1657 = vmatmul.mubr.f32.gmra.mrb[0].mxu0 %v1570
        %v1658 = vpop.f32.mrb[0].mxu0
        %v1659 = vadd.f32 0.0, %v1658
        %v1660 = vpop.f32.mrb[0].mxu0
        %1661 = vdwg.mxu0
        %v1662 = vadd.f32 %v1538, %v1639
        %v1663 = vadd.f32 %v1539, %v1644
        %v1664 = vadd.f32 %v1540, %v1649
        %v1665 = vadd.f32 %v1541, %v1654
        %v1666 = vadd.f32 %v1542, %v1659
        %v1667 = vld [vmem:[#allocation3 + $0x4] sm:$0xff]
        %v1668 = vld [vmem:[#allocation3 + $0xc] sm:$0xff]
        %v1669 = vld [vmem:[#allocation3 + $0x14] sm:$0xff]
        %v1670 = vld [vmem:[#allocation3 + $0x1c] sm:$0xff]
        %v1671 = vld [vmem:[#allocation3 + $0x24] sm:$0xff]
        %s1672 = scalar_lea.vmem %s4, 256
        %v1673 = vld [vmem:[%s1672] sm:$0xff]
        %v1674 = vld [vmem:[%s1672 + $0x8] sm:$0xff]
        %v1675 = vld [vmem:[%s1672 + $0x10] sm:$0xff]
        %v1676 = vld [vmem:[%s1672 + $0x18] sm:$0xff]
        %v1677 = vld [vmem:[%s1672 + $0x20] sm:$0xff]
        %v1678 = vld [vmem:[%s1672 + $0x28] sm:$0xff]
        %v1679 = vld [vmem:[%s1672 + $0x30] sm:$0xff]
        %v1680 = vld [vmem:[%s1672 + $0x38] sm:$0xff]
        %v1682 = vsel %vm1176, %v1667, 0
        %v1685 = vsel %vm1176, %v1668, 0
        %v1688 = vsel %vm1176, %v1669, 0
        %v1691 = vsel %vm1176, %v1670, 0
        %v1694 = vsel %vm1176, %v1671, 0
        %1696 = vmatprep.subr.mxu0 0.0
        %1697 = vmatpush1.msra.mxu0 %v1673
        %1698 = vmatprep.subr.mxu0 0.0
        %1699 = vmatpush1.msra.mxu0 %v1674
        %1700 = vmatprep.subr.mxu0 0.0
        %1701 = vmatpush1.msra.mxu0 %v1675
        %1702 = vmatprep.subr.mxu0 0.0
        %1703 = vmatpush1.msra.mxu0 %v1676
        %1704 = vmatprep.subr.mxu0 0.0
        %1705 = vmatpush1.msra.mxu0 %v1677
        %1706 = vmatprep.subr.mxu0 0.0
        %1707 = vmatpush1.msra.mxu0 %v1678
        %1708 = vmatprep.subr.mxu0 0.0
        %1709 = vmatpush1.msra.mxu0 %v1679
        %1710 = vmatprep.subr.mxu0 0.0
        %1711 = vmatpush1.msra.mxu0 %v1680
        %1712 = vmatprep.subr.mxu0 0.0
        %1713 = vmatpush1.msra.mxu0 0.0
        %1714 = vmatprep.subr.mxu0 0.0
        %1715 = vmatpush1.msra.mxu0 0.0
        %1716 = vmatprep.subr.mxu0 0.0
        %1717 = vmatpush1.msra.mxu0 0.0
        %1718 = vmatprep.subr.mxu0 0.0
        %1719 = vmatpush1.msra.mxu0 0.0
        %1720 = vmatprep.subr.mxu0 0.0
        %1721 = vmatpush1.msra.mxu0 0.0
        %1722 = vmatprep.subr.mxu0 0.0
        %1723 = vmatpush1.msra.mxu0 0.0
        %1724 = vmatprep.subr.mxu0 0.0
        %1725 = vmatpush1.msra.mxu0 0.0
        %1726 = vmatprep.subr.mxu0 0.0
        %1727 = vmatpush1.msra.mxu0 0.0
        %1728 = vmatprep.subr.mxu0 0.0
        %1729 = vmatpush1.msra.mxu0 0.0
        %1730 = vmatprep.subr.mxu0 0.0
        %1731 = vmatpush1.msra.mxu0 0.0
        %1732 = vmatprep.subr.mxu0 0.0
        %1733 = vmatpush1.msra.mxu0 0.0
        %1734 = vmatprep.subr.mxu0 0.0
        %1735 = vmatpush1.msra.mxu0 0.0
        %1736 = vmatprep.subr.mxu0 0.0
        %1737 = vmatpush1.msra.mxu0 0.0
        %1738 = vmatprep.subr.mxu0 0.0
        %1739 = vmatpush1.msra.mxu0 0.0
        %1740 = vmatprep.subr.mxu0 0.0
        %1741 = vmatpush1.msra.mxu0 0.0
        %1742 = vmatprep.subr.mxu0 0.0
        %1743 = vmatpush1.msra.mxu0 0.0
        %1744 = vmatprep.subr.mxu0 0.0
        %1745 = vmatpush1.msra.mxu0 0.0
        %1746 = vmatprep.subr.mxu0 0.0
        %1747 = vmatpush1.msra.mxu0 0.0
        %1748 = vmatprep.subr.mxu0 0.0
        %1749 = vmatpush1.msra.mxu0 0.0
        %1750 = vmatprep.subr.mxu0 0.0
        %1751 = vmatpush1.msra.mxu0 0.0
        %1752 = vmatprep.subr.mxu0 0.0
        %1753 = vmatpush1.msra.mxu0 0.0
        %1754 = vmatprep.subr.mxu0 0.0
        %1755 = vmatpush1.msra.mxu0 0.0
        %1756 = vmatprep.subr.mxu0 0.0
        %1757 = vmatpush1.msra.mxu0 0.0
        %1758 = vmatprep.subr.mxu0 0.0
        %1759 = vmatpush1.msra.mxu0 0.0
        %1760 = vmatprep.mubr.f32.mxu0 0.0
        %1761 = vmatmul.mubr.f32.gmra.mrb[0].mxu0 %v1682
        %v1762 = vpop.f32.mrb[0].mxu0
        %v1763 = vadd.f32 0.0, %v1762
        %v1764 = vpop.f32.mrb[0].mxu0
        %1765 = vmatprep.mubr.f32.mxu0 0.0
        %1766 = vmatmul.mubr.f32.gmra.mrb[0].mxu0 %v1685
        %v1767 = vpop.f32.mrb[0].mxu0
        %v1768 = vadd.f32 0.0, %v1767
        %v1769 = vpop.f32.mrb[0].mxu0
        %1770 = vmatprep.mubr.f32.mxu0 0.0
        %1771 = vmatmul.mubr.f32.gmra.mrb[0].mxu0 %v1688
        %v1772 = vpop.f32.mrb[0].mxu0
        %v1773 = vadd.f32 0.0, %v1772
        %v1774 = vpop.f32.mrb[0].mxu0
        %1775 = vmatprep.mubr.f32.mxu0 0.0
        %1776 = vmatmul.mubr.f32.gmra.mrb[0].mxu0 %v1691
        %v1777 = vpop.f32.mrb[0].mxu0
        %v1778 = vadd.f32 0.0, %v1777
        %v1779 = vpop.f32.mrb[0].mxu0
        %1780 = vmatprep.mubr.f32.mxu0 0.0
        %1781 = vmatmul.mubr.f32.gmra.mrb[0].mxu0 %v1694
        %v1782 = vpop.f32.mrb[0].mxu0
        %v1783 = vadd.f32 0.0, %v1782
        %v1784 = vpop.f32.mrb[0].mxu0
        %1785 = vdwg.mxu0
        %v1786 = vadd.f32 %v1662, %v1763
        %v1787 = vadd.f32 %v1663, %v1768
        %v1788 = vadd.f32 %v1664, %v1773
        %v1789 = vadd.f32 %v1665, %v1778
        %v1790 = vadd.f32 %v1666, %v1783
        %v1791 = vld [vmem:[%s5] sm:$0x1]
        %v1793 = vlaneseq
        %v1794 = vshrl.u32 %v1793, 7
        %v1795 = vsub.s32 0, %v1794
        %v1796 = vrot.slane %v1791, %v1795
        %v1798 = vmul.f32 %v1786, %v1796
        %v1799 = vmul.f32 %v1787, %v1796
        %v1800 = vmul.f32 %v1788, %v1796
        %v1801 = vmul.f32 %v1789, %v1796
        %v1802 = vmul.f32 %v1790, %v1796
        %v1803 = vld [vmem:[%s6] sm:$0x1]
        %v1805 = vlaneseq
        %v1806 = vshrl.u32 %v1805, 7
        %v1807 = vsub.s32 0, %v1806
        %v1808 = vrot.slane %v1803, %v1807
        %v1810 = vadd.f32 %v1798, %v1808
        %v1811 = vadd.f32 %v1799, %v1808
        %v1812 = vadd.f32 %v1800, %v1808
        %v1813 = vadd.f32 %v1801, %v1808
        %v1814 = vadd.f32 %v1802, %v1808
        %v1815 = vtanh.pop %v1810
        %v1816 = vtanh.pop %v1811
        %v1817 = vtanh.pop %v1812
        %v1818 = vtanh.pop %v1813
        %v1819 = vtanh.pop %v1814
        %1820 = vst.msk [vmem:[#allocation2 + $0x2] sm:$0xff] %vm1176, %v1815
        %1821 = vst.msk [vmem:[#allocation2 + $0xa] sm:$0xff] %vm1176, %v1816
        %1822 = vst.msk [vmem:[#allocation2 + $0x12] sm:$0xff] %vm1176, %v1817
        %1823 = vst.msk [vmem:[#allocation2 + $0x1a] sm:$0xff] %vm1176, %v1818
        %1824 = vst.msk [vmem:[#allocation2 + $0x22] sm:$0xff] %vm1176, %v1819
        %v1825 = vld [vmem:[#allocation2] sm:$0xff]
        %v1826 = vld [vmem:[#allocation2 + $0x8] sm:$0xff]
        %v1827 = vld [vmem:[#allocation2 + $0x10] sm:$0xff]
        %v1828 = vld [vmem:[#allocation2 + $0x18] sm:$0xff]
        %v1829 = vld [vmem:[#allocation2 + $0x20] sm:$0xff]
        %v1830 = vld [vmem:[#allocation4] sm:$0xff]
        %v1831 = vld [vmem:[#allocation4 + $0x8] sm:$0xff]
        %v1832 = vld [vmem:[#allocation4 + $0x10] sm:$0xff]
        %v1833 = vld [vmem:[#allocation4 + $0x18] sm:$0xff]
        %v1834 = vld [vmem:[#allocation4 + $0x20] sm:$0xff]
        %v1835 = vld [vmem:[#allocation4 + $0x28] sm:$0xff]
        %v1836 = vld [vmem:[#allocation4 + $0x30] sm:$0xff]
        %v1837 = vld [vmem:[#allocation4 + $0x38] sm:$0xff]
        %v1838 = vld [vmem:[#allocation2 + $0x1] sm:$0xff]
        %v1839 = vld [vmem:[#allocation2 + $0x9] sm:$0xff]
        %v1840 = vld [vmem:[#allocation2 + $0x11] sm:$0xff]
        %v1841 = vld [vmem:[#allocation2 + $0x19] sm:$0xff]
        %v1842 = vld [vmem:[#allocation2 + $0x21] sm:$0xff]
        %s1843 = scalar_lea.vmem [#allocation4], 64
        %v1844 = vld [vmem:[%s1843] sm:$0xff]
        %v1845 = vld [vmem:[%s1843 + $0x8] sm:$0xff]
        %v1846 = vld [vmem:[%s1843 + $0x10] sm:$0xff]
        %v1847 = vld [vmem:[%s1843 + $0x18] sm:$0xff]
        %v1848 = vld [vmem:[%s1843 + $0x20] sm:$0xff]
        %v1849 = vld [vmem:[%s1843 + $0x28] sm:$0xff]
        %v1850 = vld [vmem:[%s1843 + $0x30] sm:$0xff]
        %v1851 = vld [vmem:[%s1843 + $0x38] sm:$0xff]
        %v1853 = vsel %vm1176, %v1838, 0
        %v1856 = vsel %vm1176, %v1839, 0
        %v1859 = vsel %vm1176, %v1840, 0
        %v1862 = vsel %vm1176, %v1841, 0
        %v1865 = vsel %vm1176, %v1842, 0
        %1867 = vmatprep.subr.mxu0 0.0
        %1868 = vmatpush1.msra.mxu0 %v1844
        %1869 = vmatprep.subr.mxu0 0.0
        %1870 = vmatpush1.msra.mxu0 %v1845
        %1871 = vmatprep.subr.mxu0 0.0
        %1872 = vmatpush1.msra.mxu0 %v1846
        %1873 = vmatprep.subr.mxu0 0.0
        %1874 = vmatpush1.msra.mxu0 %v1847
        %1875 = vmatprep.subr.mxu0 0.0
        %1876 = vmatpush1.msra.mxu0 %v1848
        %1877 = vmatprep.subr.mxu0 0.0
        %1878 = vmatpush1.msra.mxu0 %v1849
        %1879 = vmatprep.subr.mxu0 0.0
        %1880 = vmatpush1.msra.mxu0 %v1850
        %1881 = vmatprep.subr.mxu0 0.0
        %1882 = vmatpush1.msra.mxu0 %v1851
        %1883 = vmatprep.subr.mxu0 0.0
        %1884 = vmatpush1.msra.mxu0 0.0
        %1885 = vmatprep.subr.mxu0 0.0
        %1886 = vmatpush1.msra.mxu0 0.0
        %1887 = vmatprep.subr.mxu0 0.0
        %1888 = vmatpush1.msra.mxu0 0.0
        %1889 = vmatprep.subr.mxu0 0.0
        %1890 = vmatpush1.msra.mxu0 0.0
        %1891 = vmatprep.subr.mxu0 0.0
        %1892 = vmatpush1.msra.mxu0 0.0
        %1893 = vmatprep.subr.mxu0 0.0
        %1894 = vmatpush1.msra.mxu0 0.0
        %1895 = vmatprep.subr.mxu0 0.0
        %1896 = vmatpush1.msra.mxu0 0.0
        %1897 = vmatprep.subr.mxu0 0.0
        %1898 = vmatpush1.msra.mxu0 0.0
        %1899 = vmatprep.subr.mxu0 0.0
        %1900 = vmatpush1.msra.mxu0 0.0
        %1901 = vmatprep.subr.mxu0 0.0
        %1902 = vmatpush1.msra.mxu0 0.0
        %1903 = vmatprep.subr.mxu0 0.0
        %1904 = vmatpush1.msra.mxu0 0.0
        %1905 = vmatprep.subr.mxu0 0.0
        %1906 = vmatpush1.msra.mxu0 0.0
        %1907 = vmatprep.subr.mxu0 0.0
        %1908 = vmatpush1.msra.mxu0 0.0
        %1909 = vmatprep.subr.mxu0 0.0
        %1910 = vmatpush1.msra.mxu0 0.0
        %1911 = vmatprep.subr.mxu0 0.0
        %1912 = vmatpush1.msra.mxu0 0.0
        %1913 = vmatprep.subr.mxu0 0.0
        %1914 = vmatpush1.msra.mxu0 0.0
        %1915 = vmatprep.subr.mxu0 0.0
        %1916 = vmatpush1.msra.mxu0 0.0
        %1917 = vmatprep.subr.mxu0 0.0
        %1918 = vmatpush1.msra.mxu0 0.0
        %1919 = vmatprep.subr.mxu0 0.0
        %1920 = vmatpush1.msra.mxu0 0.0
        %1921 = vmatprep.subr.mxu0 0.0
        %1922 = vmatpush1.msra.mxu0 0.0
        %1923 = vmatprep.subr.mxu0 0.0
        %1924 = vmatpush1.msra.mxu0 0.0
        %1925 = vmatprep.subr.mxu0 0.0
        %1926 = vmatpush1.msra.mxu0 0.0
        %1927 = vmatprep.subr.mxu0 0.0
        %1928 = vmatpush1.msra.mxu0 0.0
        %1929 = vmatprep.subr.mxu0 0.0
        %1930 = vmatpush1.msra.mxu0 0.0
        %1931 = vmatprep.mubr.f32.mxu0 0.0
        %1932 = vmatmul.mubr.f32.gmra.mrb[0].mxu0 %v1853
        %v1933 = vpop.f32.mrb[0].mxu0
        %v1934 = vadd.f32 0.0, %v1933
        %v1935 = vpop.f32.mrb[0].mxu0
        %1936 = vmatprep.mubr.f32.mxu0 0.0
        %1937 = vmatmul.mubr.f32.gmra.mrb[0].mxu0 %v1856
        %v1938 = vpop.f32.mrb[0].mxu0
        %v1939 = vadd.f32 0.0, %v1938
        %v1940 = vpop.f32.mrb[0].mxu0
        %1941 = vmatprep.mubr.f32.mxu0 0.0
        %1942 = vmatmul.mubr.f32.gmra.mrb[0].mxu0 %v1859
        %v1943 = vpop.f32.mrb[0].mxu0
        %v1944 = vadd.f32 0.0, %v1943
        %v1945 = vpop.f32.mrb[0].mxu0
        %1946 = vmatprep.mubr.f32.mxu0 0.0
        %1947 = vmatmul.mubr.f32.gmra.mrb[0].mxu0 %v1862
        %v1948 = vpop.f32.mrb[0].mxu0
        %v1949 = vadd.f32 0.0, %v1948
        %v1950 = vpop.f32.mrb[0].mxu0
        %1951 = vmatprep.mubr.f32.mxu0 0.0
        %1952 = vmatmul.mubr.f32.gmra.mrb[0].mxu0 %v1865
        %v1953 = vpop.f32.mrb[0].mxu0
        %v1954 = vadd.f32 0.0, %v1953
        %v1955 = vpop.f32.mrb[0].mxu0
        %1956 = vdwg.mxu0
        %v1958 = vsel %vm1176, %v1825, 0
        %v1961 = vsel %vm1176, %v1826, 0
        %v1964 = vsel %vm1176, %v1827, 0
        %v1967 = vsel %vm1176, %v1828, 0
        %v1970 = vsel %vm1176, %v1829, 0
        %1972 = vmatprep.subr.mxu0 0.0
        %1973 = vmatpush1.msra.mxu0 %v1830
        %1974 = vmatprep.subr.mxu0 0.0
        %1975 = vmatpush1.msra.mxu0 %v1831
        %1976 = vmatprep.subr.mxu0 0.0
        %1977 = vmatpush1.msra.mxu0 %v1832
        %1978 = vmatprep.subr.mxu0 0.0
        %1979 = vmatpush1.msra.mxu0 %v1833
        %1980 = vmatprep.subr.mxu0 0.0
        %1981 = vmatpush1.msra.mxu0 %v1834
        %1982 = vmatprep.subr.mxu0 0.0
        %1983 = vmatpush1.msra.mxu0 %v1835
        %1984 = vmatprep.subr.mxu0 0.0
        %1985 = vmatpush1.msra.mxu0 %v1836
        %1986 = vmatprep.subr.mxu0 0.0
        %1987 = vmatpush1.msra.mxu0 %v1837
        %1988 = vmatprep.subr.mxu0 0.0
        %1989 = vmatpush1.msra.mxu0 0.0
        %1990 = vmatprep.subr.mxu0 0.0
        %1991 = vmatpush1.msra.mxu0 0.0
        %1992 = vmatprep.subr.mxu0 0.0
        %1993 = vmatpush1.msra.mxu0 0.0
        %1994 = vmatprep.subr.mxu0 0.0
        %1995 = vmatpush1.msra.mxu0 0.0
        %1996 = vmatprep.subr.mxu0 0.0
        %1997 = vmatpush1.msra.mxu0 0.0
        %1998 = vmatprep.subr.mxu0 0.0
        %1999 = vmatpush1.msra.mxu0 0.0
        %2000 = vmatprep.subr.mxu0 0.0
        %2001 = vmatpush1.msra.mxu0 0.0
        %2002 = vmatprep.subr.mxu0 0.0
        %2003 = vmatpush1.msra.mxu0 0.0
        %2004 = vmatprep.subr.mxu0 0.0
        %2005 = vmatpush1.msra.mxu0 0.0
        %2006 = vmatprep.subr.mxu0 0.0
        %2007 = vmatpush1.msra.mxu0 0.0
        %2008 = vmatprep.subr.mxu0 0.0
        %2009 = vmatpush1.msra.mxu0 0.0
        %2010 = vmatprep.subr.mxu0 0.0
        %2011 = vmatpush1.msra.mxu0 0.0
        %2012 = vmatprep.subr.mxu0 0.0
        %2013 = vmatpush1.msra.mxu0 0.0
        %2014 = vmatprep.subr.mxu0 0.0
        %2015 = vmatpush1.msra.mxu0 0.0
        %2016 = vmatprep.subr.mxu0 0.0
        %2017 = vmatpush1.msra.mxu0 0.0
        %2018 = vmatprep.subr.mxu0 0.0
        %2019 = vmatpush1.msra.mxu0 0.0
        %2020 = vmatprep.subr.mxu0 0.0
        %2021 = vmatpush1.msra.mxu0 0.0
        %2022 = vmatprep.subr.mxu0 0.0
        %2023 = vmatpush1.msra.mxu0 0.0
        %2024 = vmatprep.subr.mxu0 0.0
        %2025 = vmatpush1.msra.mxu0 0.0
        %2026 = vmatprep.subr.mxu0 0.0
        %2027 = vmatpush1.msra.mxu0 0.0
        %2028 = vmatprep.subr.mxu0 0.0
        %2029 = vmatpush1.msra.mxu0 0.0
        %2030 = vmatprep.subr.mxu0 0.0
        %2031 = vmatpush1.msra.mxu0 0.0
        %2032 = vmatprep.subr.mxu0 0.0
        %2033 = vmatpush1.msra.mxu0 0.0
        %2034 = vmatprep.subr.mxu0 0.0
        %2035 = vmatpush1.msra.mxu0 0.0
        %2036 = vmatprep.mubr.f32.mxu0 0.0
        %2037 = vmatmul.mubr.f32.gmra.mrb[0].mxu0 %v1958
        %v2038 = vpop.f32.mrb[0].mxu0
        %v2039 = vadd.f32 %v1934, %v2038
        %v2040 = vpop.f32.mrb[0].mxu0
        %2041 = vmatprep.mubr.f32.mxu0 0.0
        %2042 = vmatmul.mubr.f32.gmra.mrb[0].mxu0 %v1961
        %v2043 = vpop.f32.mrb[0].mxu0
        %v2044 = vadd.f32 %v1939, %v2043
        %v2045 = vpop.f32.mrb[0].mxu0
        %2046 = vmatprep.mubr.f32.mxu0 0.0
        %2047 = vmatmul.mubr.f32.gmra.mrb[0].mxu0 %v1964
        %v2048 = vpop.f32.mrb[0].mxu0
        %v2049 = vadd.f32 %v1944, %v2048
        %v2050 = vpop.f32.mrb[0].mxu0
        %2051 = vmatprep.mubr.f32.mxu0 0.0
        %2052 = vmatmul.mubr.f32.gmra.mrb[0].mxu0 %v1967
        %v2053 = vpop.f32.mrb[0].mxu0
        %v2054 = vadd.f32 %v1949, %v2053
        %v2055 = vpop.f32.mrb[0].mxu0
        %2056 = vmatprep.mubr.f32.mxu0 0.0
        %2057 = vmatmul.mubr.f32.gmra.mrb[0].mxu0 %v1970
        %v2058 = vpop.f32.mrb[0].mxu0
        %v2059 = vadd.f32 %v1954, %v2058
        %v2060 = vpop.f32.mrb[0].mxu0
        %2061 = vdwg.mxu0
        %v2062 = vld [vmem:[#allocation2 + $0x2] sm:$0xff]
        %v2063 = vld [vmem:[#allocation2 + $0xa] sm:$0xff]
        %v2064 = vld [vmem:[#allocation2 + $0x12] sm:$0xff]
        %v2065 = vld [vmem:[#allocation2 + $0x1a] sm:$0xff]
        %v2066 = vld [vmem:[#allocation2 + $0x22] sm:$0xff]
        %s2067 = scalar_lea.vmem [#allocation4], 128
        %v2068 = vld [vmem:[%s2067] sm:$0xff]
        %v2069 = vld [vmem:[%s2067 + $0x8] sm:$0xff]
        %v2070 = vld [vmem:[%s2067 + $0x10] sm:$0xff]
        %v2071 = vld [vmem:[%s2067 + $0x18] sm:$0xff]
        %v2072 = vld [vmem:[%s2067 + $0x20] sm:$0xff]
        %v2073 = vld [vmem:[%s2067 + $0x28] sm:$0xff]
        %v2074 = vld [vmem:[%s2067 + $0x30] sm:$0xff]
        %v2075 = vld [vmem:[%s2067 + $0x38] sm:$0xff]
        %v2077 = vsel %vm1176, %v2062, 0
        %v2080 = vsel %vm1176, %v2063, 0
        %v2083 = vsel %vm1176, %v2064, 0
        %v2086 = vsel %vm1176, %v2065, 0
        %v2089 = vsel %vm1176, %v2066, 0
        %2091 = vmatprep.subr.mxu0 0.0
        %2092 = vmatpush1.msra.mxu0 %v2068
        %2093 = vmatprep.subr.mxu0 0.0
        %2094 = vmatpush1.msra.mxu0 %v2069
        %2095 = vmatprep.subr.mxu0 0.0
        %2096 = vmatpush1.msra.mxu0 %v2070
        %2097 = vmatprep.subr.mxu0 0.0
        %2098 = vmatpush1.msra.mxu0 %v2071
        %2099 = vmatprep.subr.mxu0 0.0
        %2100 = vmatpush1.msra.mxu0 %v2072
        %2101 = vmatprep.subr.mxu0 0.0
        %2102 = vmatpush1.msra.mxu0 %v2073
        %2103 = vmatprep.subr.mxu0 0.0
        %2104 = vmatpush1.msra.mxu0 %v2074
        %2105 = vmatprep.subr.mxu0 0.0
        %2106 = vmatpush1.msra.mxu0 %v2075
        %2107 = vmatprep.subr.mxu0 0.0
        %2108 = vmatpush1.msra.mxu0 0.0
        %2109 = vmatprep.subr.mxu0 0.0
        %2110 = vmatpush1.msra.mxu0 0.0
        %2111 = vmatprep.subr.mxu0 0.0
        %2112 = vmatpush1.msra.mxu0 0.0
        %2113 = vmatprep.subr.mxu0 0.0
        %2114 = vmatpush1.msra.mxu0 0.0
        %2115 = vmatprep.subr.mxu0 0.0
        %2116 = vmatpush1.msra.mxu0 0.0
        %2117 = vmatprep.subr.mxu0 0.0
        %2118 = vmatpush1.msra.mxu0 0.0
        %2119 = vmatprep.subr.mxu0 0.0
        %2120 = vmatpush1.msra.mxu0 0.0
        %2121 = vmatprep.subr.mxu0 0.0
        %2122 = vmatpush1.msra.mxu0 0.0
        %2123 = vmatprep.subr.mxu0 0.0
        %2124 = vmatpush1.msra.mxu0 0.0
        %2125 = vmatprep.subr.mxu0 0.0
        %2126 = vmatpush1.msra.mxu0 0.0
        %2127 = vmatprep.subr.mxu0 0.0
        %2128 = vmatpush1.msra.mxu0 0.0
        %2129 = vmatprep.subr.mxu0 0.0
        %2130 = vmatpush1.msra.mxu0 0.0
        %2131 = vmatprep.subr.mxu0 0.0
        %2132 = vmatpush1.msra.mxu0 0.0
        %2133 = vmatprep.subr.mxu0 0.0
        %2134 = vmatpush1.msra.mxu0 0.0
        %2135 = vmatprep.subr.mxu0 0.0
        %2136 = vmatpush1.msra.mxu0 0.0
        %2137 = vmatprep.subr.mxu0 0.0
        %2138 = vmatpush1.msra.mxu0 0.0
        %2139 = vmatprep.subr.mxu0 0.0
        %2140 = vmatpush1.msra.mxu0 0.0
        %2141 = vmatprep.subr.mxu0 0.0
        %2142 = vmatpush1.msra.mxu0 0.0
        %2143 = vmatprep.subr.mxu0 0.0
        %2144 = vmatpush1.msra.mxu0 0.0
        %2145 = vmatprep.subr.mxu0 0.0
        %2146 = vmatpush1.msra.mxu0 0.0
        %2147 = vmatprep.subr.mxu0 0.0
        %2148 = vmatpush1.msra.mxu0 0.0
        %2149 = vmatprep.subr.mxu0 0.0
        %2150 = vmatpush1.msra.mxu0 0.0
        %2151 = vmatprep.subr.mxu0 0.0
        %2152 = vmatpush1.msra.mxu0 0.0
        %2153 = vmatprep.subr.mxu0 0.0
        %2154 = vmatpush1.msra.mxu0 0.0
        %2155 = vmatprep.mubr.f32.mxu0 0.0
        %2156 = vmatmul.mubr.f32.gmra.mrb[0].mxu0 %v2077
        %v2157 = vpop.f32.mrb[0].mxu0
        %v2158 = vadd.f32 0.0, %v2157
        %v2159 = vpop.f32.mrb[0].mxu0
        %2160 = vmatprep.mubr.f32.mxu0 0.0
        %2161 = vmatmul.mubr.f32.gmra.mrb[0].mxu0 %v2080
        %v2162 = vpop.f32.mrb[0].mxu0
        %v2163 = vadd.f32 0.0, %v2162
        %v2164 = vpop.f32.mrb[0].mxu0
        %2165 = vmatprep.mubr.f32.mxu0 0.0
        %2166 = vmatmul.mubr.f32.gmra.mrb[0].mxu0 %v2083
        %v2167 = vpop.f32.mrb[0].mxu0
        %v2168 = vadd.f32 0.0, %v2167
        %v2169 = vpop.f32.mrb[0].mxu0
        %2170 = vmatprep.mubr.f32.mxu0 0.0
        %2171 = vmatmul.mubr.f32.gmra.mrb[0].mxu0 %v2086
        %v2172 = vpop.f32.mrb[0].mxu0
        %v2173 = vadd.f32 0.0, %v2172
        %v2174 = vpop.f32.mrb[0].mxu0
        %2175 = vmatprep.mubr.f32.mxu0 0.0
        %2176 = vmatmul.mubr.f32.gmra.mrb[0].mxu0 %v2089
        %v2177 = vpop.f32.mrb[0].mxu0
        %v2178 = vadd.f32 0.0, %v2177
        %v2179 = vpop.f32.mrb[0].mxu0
        %2180 = vdwg.mxu0
        %v2181 = vadd.f32 %v2039, %v2158
        %v2182 = vadd.f32 %v2044, %v2163
        %v2183 = vadd.f32 %v2049, %v2168
        %v2184 = vadd.f32 %v2054, %v2173
        %v2185 = vadd.f32 %v2059, %v2178
        %v2186 = vld [vmem:[#allocation2 + $0x3] sm:$0xff]
        %v2187 = vld [vmem:[#allocation2 + $0xb] sm:$0xff]
        %v2188 = vld [vmem:[#allocation2 + $0x13] sm:$0xff]
        %v2189 = vld [vmem:[#allocation2 + $0x1b] sm:$0xff]
        %v2190 = vld [vmem:[#allocation2 + $0x23] sm:$0xff]
        %s2191 = scalar_lea.vmem [#allocation4], 192
        %v2192 = vld [vmem:[%s2191] sm:$0xff]
        %v2193 = vld [vmem:[%s2191 + $0x8] sm:$0xff]
        %v2194 = vld [vmem:[%s2191 + $0x10] sm:$0xff]
        %v2195 = vld [vmem:[%s2191 + $0x18] sm:$0xff]
        %v2196 = vld [vmem:[%s2191 + $0x20] sm:$0xff]
        %v2197 = vld [vmem:[%s2191 + $0x28] sm:$0xff]
        %v2198 = vld [vmem:[%s2191 + $0x30] sm:$0xff]
        %v2199 = vld [vmem:[%s2191 + $0x38] sm:$0xff]
        %v2201 = vsel %vm1176, %v2186, 0
        %v2204 = vsel %vm1176, %v2187, 0
        %v2207 = vsel %vm1176, %v2188, 0
        %v2210 = vsel %vm1176, %v2189, 0
        %v2213 = vsel %vm1176, %v2190, 0
        %2215 = vmatprep.subr.mxu0 0.0
        %2216 = vmatpush1.msra.mxu0 %v2192
        %2217 = vmatprep.subr.mxu0 0.0
        %2218 = vmatpush1.msra.mxu0 %v2193
        %2219 = vmatprep.subr.mxu0 0.0
        %2220 = vmatpush1.msra.mxu0 %v2194
        %2221 = vmatprep.subr.mxu0 0.0
        %2222 = vmatpush1.msra.mxu0 %v2195
        %2223 = vmatprep.subr.mxu0 0.0
        %2224 = vmatpush1.msra.mxu0 %v2196
        %2225 = vmatprep.subr.mxu0 0.0
        %2226 = vmatpush1.msra.mxu0 %v2197
        %2227 = vmatprep.subr.mxu0 0.0
        %2228 = vmatpush1.msra.mxu0 %v2198
        %2229 = vmatprep.subr.mxu0 0.0
        %2230 = vmatpush1.msra.mxu0 %v2199
        %2231 = vmatprep.subr.mxu0 0.0
        %2232 = vmatpush1.msra.mxu0 0.0
        %2233 = vmatprep.subr.mxu0 0.0
        %2234 = vmatpush1.msra.mxu0 0.0
        %2235 = vmatprep.subr.mxu0 0.0
        %2236 = vmatpush1.msra.mxu0 0.0
        %2237 = vmatprep.subr.mxu0 0.0
        %2238 = vmatpush1.msra.mxu0 0.0
        %2239 = vmatprep.subr.mxu0 0.0
        %2240 = vmatpush1.msra.mxu0 0.0
        %2241 = vmatprep.subr.mxu0 0.0
        %2242 = vmatpush1.msra.mxu0 0.0
        %2243 = vmatprep.subr.mxu0 0.0
        %2244 = vmatpush1.msra.mxu0 0.0
        %2245 = vmatprep.subr.mxu0 0.0
        %2246 = vmatpush1.msra.mxu0 0.0
        %2247 = vmatprep.subr.mxu0 0.0
        %2248 = vmatpush1.msra.mxu0 0.0
        %2249 = vmatprep.subr.mxu0 0.0
        %2250 = vmatpush1.msra.mxu0 0.0
        %2251 = vmatprep.subr.mxu0 0.0
        %2252 = vmatpush1.msra.mxu0 0.0
        %2253 = vmatprep.subr.mxu0 0.0
        %2254 = vmatpush1.msra.mxu0 0.0
        %2255 = vmatprep.subr.mxu0 0.0
        %2256 = vmatpush1.msra.mxu0 0.0
        %2257 = vmatprep.subr.mxu0 0.0
        %2258 = vmatpush1.msra.mxu0 0.0
        %2259 = vmatprep.subr.mxu0 0.0
        %2260 = vmatpush1.msra.mxu0 0.0
        %2261 = vmatprep.subr.mxu0 0.0
        %2262 = vmatpush1.msra.mxu0 0.0
        %2263 = vmatprep.subr.mxu0 0.0
        %2264 = vmatpush1.msra.mxu0 0.0
        %2265 = vmatprep.subr.mxu0 0.0
        %2266 = vmatpush1.msra.mxu0 0.0
        %2267 = vmatprep.subr.mxu0 0.0
        %2268 = vmatpush1.msra.mxu0 0.0
        %2269 = vmatprep.subr.mxu0 0.0
        %2270 = vmatpush1.msra.mxu0 0.0
        %2271 = vmatprep.subr.mxu0 0.0
        %2272 = vmatpush1.msra.mxu0 0.0
        %2273 = vmatprep.subr.mxu0 0.0
        %2274 = vmatpush1.msra.mxu0 0.0
        %2275 = vmatprep.subr.mxu0 0.0
        %2276 = vmatpush1.msra.mxu0 0.0
        %2277 = vmatprep.subr.mxu0 0.0
        %2278 = vmatpush1.msra.mxu0 0.0
        %2279 = vmatprep.mubr.f32.mxu0 0.0
        %2280 = vmatmul.mubr.f32.gmra.mrb[0].mxu0 %v2201
        %v2281 = vpop.f32.mrb[0].mxu0
        %v2282 = vadd.f32 0.0, %v2281
        %v2283 = vpop.f32.mrb[0].mxu0
        %2284 = vmatprep.mubr.f32.mxu0 0.0
        %2285 = vmatmul.mubr.f32.gmra.mrb[0].mxu0 %v2204
        %v2286 = vpop.f32.mrb[0].mxu0
        %v2287 = vadd.f32 0.0, %v2286
        %v2288 = vpop.f32.mrb[0].mxu0
        %2289 = vmatprep.mubr.f32.mxu0 0.0
        %2290 = vmatmul.mubr.f32.gmra.mrb[0].mxu0 %v2207
        %v2291 = vpop.f32.mrb[0].mxu0
        %v2292 = vadd.f32 0.0, %v2291
        %v2293 = vpop.f32.mrb[0].mxu0
        %2294 = vmatprep.mubr.f32.mxu0 0.0
        %2295 = vmatmul.mubr.f32.gmra.mrb[0].mxu0 %v2210
        %v2296 = vpop.f32.mrb[0].mxu0
        %v2297 = vadd.f32 0.0, %v2296
        %v2298 = vpop.f32.mrb[0].mxu0
        %2299 = vmatprep.mubr.f32.mxu0 0.0
        %2300 = vmatmul.mubr.f32.gmra.mrb[0].mxu0 %v2213
        %v2301 = vpop.f32.mrb[0].mxu0
        %v2302 = vadd.f32 0.0, %v2301
        %v2303 = vpop.f32.mrb[0].mxu0
        %2304 = vdwg.mxu0
        %v2305 = vadd.f32 %v2181, %v2282
        %v2306 = vadd.f32 %v2182, %v2287
        %v2307 = vadd.f32 %v2183, %v2292
        %v2308 = vadd.f32 %v2184, %v2297
        %v2309 = vadd.f32 %v2185, %v2302
        %v2310 = vld [vmem:[#allocation2 + $0x4] sm:$0xff]
        %v2311 = vld [vmem:[#allocation2 + $0xc] sm:$0xff]
        %v2312 = vld [vmem:[#allocation2 + $0x14] sm:$0xff]
        %v2313 = vld [vmem:[#allocation2 + $0x1c] sm:$0xff]
        %v2314 = vld [vmem:[#allocation2 + $0x24] sm:$0xff]
        %s2315 = scalar_lea.vmem [#allocation4], 256
        %v2316 = vld [vmem:[%s2315] sm:$0xff]
        %v2317 = vld [vmem:[%s2315 + $0x8] sm:$0xff]
        %v2318 = vld [vmem:[%s2315 + $0x10] sm:$0xff]
        %v2319 = vld [vmem:[%s2315 + $0x18] sm:$0xff]
        %v2320 = vld [vmem:[%s2315 + $0x20] sm:$0xff]
        %v2321 = vld [vmem:[%s2315 + $0x28] sm:$0xff]
        %v2322 = vld [vmem:[%s2315 + $0x30] sm:$0xff]
        %v2323 = vld [vmem:[%s2315 + $0x38] sm:$0xff]
        %v2325 = vsel %vm1176, %v2310, 0
        %v2328 = vsel %vm1176, %v2311, 0
        %v2331 = vsel %vm1176, %v2312, 0
        %v2334 = vsel %vm1176, %v2313, 0
        %v2337 = vsel %vm1176, %v2314, 0
        %2339 = vmatprep.subr.mxu0 0.0
        %2340 = vmatpush1.msra.mxu0 %v2316
        %2341 = vmatprep.subr.mxu0 0.0
        %2342 = vmatpush1.msra.mxu0 %v2317
        %2343 = vmatprep.subr.mxu0 0.0
        %2344 = vmatpush1.msra.mxu0 %v2318
        %2345 = vmatprep.subr.mxu0 0.0
        %2346 = vmatpush1.msra.mxu0 %v2319
        %2347 = vmatprep.subr.mxu0 0.0
        %2348 = vmatpush1.msra.mxu0 %v2320
        %2349 = vmatprep.subr.mxu0 0.0
        %2350 = vmatpush1.msra.mxu0 %v2321
        %2351 = vmatprep.subr.mxu0 0.0
        %2352 = vmatpush1.msra.mxu0 %v2322
        %2353 = vmatprep.subr.mxu0 0.0
        %2354 = vmatpush1.msra.mxu0 %v2323
        %2355 = vmatprep.subr.mxu0 0.0
        %2356 = vmatpush1.msra.mxu0 0.0
        %2357 = vmatprep.subr.mxu0 0.0
        %2358 = vmatpush1.msra.mxu0 0.0
        %2359 = vmatprep.subr.mxu0 0.0
        %2360 = vmatpush1.msra.mxu0 0.0
        %2361 = vmatprep.subr.mxu0 0.0
        %2362 = vmatpush1.msra.mxu0 0.0
        %2363 = vmatprep.subr.mxu0 0.0
        %2364 = vmatpush1.msra.mxu0 0.0
        %2365 = vmatprep.subr.mxu0 0.0
        %2366 = vmatpush1.msra.mxu0 0.0
        %2367 = vmatprep.subr.mxu0 0.0
        %2368 = vmatpush1.msra.mxu0 0.0
        %2369 = vmatprep.subr.mxu0 0.0
        %2370 = vmatpush1.msra.mxu0 0.0
        %2371 = vmatprep.subr.mxu0 0.0
        %2372 = vmatpush1.msra.mxu0 0.0
        %2373 = vmatprep.subr.mxu0 0.0
        %2374 = vmatpush1.msra.mxu0 0.0
        %2375 = vmatprep.subr.mxu0 0.0
        %2376 = vmatpush1.msra.mxu0 0.0
        %2377 = vmatprep.subr.mxu0 0.0
        %2378 = vmatpush1.msra.mxu0 0.0
        %2379 = vmatprep.subr.mxu0 0.0
        %2380 = vmatpush1.msra.mxu0 0.0
        %2381 = vmatprep.subr.mxu0 0.0
        %2382 = vmatpush1.msra.mxu0 0.0
        %2383 = vmatprep.subr.mxu0 0.0
        %2384 = vmatpush1.msra.mxu0 0.0
        %2385 = vmatprep.subr.mxu0 0.0
        %2386 = vmatpush1.msra.mxu0 0.0
        %2387 = vmatprep.subr.mxu0 0.0
        %2388 = vmatpush1.msra.mxu0 0.0
        %2389 = vmatprep.subr.mxu0 0.0
        %2390 = vmatpush1.msra.mxu0 0.0
        %2391 = vmatprep.subr.mxu0 0.0
        %2392 = vmatpush1.msra.mxu0 0.0
        %2393 = vmatprep.subr.mxu0 0.0
        %2394 = vmatpush1.msra.mxu0 0.0
        %2395 = vmatprep.subr.mxu0 0.0
        %2396 = vmatpush1.msra.mxu0 0.0
        %2397 = vmatprep.subr.mxu0 0.0
        %2398 = vmatpush1.msra.mxu0 0.0
        %2399 = vmatprep.subr.mxu0 0.0
        %2400 = vmatpush1.msra.mxu0 0.0
        %2401 = vmatprep.subr.mxu0 0.0
        %2402 = vmatpush1.msra.mxu0 0.0
        %2403 = vmatprep.mubr.f32.mxu0 0.0
        %2404 = vmatmul.mubr.f32.gmra.mrb[0].mxu0 %v2325
        %v2405 = vpop.f32.mrb[0].mxu0
        %v2406 = vadd.f32 0.0, %v2405
        %v2407 = vpop.f32.mrb[0].mxu0
        %2408 = vmatprep.mubr.f32.mxu0 0.0
        %2409 = vmatmul.mubr.f32.gmra.mrb[0].mxu0 %v2328
        %v2410 = vpop.f32.mrb[0].mxu0
        %v2411 = vadd.f32 0.0, %v2410
        %v2412 = vpop.f32.mrb[0].mxu0
        %2413 = vmatprep.mubr.f32.mxu0 0.0
        %2414 = vmatmul.mubr.f32.gmra.mrb[0].mxu0 %v2331
        %v2415 = vpop.f32.mrb[0].mxu0
        %v2416 = vadd.f32 0.0, %v2415
        %v2417 = vpop.f32.mrb[0].mxu0
        %2418 = vmatprep.mubr.f32.mxu0 0.0
        %2419 = vmatmul.mubr.f32.gmra.mrb[0].mxu0 %v2334
        %v2420 = vpop.f32.mrb[0].mxu0
        %v2421 = vadd.f32 0.0, %v2420
        %v2422 = vpop.f32.mrb[0].mxu0
        %2423 = vmatprep.mubr.f32.mxu0 0.0
        %2424 = vmatmul.mubr.f32.gmra.mrb[0].mxu0 %v2337
        %v2425 = vpop.f32.mrb[0].mxu0
        %v2426 = vadd.f32 0.0, %v2425
        %v2427 = vpop.f32.mrb[0].mxu0
        %2428 = vdwg.mxu0
        %v2429 = vadd.f32 %v2305, %v2406
        %v2430 = vadd.f32 %v2306, %v2411
        %v2431 = vadd.f32 %v2307, %v2416
        %v2432 = vadd.f32 %v2308, %v2421
        %v2433 = vadd.f32 %v2309, %v2426
        %v2434 = vld [vmem:[%s8] sm:$0x1]
        %v2436 = vlaneseq
        %v2437 = vshrl.u32 %v2436, 7
        %v2438 = vsub.s32 0, %v2437
        %v2439 = vrot.slane %v2434, %v2438
        %v2441 = vmul.f32 %v2429, %v2439
        %v2442 = vmul.f32 %v2430, %v2439
        %v2443 = vmul.f32 %v2431, %v2439
        %v2444 = vmul.f32 %v2432, %v2439
        %v2445 = vmul.f32 %v2433, %v2439
        %v2446 = vld [vmem:[%s9] sm:$0x1]
        %v2448 = vlaneseq
        %v2449 = vshrl.u32 %v2448, 7
        %v2450 = vsub.s32 0, %v2449
        %v2451 = vrot.slane %v2446, %v2450
        %v2453 = vadd.f32 %v2441, %v2451
        %v2454 = vadd.f32 %v2442, %v2451
        %v2455 = vadd.f32 %v2443, %v2451
        %v2456 = vadd.f32 %v2444, %v2451
        %v2457 = vadd.f32 %v2445, %v2451
        %v2458 = vtanh.pop %v2453
        %v2459 = vtanh.pop %v2454
        %v2460 = vtanh.pop %v2455
        %v2461 = vtanh.pop %v2456
        %v2462 = vtanh.pop %v2457
        %2463 = vst.msk [vmem:[#allocation3 + $0x2] sm:$0xff] %vm1176, %v2458
        %2464 = vst.msk [vmem:[#allocation3 + $0xa] sm:$0xff] %vm1176, %v2459
        %2465 = vst.msk [vmem:[#allocation3 + $0x12] sm:$0xff] %vm1176, %v2460
        %2466 = vst.msk [vmem:[#allocation3 + $0x1a] sm:$0xff] %vm1176, %v2461
        %2467 = vst.msk [vmem:[#allocation3 + $0x22] sm:$0xff] %vm1176, %v2462
        %v2468 = vld [vmem:[#allocation3] sm:$0xff]
        %v2469 = vld [vmem:[#allocation3 + $0x8] sm:$0xff]
        %v2470 = vld [vmem:[#allocation3 + $0x10] sm:$0xff]
        %v2471 = vld [vmem:[#allocation3 + $0x18] sm:$0xff]
        %v2472 = vld [vmem:[#allocation3 + $0x20] sm:$0xff]
        %v2473 = vld [vmem:[#allocation6] sm:$0xff]
        %v2474 = vld [vmem:[#allocation6 + $0x8] sm:$0xff]
        %v2475 = vld [vmem:[#allocation6 + $0x10] sm:$0xff]
        %v2476 = vld [vmem:[#allocation6 + $0x18] sm:$0xff]
        %v2477 = vld [vmem:[#allocation6 + $0x20] sm:$0xff]
        %v2478 = vld [vmem:[#allocation6 + $0x28] sm:$0xff]
        %v2479 = vld [vmem:[#allocation6 + $0x30] sm:$0xff]
        %v2480 = vld [vmem:[#allocation6 + $0x38] sm:$0xff]
        %v2481 = vld [vmem:[#allocation3 + $0x1] sm:$0xff]
        %v2482 = vld [vmem:[#allocation3 + $0x9] sm:$0xff]
        %v2483 = vld [vmem:[#allocation3 + $0x11] sm:$0xff]
        %v2484 = vld [vmem:[#allocation3 + $0x19] sm:$0xff]
        %v2485 = vld [vmem:[#allocation3 + $0x21] sm:$0xff]
        %s2486 = scalar_lea.vmem [#allocation6], 64
        %v2487 = vld [vmem:[%s2486] sm:$0xff]
        %v2488 = vld [vmem:[%s2486 + $0x8] sm:$0xff]
        %v2489 = vld [vmem:[%s2486 + $0x10] sm:$0xff]
        %v2490 = vld [vmem:[%s2486 + $0x18] sm:$0xff]
        %v2491 = vld [vmem:[%s2486 + $0x20] sm:$0xff]
        %v2492 = vld [vmem:[%s2486 + $0x28] sm:$0xff]
        %v2493 = vld [vmem:[%s2486 + $0x30] sm:$0xff]
        %v2494 = vld [vmem:[%s2486 + $0x38] sm:$0xff]
        %v2496 = vsel %vm1176, %v2481, 0
        %v2499 = vsel %vm1176, %v2482, 0
        %v2502 = vsel %vm1176, %v2483, 0
        %v2505 = vsel %vm1176, %v2484, 0
        %v2508 = vsel %vm1176, %v2485, 0
        %2510 = vmatprep.subr.mxu0 0.0
        %2511 = vmatpush1.msra.mxu0 %v2487
        %2512 = vmatprep.subr.mxu0 0.0
        %2513 = vmatpush1.msra.mxu0 %v2488
        %2514 = vmatprep.subr.mxu0 0.0
        %2515 = vmatpush1.msra.mxu0 %v2489
        %2516 = vmatprep.subr.mxu0 0.0
        %2517 = vmatpush1.msra.mxu0 %v2490
        %2518 = vmatprep.subr.mxu0 0.0
        %2519 = vmatpush1.msra.mxu0 %v2491
        %2520 = vmatprep.subr.mxu0 0.0
        %2521 = vmatpush1.msra.mxu0 %v2492
        %2522 = vmatprep.subr.mxu0 0.0
        %2523 = vmatpush1.msra.mxu0 %v2493
        %2524 = vmatprep.subr.mxu0 0.0
        %2525 = vmatpush1.msra.mxu0 %v2494
        %2526 = vmatprep.subr.mxu0 0.0
        %2527 = vmatpush1.msra.mxu0 0.0
        %2528 = vmatprep.subr.mxu0 0.0
        %2529 = vmatpush1.msra.mxu0 0.0
        %2530 = vmatprep.subr.mxu0 0.0
        %2531 = vmatpush1.msra.mxu0 0.0
        %2532 = vmatprep.subr.mxu0 0.0
        %2533 = vmatpush1.msra.mxu0 0.0
        %2534 = vmatprep.subr.mxu0 0.0
        %2535 = vmatpush1.msra.mxu0 0.0
        %2536 = vmatprep.subr.mxu0 0.0
        %2537 = vmatpush1.msra.mxu0 0.0
        %2538 = vmatprep.subr.mxu0 0.0
        %2539 = vmatpush1.msra.mxu0 0.0
        %2540 = vmatprep.subr.mxu0 0.0
        %2541 = vmatpush1.msra.mxu0 0.0
        %2542 = vmatprep.subr.mxu0 0.0
        %2543 = vmatpush1.msra.mxu0 0.0
        %2544 = vmatprep.subr.mxu0 0.0
        %2545 = vmatpush1.msra.mxu0 0.0
        %2546 = vmatprep.subr.mxu0 0.0
        %2547 = vmatpush1.msra.mxu0 0.0
        %2548 = vmatprep.subr.mxu0 0.0
        %2549 = vmatpush1.msra.mxu0 0.0
        %2550 = vmatprep.subr.mxu0 0.0
        %2551 = vmatpush1.msra.mxu0 0.0
        %2552 = vmatprep.subr.mxu0 0.0
        %2553 = vmatpush1.msra.mxu0 0.0
        %2554 = vmatprep.subr.mxu0 0.0
        %2555 = vmatpush1.msra.mxu0 0.0
        %2556 = vmatprep.subr.mxu0 0.0
        %2557 = vmatpush1.msra.mxu0 0.0
        %2558 = vmatprep.subr.mxu0 0.0
        %2559 = vmatpush1.msra.mxu0 0.0
        %2560 = vmatprep.subr.mxu0 0.0
        %2561 = vmatpush1.msra.mxu0 0.0
        %2562 = vmatprep.subr.mxu0 0.0
        %2563 = vmatpush1.msra.mxu0 0.0
        %2564 = vmatprep.subr.mxu0 0.0
        %2565 = vmatpush1.msra.mxu0 0.0
        %2566 = vmatprep.subr.mxu0 0.0
        %2567 = vmatpush1.msra.mxu0 0.0
        %2568 = vmatprep.subr.mxu0 0.0
        %2569 = vmatpush1.msra.mxu0 0.0
        %2570 = vmatprep.subr.mxu0 0.0
        %2571 = vmatpush1.msra.mxu0 0.0
        %2572 = vmatprep.subr.mxu0 0.0
        %2573 = vmatpush1.msra.mxu0 0.0
        %2574 = vmatprep.mubr.f32.mxu0 0.0
        %2575 = vmatmul.mubr.f32.gmra.mrb[0].mxu0 %v2496
        %v2576 = vpop.f32.mrb[0].mxu0
        %v2577 = vadd.f32 0.0, %v2576
        %v2578 = vpop.f32.mrb[0].mxu0
        %2579 = vmatprep.mubr.f32.mxu0 0.0
        %2580 = vmatmul.mubr.f32.gmra.mrb[0].mxu0 %v2499
        %v2581 = vpop.f32.mrb[0].mxu0
        %v2582 = vadd.f32 0.0, %v2581
        %v2583 = vpop.f32.mrb[0].mxu0
        %2584 = vmatprep.mubr.f32.mxu0 0.0
        %2585 = vmatmul.mubr.f32.gmra.mrb[0].mxu0 %v2502
        %v2586 = vpop.f32.mrb[0].mxu0
        %v2587 = vadd.f32 0.0, %v2586
        %v2588 = vpop.f32.mrb[0].mxu0
        %2589 = vmatprep.mubr.f32.mxu0 0.0
        %2590 = vmatmul.mubr.f32.gmra.mrb[0].mxu0 %v2505
        %v2591 = vpop.f32.mrb[0].mxu0
        %v2592 = vadd.f32 0.0, %v2591
        %v2593 = vpop.f32.mrb[0].mxu0
        %2594 = vmatprep.mubr.f32.mxu0 0.0
        %2595 = vmatmul.mubr.f32.gmra.mrb[0].mxu0 %v2508
        %v2596 = vpop.f32.mrb[0].mxu0
        %v2597 = vadd.f32 0.0, %v2596
        %v2598 = vpop.f32.mrb[0].mxu0
        %2599 = vdwg.mxu0
        %v2601 = vsel %vm1176, %v2468, 0
        %v2604 = vsel %vm1176, %v2469, 0
        %v2607 = vsel %vm1176, %v2470, 0
        %v2610 = vsel %vm1176, %v2471, 0
        %v2613 = vsel %vm1176, %v2472, 0
        %2615 = vmatprep.subr.mxu0 0.0
        %2616 = vmatpush1.msra.mxu0 %v2473
        %2617 = vmatprep.subr.mxu0 0.0
        %2618 = vmatpush1.msra.mxu0 %v2474
        %2619 = vmatprep.subr.mxu0 0.0
        %2620 = vmatpush1.msra.mxu0 %v2475
        %2621 = vmatprep.subr.mxu0 0.0
        %2622 = vmatpush1.msra.mxu0 %v2476
        %2623 = vmatprep.subr.mxu0 0.0
        %2624 = vmatpush1.msra.mxu0 %v2477
        %2625 = vmatprep.subr.mxu0 0.0
        %2626 = vmatpush1.msra.mxu0 %v2478
        %2627 = vmatprep.subr.mxu0 0.0
        %2628 = vmatpush1.msra.mxu0 %v2479
        %2629 = vmatprep.subr.mxu0 0.0
        %2630 = vmatpush1.msra.mxu0 %v2480
        %2631 = vmatprep.subr.mxu0 0.0
        %2632 = vmatpush1.msra.mxu0 0.0
        %2633 = vmatprep.subr.mxu0 0.0
        %2634 = vmatpush1.msra.mxu0 0.0
        %2635 = vmatprep.subr.mxu0 0.0
        %2636 = vmatpush1.msra.mxu0 0.0
        %2637 = vmatprep.subr.mxu0 0.0
        %2638 = vmatpush1.msra.mxu0 0.0
        %2639 = vmatprep.subr.mxu0 0.0
        %2640 = vmatpush1.msra.mxu0 0.0
        %2641 = vmatprep.subr.mxu0 0.0
        %2642 = vmatpush1.msra.mxu0 0.0
        %2643 = vmatprep.subr.mxu0 0.0
        %2644 = vmatpush1.msra.mxu0 0.0
        %2645 = vmatprep.subr.mxu0 0.0
        %2646 = vmatpush1.msra.mxu0 0.0
        %2647 = vmatprep.subr.mxu0 0.0
        %2648 = vmatpush1.msra.mxu0 0.0
        %2649 = vmatprep.subr.mxu0 0.0
        %2650 = vmatpush1.msra.mxu0 0.0
        %2651 = vmatprep.subr.mxu0 0.0
        %2652 = vmatpush1.msra.mxu0 0.0
        %2653 = vmatprep.subr.mxu0 0.0
        %2654 = vmatpush1.msra.mxu0 0.0
        %2655 = vmatprep.subr.mxu0 0.0
        %2656 = vmatpush1.msra.mxu0 0.0
        %2657 = vmatprep.subr.mxu0 0.0
        %2658 = vmatpush1.msra.mxu0 0.0
        %2659 = vmatprep.subr.mxu0 0.0
        %2660 = vmatpush1.msra.mxu0 0.0
        %2661 = vmatprep.subr.mxu0 0.0
        %2662 = vmatpush1.msra.mxu0 0.0
        %2663 = vmatprep.subr.mxu0 0.0
        %2664 = vmatpush1.msra.mxu0 0.0
        %2665 = vmatprep.subr.mxu0 0.0
        %2666 = vmatpush1.msra.mxu0 0.0
        %2667 = vmatprep.subr.mxu0 0.0
        %2668 = vmatpush1.msra.mxu0 0.0
        %2669 = vmatprep.subr.mxu0 0.0
        %2670 = vmatpush1.msra.mxu0 0.0
        %2671 = vmatprep.subr.mxu0 0.0
        %2672 = vmatpush1.msra.mxu0 0.0
        %2673 = vmatprep.subr.mxu0 0.0
        %2674 = vmatpush1.msra.mxu0 0.0
        %2675 = vmatprep.subr.mxu0 0.0
        %2676 = vmatpush1.msra.mxu0 0.0
        %2677 = vmatprep.subr.mxu0 0.0
        %2678 = vmatpush1.msra.mxu0 0.0
        %2679 = vmatprep.mubr.f32.mxu0 0.0
        %2680 = vmatmul.mubr.f32.gmra.mrb[0].mxu0 %v2601
        %v2681 = vpop.f32.mrb[0].mxu0
        %v2682 = vadd.f32 %v2577, %v2681
        %v2683 = vpop.f32.mrb[0].mxu0
        %2684 = vmatprep.mubr.f32.mxu0 0.0
        %2685 = vmatmul.mubr.f32.gmra.mrb[0].mxu0 %v2604
        %v2686 = vpop.f32.mrb[0].mxu0
        %v2687 = vadd.f32 %v2582, %v2686
        %v2688 = vpop.f32.mrb[0].mxu0
        %2689 = vmatprep.mubr.f32.mxu0 0.0
        %2690 = vmatmul.mubr.f32.gmra.mrb[0].mxu0 %v2607
        %v2691 = vpop.f32.mrb[0].mxu0
        %v2692 = vadd.f32 %v2587, %v2691
        %v2693 = vpop.f32.mrb[0].mxu0
        %2694 = vmatprep.mubr.f32.mxu0 0.0
        %2695 = vmatmul.mubr.f32.gmra.mrb[0].mxu0 %v2610
        %v2696 = vpop.f32.mrb[0].mxu0
        %v2697 = vadd.f32 %v2592, %v2696
        %v2698 = vpop.f32.mrb[0].mxu0
        %2699 = vmatprep.mubr.f32.mxu0 0.0
        %2700 = vmatmul.mubr.f32.gmra.mrb[0].mxu0 %v2613
        %v2701 = vpop.f32.mrb[0].mxu0
        %v2702 = vadd.f32 %v2597, %v2701
        %v2703 = vpop.f32.mrb[0].mxu0
        %2704 = vdwg.mxu0
        %v2705 = vld [vmem:[#allocation3 + $0x2] sm:$0xff]
        %v2706 = vld [vmem:[#allocation3 + $0xa] sm:$0xff]
        %v2707 = vld [vmem:[#allocation3 + $0x12] sm:$0xff]
        %v2708 = vld [vmem:[#allocation3 + $0x1a] sm:$0xff]
        %v2709 = vld [vmem:[#allocation3 + $0x22] sm:$0xff]
        %s2710 = scalar_lea.vmem [#allocation6], 128
        %v2711 = vld [vmem:[%s2710] sm:$0xff]
        %v2712 = vld [vmem:[%s2710 + $0x8] sm:$0xff]
        %v2713 = vld [vmem:[%s2710 + $0x10] sm:$0xff]
        %v2714 = vld [vmem:[%s2710 + $0x18] sm:$0xff]
        %v2715 = vld [vmem:[%s2710 + $0x20] sm:$0xff]
        %v2716 = vld [vmem:[%s2710 + $0x28] sm:$0xff]
        %v2717 = vld [vmem:[%s2710 + $0x30] sm:$0xff]
        %v2718 = vld [vmem:[%s2710 + $0x38] sm:$0xff]
        %v2720 = vsel %vm1176, %v2705, 0
        %v2723 = vsel %vm1176, %v2706, 0
        %v2726 = vsel %vm1176, %v2707, 0
        %v2729 = vsel %vm1176, %v2708, 0
        %v2732 = vsel %vm1176, %v2709, 0
        %2734 = vmatprep.subr.mxu0 0.0
        %2735 = vmatpush1.msra.mxu0 %v2711
        %2736 = vmatprep.subr.mxu0 0.0
        %2737 = vmatpush1.msra.mxu0 %v2712
        %2738 = vmatprep.subr.mxu0 0.0
        %2739 = vmatpush1.msra.mxu0 %v2713
        %2740 = vmatprep.subr.mxu0 0.0
        %2741 = vmatpush1.msra.mxu0 %v2714
        %2742 = vmatprep.subr.mxu0 0.0
        %2743 = vmatpush1.msra.mxu0 %v2715
        %2744 = vmatprep.subr.mxu0 0.0
        %2745 = vmatpush1.msra.mxu0 %v2716
        %2746 = vmatprep.subr.mxu0 0.0
        %2747 = vmatpush1.msra.mxu0 %v2717
        %2748 = vmatprep.subr.mxu0 0.0
        %2749 = vmatpush1.msra.mxu0 %v2718
        %2750 = vmatprep.subr.mxu0 0.0
        %2751 = vmatpush1.msra.mxu0 0.0
        %2752 = vmatprep.subr.mxu0 0.0
        %2753 = vmatpush1.msra.mxu0 0.0
        %2754 = vmatprep.subr.mxu0 0.0
        %2755 = vmatpush1.msra.mxu0 0.0
        %2756 = vmatprep.subr.mxu0 0.0
        %2757 = vmatpush1.msra.mxu0 0.0
        %2758 = vmatprep.subr.mxu0 0.0
        %2759 = vmatpush1.msra.mxu0 0.0
        %2760 = vmatprep.subr.mxu0 0.0
        %2761 = vmatpush1.msra.mxu0 0.0
        %2762 = vmatprep.subr.mxu0 0.0
        %2763 = vmatpush1.msra.mxu0 0.0
        %2764 = vmatprep.subr.mxu0 0.0
        %2765 = vmatpush1.msra.mxu0 0.0
        %2766 = vmatprep.subr.mxu0 0.0
        %2767 = vmatpush1.msra.mxu0 0.0
        %2768 = vmatprep.subr.mxu0 0.0
        %2769 = vmatpush1.msra.mxu0 0.0
        %2770 = vmatprep.subr.mxu0 0.0
        %2771 = vmatpush1.msra.mxu0 0.0
        %2772 = vmatprep.subr.mxu0 0.0
        %2773 = vmatpush1.msra.mxu0 0.0
        %2774 = vmatprep.subr.mxu0 0.0
        %2775 = vmatpush1.msra.mxu0 0.0
        %2776 = vmatprep.subr.mxu0 0.0
        %2777 = vmatpush1.msra.mxu0 0.0
        %2778 = vmatprep.subr.mxu0 0.0
        %2779 = vmatpush1.msra.mxu0 0.0
        %2780 = vmatprep.subr.mxu0 0.0
        %2781 = vmatpush1.msra.mxu0 0.0
        %2782 = vmatprep.subr.mxu0 0.0
        %2783 = vmatpush1.msra.mxu0 0.0
        %2784 = vmatprep.subr.mxu0 0.0
        %2785 = vmatpush1.msra.mxu0 0.0
        %2786 = vmatprep.subr.mxu0 0.0
        %2787 = vmatpush1.msra.mxu0 0.0
        %2788 = vmatprep.subr.mxu0 0.0
        %2789 = vmatpush1.msra.mxu0 0.0
        %2790 = vmatprep.subr.mxu0 0.0
        %2791 = vmatpush1.msra.mxu0 0.0
        %2792 = vmatprep.subr.mxu0 0.0
        %2793 = vmatpush1.msra.mxu0 0.0
        %2794 = vmatprep.subr.mxu0 0.0
        %2795 = vmatpush1.msra.mxu0 0.0
        %2796 = vmatprep.subr.mxu0 0.0
        %2797 = vmatpush1.msra.mxu0 0.0
        %2798 = vmatprep.mubr.f32.mxu0 0.0
        %2799 = vmatmul.mubr.f32.gmra.mrb[0].mxu0 %v2720
        %v2800 = vpop.f32.mrb[0].mxu0
        %v2801 = vadd.f32 0.0, %v2800
        %v2802 = vpop.f32.mrb[0].mxu0
        %2803 = vmatprep.mubr.f32.mxu0 0.0
        %2804 = vmatmul.mubr.f32.gmra.mrb[0].mxu0 %v2723
        %v2805 = vpop.f32.mrb[0].mxu0
        %v2806 = vadd.f32 0.0, %v2805
        %v2807 = vpop.f32.mrb[0].mxu0
        %2808 = vmatprep.mubr.f32.mxu0 0.0
        %2809 = vmatmul.mubr.f32.gmra.mrb[0].mxu0 %v2726
        %v2810 = vpop.f32.mrb[0].mxu0
        %v2811 = vadd.f32 0.0, %v2810
        %v2812 = vpop.f32.mrb[0].mxu0
        %2813 = vmatprep.mubr.f32.mxu0 0.0
        %2814 = vmatmul.mubr.f32.gmra.mrb[0].mxu0 %v2729
        %v2815 = vpop.f32.mrb[0].mxu0
        %v2816 = vadd.f32 0.0, %v2815
        %v2817 = vpop.f32.mrb[0].mxu0
        %2818 = vmatprep.mubr.f32.mxu0 0.0
        %2819 = vmatmul.mubr.f32.gmra.mrb[0].mxu0 %v2732
        %v2820 = vpop.f32.mrb[0].mxu0
        %v2821 = vadd.f32 0.0, %v2820
        %v2822 = vpop.f32.mrb[0].mxu0
        %2823 = vdwg.mxu0
        %v2824 = vadd.f32 %v2682, %v2801
        %v2825 = vadd.f32 %v2687, %v2806
        %v2826 = vadd.f32 %v2692, %v2811
        %v2827 = vadd.f32 %v2697, %v2816
        %v2828 = vadd.f32 %v2702, %v2821
        %v2829 = vld [vmem:[#allocation3 + $0x3] sm:$0xff]
        %v2830 = vld [vmem:[#allocation3 + $0xb] sm:$0xff]
        %v2831 = vld [vmem:[#allocation3 + $0x13] sm:$0xff]
        %v2832 = vld [vmem:[#allocation3 + $0x1b] sm:$0xff]
        %v2833 = vld [vmem:[#allocation3 + $0x23] sm:$0xff]
        %s2834 = scalar_lea.vmem [#allocation6], 192
        %v2835 = vld [vmem:[%s2834] sm:$0xff]
        %v2836 = vld [vmem:[%s2834 + $0x8] sm:$0xff]
        %v2837 = vld [vmem:[%s2834 + $0x10] sm:$0xff]
        %v2838 = vld [vmem:[%s2834 + $0x18] sm:$0xff]
        %v2839 = vld [vmem:[%s2834 + $0x20] sm:$0xff]
        %v2840 = vld [vmem:[%s2834 + $0x28] sm:$0xff]
        %v2841 = vld [vmem:[%s2834 + $0x30] sm:$0xff]
        %v2842 = vld [vmem:[%s2834 + $0x38] sm:$0xff]
        %v2844 = vsel %vm1176, %v2829, 0
        %v2847 = vsel %vm1176, %v2830, 0
        %v2850 = vsel %vm1176, %v2831, 0
        %v2853 = vsel %vm1176, %v2832, 0
        %v2856 = vsel %vm1176, %v2833, 0
        %2858 = vmatprep.subr.mxu0 0.0
        %2859 = vmatpush1.msra.mxu0 %v2835
        %2860 = vmatprep.subr.mxu0 0.0
        %2861 = vmatpush1.msra.mxu0 %v2836
        %2862 = vmatprep.subr.mxu0 0.0
        %2863 = vmatpush1.msra.mxu0 %v2837
        %2864 = vmatprep.subr.mxu0 0.0
        %2865 = vmatpush1.msra.mxu0 %v2838
        %2866 = vmatprep.subr.mxu0 0.0
        %2867 = vmatpush1.msra.mxu0 %v2839
        %2868 = vmatprep.subr.mxu0 0.0
        %2869 = vmatpush1.msra.mxu0 %v2840
        %2870 = vmatprep.subr.mxu0 0.0
        %2871 = vmatpush1.msra.mxu0 %v2841
        %2872 = vmatprep.subr.mxu0 0.0
        %2873 = vmatpush1.msra.mxu0 %v2842
        %2874 = vmatprep.subr.mxu0 0.0
        %2875 = vmatpush1.msra.mxu0 0.0
        %2876 = vmatprep.subr.mxu0 0.0
        %2877 = vmatpush1.msra.mxu0 0.0
        %2878 = vmatprep.subr.mxu0 0.0
        %2879 = vmatpush1.msra.mxu0 0.0
        %2880 = vmatprep.subr.mxu0 0.0
        %2881 = vmatpush1.msra.mxu0 0.0
        %2882 = vmatprep.subr.mxu0 0.0
        %2883 = vmatpush1.msra.mxu0 0.0
        %2884 = vmatprep.subr.mxu0 0.0
        %2885 = vmatpush1.msra.mxu0 0.0
        %2886 = vmatprep.subr.mxu0 0.0
        %2887 = vmatpush1.msra.mxu0 0.0
        %2888 = vmatprep.subr.mxu0 0.0
        %2889 = vmatpush1.msra.mxu0 0.0
        %2890 = vmatprep.subr.mxu0 0.0
        %2891 = vmatpush1.msra.mxu0 0.0
        %2892 = vmatprep.subr.mxu0 0.0
        %2893 = vmatpush1.msra.mxu0 0.0
        %2894 = vmatprep.subr.mxu0 0.0
        %2895 = vmatpush1.msra.mxu0 0.0
        %2896 = vmatprep.subr.mxu0 0.0
        %2897 = vmatpush1.msra.mxu0 0.0
        %2898 = vmatprep.subr.mxu0 0.0
        %2899 = vmatpush1.msra.mxu0 0.0
        %2900 = vmatprep.subr.mxu0 0.0
        %2901 = vmatpush1.msra.mxu0 0.0
        %2902 = vmatprep.subr.mxu0 0.0
        %2903 = vmatpush1.msra.mxu0 0.0
        %2904 = vmatprep.subr.mxu0 0.0
        %2905 = vmatpush1.msra.mxu0 0.0
        %2906 = vmatprep.subr.mxu0 0.0
        %2907 = vmatpush1.msra.mxu0 0.0
        %2908 = vmatprep.subr.mxu0 0.0
        %2909 = vmatpush1.msra.mxu0 0.0
        %2910 = vmatprep.subr.mxu0 0.0
        %2911 = vmatpush1.msra.mxu0 0.0
        %2912 = vmatprep.subr.mxu0 0.0
        %2913 = vmatpush1.msra.mxu0 0.0
        %2914 = vmatprep.subr.mxu0 0.0
        %2915 = vmatpush1.msra.mxu0 0.0
        %2916 = vmatprep.subr.mxu0 0.0
        %2917 = vmatpush1.msra.mxu0 0.0
        %2918 = vmatprep.subr.mxu0 0.0
        %2919 = vmatpush1.msra.mxu0 0.0
        %2920 = vmatprep.subr.mxu0 0.0
        %2921 = vmatpush1.msra.mxu0 0.0
        %2922 = vmatprep.mubr.f32.mxu0 0.0
        %2923 = vmatmul.mubr.f32.gmra.mrb[0].mxu0 %v2844
        %v2924 = vpop.f32.mrb[0].mxu0
        %v2925 = vadd.f32 0.0, %v2924
        %v2926 = vpop.f32.mrb[0].mxu0
        %2927 = vmatprep.mubr.f32.mxu0 0.0
        %2928 = vmatmul.mubr.f32.gmra.mrb[0].mxu0 %v2847
        %v2929 = vpop.f32.mrb[0].mxu0
        %v2930 = vadd.f32 0.0, %v2929
        %v2931 = vpop.f32.mrb[0].mxu0
        %2932 = vmatprep.mubr.f32.mxu0 0.0
        %2933 = vmatmul.mubr.f32.gmra.mrb[0].mxu0 %v2850
        %v2934 = vpop.f32.mrb[0].mxu0
        %v2935 = vadd.f32 0.0, %v2934
        %v2936 = vpop.f32.mrb[0].mxu0
        %2937 = vmatprep.mubr.f32.mxu0 0.0
        %2938 = vmatmul.mubr.f32.gmra.mrb[0].mxu0 %v2853
        %v2939 = vpop.f32.mrb[0].mxu0
        %v2940 = vadd.f32 0.0, %v2939
        %v2941 = vpop.f32.mrb[0].mxu0
        %2942 = vmatprep.mubr.f32.mxu0 0.0
        %2943 = vmatmul.mubr.f32.gmra.mrb[0].mxu0 %v2856
        %v2944 = vpop.f32.mrb[0].mxu0
        %v2945 = vadd.f32 0.0, %v2944
        %v2946 = vpop.f32.mrb[0].mxu0
        %2947 = vdwg.mxu0
        %v2948 = vadd.f32 %v2824, %v2925
        %v2949 = vadd.f32 %v2825, %v2930
        %v2950 = vadd.f32 %v2826, %v2935
        %v2951 = vadd.f32 %v2827, %v2940
        %v2952 = vadd.f32 %v2828, %v2945
        %v2953 = vld [vmem:[#allocation3 + $0x4] sm:$0xff]
        %v2954 = vld [vmem:[#allocation3 + $0xc] sm:$0xff]
        %v2955 = vld [vmem:[#allocation3 + $0x14] sm:$0xff]
        %v2956 = vld [vmem:[#allocation3 + $0x1c] sm:$0xff]
        %v2957 = vld [vmem:[#allocation3 + $0x24] sm:$0xff]
        %s2958 = scalar_lea.vmem [#allocation6], 256
        %v2959 = vld [vmem:[%s2958] sm:$0xff]
        %v2960 = vld [vmem:[%s2958 + $0x8] sm:$0xff]
        %v2961 = vld [vmem:[%s2958 + $0x10] sm:$0xff]
        %v2962 = vld [vmem:[%s2958 + $0x18] sm:$0xff]
        %v2963 = vld [vmem:[%s2958 + $0x20] sm:$0xff]
        %v2964 = vld [vmem:[%s2958 + $0x28] sm:$0xff]
        %v2965 = vld [vmem:[%s2958 + $0x30] sm:$0xff]
        %v2966 = vld [vmem:[%s2958 + $0x38] sm:$0xff]
        %v2968 = vsel %vm1176, %v2953, 0
        %v2971 = vsel %vm1176, %v2954, 0
        %v2974 = vsel %vm1176, %v2955, 0
        %v2977 = vsel %vm1176, %v2956, 0
        %v2980 = vsel %vm1176, %v2957, 0
        %2982 = vmatprep.subr.mxu0 0.0
        %2983 = vmatpush1.msra.mxu0 %v2959
        %2984 = vmatprep.subr.mxu0 0.0
        %2985 = vmatpush1.msra.mxu0 %v2960
        %2986 = vmatprep.subr.mxu0 0.0
        %2987 = vmatpush1.msra.mxu0 %v2961
        %2988 = vmatprep.subr.mxu0 0.0
        %2989 = vmatpush1.msra.mxu0 %v2962
        %2990 = vmatprep.subr.mxu0 0.0
        %2991 = vmatpush1.msra.mxu0 %v2963
        %2992 = vmatprep.subr.mxu0 0.0
        %2993 = vmatpush1.msra.mxu0 %v2964
        %2994 = vmatprep.subr.mxu0 0.0
        %2995 = vmatpush1.msra.mxu0 %v2965
        %2996 = vmatprep.subr.mxu0 0.0
        %2997 = vmatpush1.msra.mxu0 %v2966
        %2998 = vmatprep.subr.mxu0 0.0
        %2999 = vmatpush1.msra.mxu0 0.0
        %3000 = vmatprep.subr.mxu0 0.0
        %3001 = vmatpush1.msra.mxu0 0.0
        %3002 = vmatprep.subr.mxu0 0.0
        %3003 = vmatpush1.msra.mxu0 0.0
        %3004 = vmatprep.subr.mxu0 0.0
        %3005 = vmatpush1.msra.mxu0 0.0
        %3006 = vmatprep.subr.mxu0 0.0
        %3007 = vmatpush1.msra.mxu0 0.0
        %3008 = vmatprep.subr.mxu0 0.0
        %3009 = vmatpush1.msra.mxu0 0.0
        %3010 = vmatprep.subr.mxu0 0.0
        %3011 = vmatpush1.msra.mxu0 0.0
        %3012 = vmatprep.subr.mxu0 0.0
        %3013 = vmatpush1.msra.mxu0 0.0
        %3014 = vmatprep.subr.mxu0 0.0
        %3015 = vmatpush1.msra.mxu0 0.0
        %3016 = vmatprep.subr.mxu0 0.0
        %3017 = vmatpush1.msra.mxu0 0.0
        %3018 = vmatprep.subr.mxu0 0.0
        %3019 = vmatpush1.msra.mxu0 0.0
        %3020 = vmatprep.subr.mxu0 0.0
        %3021 = vmatpush1.msra.mxu0 0.0
        %3022 = vmatprep.subr.mxu0 0.0
        %3023 = vmatpush1.msra.mxu0 0.0
        %3024 = vmatprep.subr.mxu0 0.0
        %3025 = vmatpush1.msra.mxu0 0.0
        %3026 = vmatprep.subr.mxu0 0.0
        %3027 = vmatpush1.msra.mxu0 0.0
        %3028 = vmatprep.subr.mxu0 0.0
        %3029 = vmatpush1.msra.mxu0 0.0
        %3030 = vmatprep.subr.mxu0 0.0
        %3031 = vmatpush1.msra.mxu0 0.0
        %3032 = vmatprep.subr.mxu0 0.0
        %3033 = vmatpush1.msra.mxu0 0.0
        %3034 = vmatprep.subr.mxu0 0.0
        %3035 = vmatpush1.msra.mxu0 0.0
        %3036 = vmatprep.subr.mxu0 0.0
        %3037 = vmatpush1.msra.mxu0 0.0
        %3038 = vmatprep.subr.mxu0 0.0
        %3039 = vmatpush1.msra.mxu0 0.0
        %3040 = vmatprep.subr.mxu0 0.0
        %3041 = vmatpush1.msra.mxu0 0.0
        %3042 = vmatprep.subr.mxu0 0.0
        %3043 = vmatpush1.msra.mxu0 0.0
        %3044 = vmatprep.subr.mxu0 0.0
        %3045 = vmatpush1.msra.mxu0 0.0
        %3046 = vmatprep.mubr.f32.mxu0 0.0
        %3047 = vmatmul.mubr.f32.gmra.mrb[0].mxu0 %v2968
        %v3048 = vpop.f32.mrb[0].mxu0
        %v3049 = vadd.f32 0.0, %v3048
        %v3050 = vpop.f32.mrb[0].mxu0
        %3051 = vmatprep.mubr.f32.mxu0 0.0
        %3052 = vmatmul.mubr.f32.gmra.mrb[0].mxu0 %v2971
        %v3053 = vpop.f32.mrb[0].mxu0
        %v3054 = vadd.f32 0.0, %v3053
        %v3055 = vpop.f32.mrb[0].mxu0
        %3056 = vmatprep.mubr.f32.mxu0 0.0
        %3057 = vmatmul.mubr.f32.gmra.mrb[0].mxu0 %v2974
        %v3058 = vpop.f32.mrb[0].mxu0
        %v3059 = vadd.f32 0.0, %v3058
        %v3060 = vpop.f32.mrb[0].mxu0
        %3061 = vmatprep.mubr.f32.mxu0 0.0
        %3062 = vmatmul.mubr.f32.gmra.mrb[0].mxu0 %v2977
        %v3063 = vpop.f32.mrb[0].mxu0
        %v3064 = vadd.f32 0.0, %v3063
        %v3065 = vpop.f32.mrb[0].mxu0
        %3066 = vmatprep.mubr.f32.mxu0 0.0
        %3067 = vmatmul.mubr.f32.gmra.mrb[0].mxu0 %v2980
        %v3068 = vpop.f32.mrb[0].mxu0
        %v3069 = vadd.f32 0.0, %v3068
        %v3070 = vpop.f32.mrb[0].mxu0
        %3071 = vdwg.mxu0
        %v3072 = vadd.f32 %v2948, %v3049
        %v3073 = vadd.f32 %v2949, %v3054
        %v3074 = vadd.f32 %v2950, %v3059
        %v3075 = vadd.f32 %v2951, %v3064
        %v3076 = vadd.f32 %v2952, %v3069
        %v3077 = vld [vmem:[%s11] sm:$0x1]
        %v3079 = vlaneseq
        %v3080 = vshrl.u32 %v3079, 7
        %v3081 = vsub.s32 0, %v3080
        %v3082 = vrot.slane %v3077, %v3081
        %v3084 = vmul.f32 %v3072, %v3082
        %v3085 = vmul.f32 %v3073, %v3082
        %v3086 = vmul.f32 %v3074, %v3082
        %v3087 = vmul.f32 %v3075, %v3082
        %v3088 = vmul.f32 %v3076, %v3082
        %v3089 = vld [vmem:[%s12] sm:$0x1]
        %v3091 = vlaneseq
        %v3092 = vshrl.u32 %v3091, 7
        %v3093 = vsub.s32 0, %v3092
        %v3094 = vrot.slane %v3089, %v3093
        %v3096 = vadd.f32 %v3084, %v3094
        %v3097 = vadd.f32 %v3085, %v3094
        %v3098 = vadd.f32 %v3086, %v3094
        %v3099 = vadd.f32 %v3087, %v3094
        %v3100 = vadd.f32 %v3088, %v3094
        %v3101 = vtanh.pop %v3096
        %v3102 = vtanh.pop %v3097
        %v3103 = vtanh.pop %v3098
        %v3104 = vtanh.pop %v3099
        %v3105 = vtanh.pop %v3100
        %3106 = vst.msk [vmem:[#allocation2 + $0x2] sm:$0xff] %vm1176, %v3101
        %3107 = vst.msk [vmem:[#allocation2 + $0xa] sm:$0xff] %vm1176, %v3102
        %3108 = vst.msk [vmem:[#allocation2 + $0x12] sm:$0xff] %vm1176, %v3103
        %3109 = vst.msk [vmem:[#allocation2 + $0x1a] sm:$0xff] %vm1176, %v3104
        %3110 = vst.msk [vmem:[#allocation2 + $0x22] sm:$0xff] %vm1176, %v3105
        %v3111 = vld [vmem:[#allocation2] sm:$0xff]
        %v3112 = vld [vmem:[#allocation2 + $0x8] sm:$0xff]
        %v3113 = vld [vmem:[#allocation2 + $0x10] sm:$0xff]
        %v3114 = vld [vmem:[#allocation2 + $0x18] sm:$0xff]
        %v3115 = vld [vmem:[#allocation2 + $0x20] sm:$0xff]
        %v3116 = vld [vmem:[%s13] sm:$0xff]
        %v3117 = vld [vmem:[%s13 + $0x8] sm:$0xff]
        %v3118 = vld [vmem:[%s13 + $0x10] sm:$0xff]
        %v3119 = vld [vmem:[%s13 + $0x18] sm:$0xff]
        %v3120 = vld [vmem:[%s13 + $0x20] sm:$0xff]
        %v3121 = vld [vmem:[%s13 + $0x28] sm:$0xff]
        %v3122 = vld [vmem:[%s13 + $0x30] sm:$0xff]
        %v3123 = vld [vmem:[%s13 + $0x38] sm:$0xff]
        %v3124 = vld [vmem:[#allocation2 + $0x1] sm:$0xff]
        %v3125 = vld [vmem:[#allocation2 + $0x9] sm:$0xff]
        %v3126 = vld [vmem:[#allocation2 + $0x11] sm:$0xff]
        %v3127 = vld [vmem:[#allocation2 + $0x19] sm:$0xff]
        %v3128 = vld [vmem:[#allocation2 + $0x21] sm:$0xff]
        %s3129 = scalar_lea.vmem %s13, 64
        %v3130 = vld [vmem:[%s3129] sm:$0xff]
        %v3131 = vld [vmem:[%s3129 + $0x8] sm:$0xff]
        %v3132 = vld [vmem:[%s3129 + $0x10] sm:$0xff]
        %v3133 = vld [vmem:[%s3129 + $0x18] sm:$0xff]
        %v3134 = vld [vmem:[%s3129 + $0x20] sm:$0xff]
        %v3135 = vld [vmem:[%s3129 + $0x28] sm:$0xff]
        %v3136 = vld [vmem:[%s3129 + $0x30] sm:$0xff]
        %v3137 = vld [vmem:[%s3129 + $0x38] sm:$0xff]
        %v3139 = vsel %vm1176, %v3124, 0
        %v3142 = vsel %vm1176, %v3125, 0
        %v3145 = vsel %vm1176, %v3126, 0
        %v3148 = vsel %vm1176, %v3127, 0
        %v3151 = vsel %vm1176, %v3128, 0
        %3153 = vmatprep.subr.mxu0 0.0
        %3154 = vmatpush1.msra.mxu0 %v3130
        %3155 = vmatprep.subr.mxu0 0.0
        %3156 = vmatpush1.msra.mxu0 %v3131
        %3157 = vmatprep.subr.mxu0 0.0
        %3158 = vmatpush1.msra.mxu0 %v3132
        %3159 = vmatprep.subr.mxu0 0.0
        %3160 = vmatpush1.msra.mxu0 %v3133
        %3161 = vmatprep.subr.mxu0 0.0
        %3162 = vmatpush1.msra.mxu0 %v3134
        %3163 = vmatprep.subr.mxu0 0.0
        %3164 = vmatpush1.msra.mxu0 %v3135
        %3165 = vmatprep.subr.mxu0 0.0
        %3166 = vmatpush1.msra.mxu0 %v3136
        %3167 = vmatprep.subr.mxu0 0.0
        %3168 = vmatpush1.msra.mxu0 %v3137
        %3169 = vmatprep.subr.mxu0 0.0
        %3170 = vmatpush1.msra.mxu0 0.0
        %3171 = vmatprep.subr.mxu0 0.0
        %3172 = vmatpush1.msra.mxu0 0.0
        %3173 = vmatprep.subr.mxu0 0.0
        %3174 = vmatpush1.msra.mxu0 0.0
        %3175 = vmatprep.subr.mxu0 0.0
        %3176 = vmatpush1.msra.mxu0 0.0
        %3177 = vmatprep.subr.mxu0 0.0
        %3178 = vmatpush1.msra.mxu0 0.0
        %3179 = vmatprep.subr.mxu0 0.0
        %3180 = vmatpush1.msra.mxu0 0.0
        %3181 = vmatprep.subr.mxu0 0.0
        %3182 = vmatpush1.msra.mxu0 0.0
        %3183 = vmatprep.subr.mxu0 0.0
        %3184 = vmatpush1.msra.mxu0 0.0
        %3185 = vmatprep.subr.mxu0 0.0
        %3186 = vmatpush1.msra.mxu0 0.0
        %3187 = vmatprep.subr.mxu0 0.0
        %3188 = vmatpush1.msra.mxu0 0.0
        %3189 = vmatprep.subr.mxu0 0.0
        %3190 = vmatpush1.msra.mxu0 0.0
        %3191 = vmatprep.subr.mxu0 0.0
        %3192 = vmatpush1.msra.mxu0 0.0
        %3193 = vmatprep.subr.mxu0 0.0
        %3194 = vmatpush1.msra.mxu0 0.0
        %3195 = vmatprep.subr.mxu0 0.0
        %3196 = vmatpush1.msra.mxu0 0.0
        %3197 = vmatprep.subr.mxu0 0.0
        %3198 = vmatpush1.msra.mxu0 0.0
        %3199 = vmatprep.subr.mxu0 0.0
        %3200 = vmatpush1.msra.mxu0 0.0
        %3201 = vmatprep.subr.mxu0 0.0
        %3202 = vmatpush1.msra.mxu0 0.0
        %3203 = vmatprep.subr.mxu0 0.0
        %3204 = vmatpush1.msra.mxu0 0.0
        %3205 = vmatprep.subr.mxu0 0.0
        %3206 = vmatpush1.msra.mxu0 0.0
        %3207 = vmatprep.subr.mxu0 0.0
        %3208 = vmatpush1.msra.mxu0 0.0
        %3209 = vmatprep.subr.mxu0 0.0
        %3210 = vmatpush1.msra.mxu0 0.0
        %3211 = vmatprep.subr.mxu0 0.0
        %3212 = vmatpush1.msra.mxu0 0.0
        %3213 = vmatprep.subr.mxu0 0.0
        %3214 = vmatpush1.msra.mxu0 0.0
        %3215 = vmatprep.subr.mxu0 0.0
        %3216 = vmatpush1.msra.mxu0 0.0
        %3217 = vmatprep.mubr.f32.mxu0 0.0
        %3218 = vmatmul.mubr.f32.gmra.mrb[0].mxu0 %v3139
        %v3219 = vpop.f32.mrb[0].mxu0
        %v3220 = vadd.f32 0.0, %v3219
        %v3221 = vpop.f32.mrb[0].mxu0
        %3222 = vmatprep.mubr.f32.mxu0 0.0
        %3223 = vmatmul.mubr.f32.gmra.mrb[0].mxu0 %v3142
        %v3224 = vpop.f32.mrb[0].mxu0
        %v3225 = vadd.f32 0.0, %v3224
        %v3226 = vpop.f32.mrb[0].mxu0
        %3227 = vmatprep.mubr.f32.mxu0 0.0
        %3228 = vmatmul.mubr.f32.gmra.mrb[0].mxu0 %v3145
        %v3229 = vpop.f32.mrb[0].mxu0
        %v3230 = vadd.f32 0.0, %v3229
        %v3231 = vpop.f32.mrb[0].mxu0
        %3232 = vmatprep.mubr.f32.mxu0 0.0
        %3233 = vmatmul.mubr.f32.gmra.mrb[0].mxu0 %v3148
        %v3234 = vpop.f32.mrb[0].mxu0
        %v3235 = vadd.f32 0.0, %v3234
        %v3236 = vpop.f32.mrb[0].mxu0
        %3237 = vmatprep.mubr.f32.mxu0 0.0
        %3238 = vmatmul.mubr.f32.gmra.mrb[0].mxu0 %v3151
        %v3239 = vpop.f32.mrb[0].mxu0
        %v3240 = vadd.f32 0.0, %v3239
        %v3241 = vpop.f32.mrb[0].mxu0
        %3242 = vdwg.mxu0
        %v3244 = vsel %vm1176, %v3111, 0
        %v3247 = vsel %vm1176, %v3112, 0
        %v3250 = vsel %vm1176, %v3113, 0
        %v3253 = vsel %vm1176, %v3114, 0
        %v3256 = vsel %vm1176, %v3115, 0
        %3258 = vmatprep.subr.mxu0 0.0
        %3259 = vmatpush1.msra.mxu0 %v3116
        %3260 = vmatprep.subr.mxu0 0.0
        %3261 = vmatpush1.msra.mxu0 %v3117
        %3262 = vmatprep.subr.mxu0 0.0
        %3263 = vmatpush1.msra.mxu0 %v3118
        %3264 = vmatprep.subr.mxu0 0.0
        %3265 = vmatpush1.msra.mxu0 %v3119
        %3266 = vmatprep.subr.mxu0 0.0
        %3267 = vmatpush1.msra.mxu0 %v3120
        %3268 = vmatprep.subr.mxu0 0.0
        %3269 = vmatpush1.msra.mxu0 %v3121
        %3270 = vmatprep.subr.mxu0 0.0
        %3271 = vmatpush1.msra.mxu0 %v3122
        %3272 = vmatprep.subr.mxu0 0.0
        %3273 = vmatpush1.msra.mxu0 %v3123
        %3274 = vmatprep.subr.mxu0 0.0
        %3275 = vmatpush1.msra.mxu0 0.0
        %3276 = vmatprep.subr.mxu0 0.0
        %3277 = vmatpush1.msra.mxu0 0.0
        %3278 = vmatprep.subr.mxu0 0.0
        %3279 = vmatpush1.msra.mxu0 0.0
        %3280 = vmatprep.subr.mxu0 0.0
        %3281 = vmatpush1.msra.mxu0 0.0
        %3282 = vmatprep.subr.mxu0 0.0
        %3283 = vmatpush1.msra.mxu0 0.0
        %3284 = vmatprep.subr.mxu0 0.0
        %3285 = vmatpush1.msra.mxu0 0.0
        %3286 = vmatprep.subr.mxu0 0.0
        %3287 = vmatpush1.msra.mxu0 0.0
        %3288 = vmatprep.subr.mxu0 0.0
        %3289 = vmatpush1.msra.mxu0 0.0
        %3290 = vmatprep.subr.mxu0 0.0
        %3291 = vmatpush1.msra.mxu0 0.0
        %3292 = vmatprep.subr.mxu0 0.0
        %3293 = vmatpush1.msra.mxu0 0.0
        %3294 = vmatprep.subr.mxu0 0.0
        %3295 = vmatpush1.msra.mxu0 0.0
        %3296 = vmatprep.subr.mxu0 0.0
        %3297 = vmatpush1.msra.mxu0 0.0
        %3298 = vmatprep.subr.mxu0 0.0
        %3299 = vmatpush1.msra.mxu0 0.0
        %3300 = vmatprep.subr.mxu0 0.0
        %3301 = vmatpush1.msra.mxu0 0.0
        %3302 = vmatprep.subr.mxu0 0.0
        %3303 = vmatpush1.msra.mxu0 0.0
        %3304 = vmatprep.subr.mxu0 0.0
        %3305 = vmatpush1.msra.mxu0 0.0
        %3306 = vmatprep.subr.mxu0 0.0
        %3307 = vmatpush1.msra.mxu0 0.0
        %3308 = vmatprep.subr.mxu0 0.0
        %3309 = vmatpush1.msra.mxu0 0.0
        %3310 = vmatprep.subr.mxu0 0.0
        %3311 = vmatpush1.msra.mxu0 0.0
        %3312 = vmatprep.subr.mxu0 0.0
        %3313 = vmatpush1.msra.mxu0 0.0
        %3314 = vmatprep.subr.mxu0 0.0
        %3315 = vmatpush1.msra.mxu0 0.0
        %3316 = vmatprep.subr.mxu0 0.0
        %3317 = vmatpush1.msra.mxu0 0.0
        %3318 = vmatprep.subr.mxu0 0.0
        %3319 = vmatpush1.msra.mxu0 0.0
        %3320 = vmatprep.subr.mxu0 0.0
        %3321 = vmatpush1.msra.mxu0 0.0
        %3322 = vmatprep.mubr.f32.mxu0 0.0
        %3323 = vmatmul.mubr.f32.gmra.mrb[0].mxu0 %v3244
        %v3324 = vpop.f32.mrb[0].mxu0
        %v3325 = vadd.f32 %v3220, %v3324
        %v3326 = vpop.f32.mrb[0].mxu0
        %3327 = vmatprep.mubr.f32.mxu0 0.0
        %3328 = vmatmul.mubr.f32.gmra.mrb[0].mxu0 %v3247
        %v3329 = vpop.f32.mrb[0].mxu0
        %v3330 = vadd.f32 %v3225, %v3329
        %v3331 = vpop.f32.mrb[0].mxu0
        %3332 = vmatprep.mubr.f32.mxu0 0.0
        %3333 = vmatmul.mubr.f32.gmra.mrb[0].mxu0 %v3250
        %v3334 = vpop.f32.mrb[0].mxu0
        %v3335 = vadd.f32 %v3230, %v3334
        %v3336 = vpop.f32.mrb[0].mxu0
        %3337 = vmatprep.mubr.f32.mxu0 0.0
        %3338 = vmatmul.mubr.f32.gmra.mrb[0].mxu0 %v3253
        %v3339 = vpop.f32.mrb[0].mxu0
        %v3340 = vadd.f32 %v3235, %v3339
        %v3341 = vpop.f32.mrb[0].mxu0
        %3342 = vmatprep.mubr.f32.mxu0 0.0
        %3343 = vmatmul.mubr.f32.gmra.mrb[0].mxu0 %v3256
        %v3344 = vpop.f32.mrb[0].mxu0
        %v3345 = vadd.f32 %v3240, %v3344
        %v3346 = vpop.f32.mrb[0].mxu0
        %3347 = vdwg.mxu0
        %v3348 = vld [vmem:[#allocation2 + $0x2] sm:$0xff]
        %v3349 = vld [vmem:[#allocation2 + $0xa] sm:$0xff]
        %v3350 = vld [vmem:[#allocation2 + $0x12] sm:$0xff]
        %v3351 = vld [vmem:[#allocation2 + $0x1a] sm:$0xff]
        %v3352 = vld [vmem:[#allocation2 + $0x22] sm:$0xff]
        %s3353 = scalar_lea.vmem %s13, 128
        %v3354 = vld [vmem:[%s3353] sm:$0xff]
        %v3355 = vld [vmem:[%s3353 + $0x8] sm:$0xff]
        %v3356 = vld [vmem:[%s3353 + $0x10] sm:$0xff]
        %v3357 = vld [vmem:[%s3353 + $0x18] sm:$0xff]
        %v3358 = vld [vmem:[%s3353 + $0x20] sm:$0xff]
        %v3359 = vld [vmem:[%s3353 + $0x28] sm:$0xff]
        %v3360 = vld [vmem:[%s3353 + $0x30] sm:$0xff]
        %v3361 = vld [vmem:[%s3353 + $0x38] sm:$0xff]
        %v3363 = vsel %vm1176, %v3348, 0
        %v3366 = vsel %vm1176, %v3349, 0
        %v3369 = vsel %vm1176, %v3350, 0
        %v3372 = vsel %vm1176, %v3351, 0
        %v3375 = vsel %vm1176, %v3352, 0
        %3377 = vmatprep.subr.mxu0 0.0
        %3378 = vmatpush1.msra.mxu0 %v3354
        %3379 = vmatprep.subr.mxu0 0.0
        %3380 = vmatpush1.msra.mxu0 %v3355
        %3381 = vmatprep.subr.mxu0 0.0
        %3382 = vmatpush1.msra.mxu0 %v3356
        %3383 = vmatprep.subr.mxu0 0.0
        %3384 = vmatpush1.msra.mxu0 %v3357
        %3385 = vmatprep.subr.mxu0 0.0
        %3386 = vmatpush1.msra.mxu0 %v3358
        %3387 = vmatprep.subr.mxu0 0.0
        %3388 = vmatpush1.msra.mxu0 %v3359
        %3389 = vmatprep.subr.mxu0 0.0
        %3390 = vmatpush1.msra.mxu0 %v3360
        %3391 = vmatprep.subr.mxu0 0.0
        %3392 = vmatpush1.msra.mxu0 %v3361
        %3393 = vmatprep.subr.mxu0 0.0
        %3394 = vmatpush1.msra.mxu0 0.0
        %3395 = vmatprep.subr.mxu0 0.0
        %3396 = vmatpush1.msra.mxu0 0.0
        %3397 = vmatprep.subr.mxu0 0.0
        %3398 = vmatpush1.msra.mxu0 0.0
        %3399 = vmatprep.subr.mxu0 0.0
        %3400 = vmatpush1.msra.mxu0 0.0
        %3401 = vmatprep.subr.mxu0 0.0
        %3402 = vmatpush1.msra.mxu0 0.0
        %3403 = vmatprep.subr.mxu0 0.0
        %3404 = vmatpush1.msra.mxu0 0.0
        %3405 = vmatprep.subr.mxu0 0.0
        %3406 = vmatpush1.msra.mxu0 0.0
        %3407 = vmatprep.subr.mxu0 0.0
        %3408 = vmatpush1.msra.mxu0 0.0
        %3409 = vmatprep.subr.mxu0 0.0
        %3410 = vmatpush1.msra.mxu0 0.0
        %3411 = vmatprep.subr.mxu0 0.0
        %3412 = vmatpush1.msra.mxu0 0.0
        %3413 = vmatprep.subr.mxu0 0.0
        %3414 = vmatpush1.msra.mxu0 0.0
        %3415 = vmatprep.subr.mxu0 0.0
        %3416 = vmatpush1.msra.mxu0 0.0
        %3417 = vmatprep.subr.mxu0 0.0
        %3418 = vmatpush1.msra.mxu0 0.0
        %3419 = vmatprep.subr.mxu0 0.0
        %3420 = vmatpush1.msra.mxu0 0.0
        %3421 = vmatprep.subr.mxu0 0.0
        %3422 = vmatpush1.msra.mxu0 0.0
        %3423 = vmatprep.subr.mxu0 0.0
        %3424 = vmatpush1.msra.mxu0 0.0
        %3425 = vmatprep.subr.mxu0 0.0
        %3426 = vmatpush1.msra.mxu0 0.0
        %3427 = vmatprep.subr.mxu0 0.0
        %3428 = vmatpush1.msra.mxu0 0.0
        %3429 = vmatprep.subr.mxu0 0.0
        %3430 = vmatpush1.msra.mxu0 0.0
        %3431 = vmatprep.subr.mxu0 0.0
        %3432 = vmatpush1.msra.mxu0 0.0
        %3433 = vmatprep.subr.mxu0 0.0
        %3434 = vmatpush1.msra.mxu0 0.0
        %3435 = vmatprep.subr.mxu0 0.0
        %3436 = vmatpush1.msra.mxu0 0.0
        %3437 = vmatprep.subr.mxu0 0.0
        %3438 = vmatpush1.msra.mxu0 0.0
        %3439 = vmatprep.subr.mxu0 0.0
        %3440 = vmatpush1.msra.mxu0 0.0
        %3441 = vmatprep.mubr.f32.mxu0 0.0
        %3442 = vmatmul.mubr.f32.gmra.mrb[0].mxu0 %v3363
        %v3443 = vpop.f32.mrb[0].mxu0
        %v3444 = vadd.f32 0.0, %v3443
        %v3445 = vpop.f32.mrb[0].mxu0
        %3446 = vmatprep.mubr.f32.mxu0 0.0
        %3447 = vmatmul.mubr.f32.gmra.mrb[0].mxu0 %v3366
        %v3448 = vpop.f32.mrb[0].mxu0
        %v3449 = vadd.f32 0.0, %v3448
        %v3450 = vpop.f32.mrb[0].mxu0
        %3451 = vmatprep.mubr.f32.mxu0 0.0
        %3452 = vmatmul.mubr.f32.gmra.mrb[0].mxu0 %v3369
        %v3453 = vpop.f32.mrb[0].mxu0
        %v3454 = vadd.f32 0.0, %v3453
        %v3455 = vpop.f32.mrb[0].mxu0
        %3456 = vmatprep.mubr.f32.mxu0 0.0
        %3457 = vmatmul.mubr.f32.gmra.mrb[0].mxu0 %v3372
        %v3458 = vpop.f32.mrb[0].mxu0
        %v3459 = vadd.f32 0.0, %v3458
        %v3460 = vpop.f32.mrb[0].mxu0
        %3461 = vmatprep.mubr.f32.mxu0 0.0
        %3462 = vmatmul.mubr.f32.gmra.mrb[0].mxu0 %v3375
        %v3463 = vpop.f32.mrb[0].mxu0
        %v3464 = vadd.f32 0.0, %v3463
        %v3465 = vpop.f32.mrb[0].mxu0
        %3466 = vdwg.mxu0
        %v3467 = vadd.f32 %v3325, %v3444
        %v3468 = vadd.f32 %v3330, %v3449
        %v3469 = vadd.f32 %v3335, %v3454
        %v3470 = vadd.f32 %v3340, %v3459
        %v3471 = vadd.f32 %v3345, %v3464
        %v3472 = vld [vmem:[#allocation2 + $0x3] sm:$0xff]
        %v3473 = vld [vmem:[#allocation2 + $0xb] sm:$0xff]
        %v3474 = vld [vmem:[#allocation2 + $0x13] sm:$0xff]
        %v3475 = vld [vmem:[#allocation2 + $0x1b] sm:$0xff]
        %v3476 = vld [vmem:[#allocation2 + $0x23] sm:$0xff]
        %s3477 = scalar_lea.vmem %s13, 192
        %v3478 = vld [vmem:[%s3477] sm:$0xff]
        %v3479 = vld [vmem:[%s3477 + $0x8] sm:$0xff]
        %v3480 = vld [vmem:[%s3477 + $0x10] sm:$0xff]
        %v3481 = vld [vmem:[%s3477 + $0x18] sm:$0xff]
        %v3482 = vld [vmem:[%s3477 + $0x20] sm:$0xff]
        %v3483 = vld [vmem:[%s3477 + $0x28] sm:$0xff]
        %v3484 = vld [vmem:[%s3477 + $0x30] sm:$0xff]
        %v3485 = vld [vmem:[%s3477 + $0x38] sm:$0xff]
        %v3487 = vsel %vm1176, %v3472, 0
        %v3490 = vsel %vm1176, %v3473, 0
        %v3493 = vsel %vm1176, %v3474, 0
        %v3496 = vsel %vm1176, %v3475, 0
        %v3499 = vsel %vm1176, %v3476, 0
        %3501 = vmatprep.subr.mxu0 0.0
        %3502 = vmatpush1.msra.mxu0 %v3478
        %3503 = vmatprep.subr.mxu0 0.0
        %3504 = vmatpush1.msra.mxu0 %v3479
        %3505 = vmatprep.subr.mxu0 0.0
        %3506 = vmatpush1.msra.mxu0 %v3480
        %3507 = vmatprep.subr.mxu0 0.0
        %3508 = vmatpush1.msra.mxu0 %v3481
        %3509 = vmatprep.subr.mxu0 0.0
        %3510 = vmatpush1.msra.mxu0 %v3482
        %3511 = vmatprep.subr.mxu0 0.0
        %3512 = vmatpush1.msra.mxu0 %v3483
        %3513 = vmatprep.subr.mxu0 0.0
        %3514 = vmatpush1.msra.mxu0 %v3484
        %3515 = vmatprep.subr.mxu0 0.0
        %3516 = vmatpush1.msra.mxu0 %v3485
        %3517 = vmatprep.subr.mxu0 0.0
        %3518 = vmatpush1.msra.mxu0 0.0
        %3519 = vmatprep.subr.mxu0 0.0
        %3520 = vmatpush1.msra.mxu0 0.0
        %3521 = vmatprep.subr.mxu0 0.0
        %3522 = vmatpush1.msra.mxu0 0.0
        %3523 = vmatprep.subr.mxu0 0.0
        %3524 = vmatpush1.msra.mxu0 0.0
        %3525 = vmatprep.subr.mxu0 0.0
        %3526 = vmatpush1.msra.mxu0 0.0
        %3527 = vmatprep.subr.mxu0 0.0
        %3528 = vmatpush1.msra.mxu0 0.0
        %3529 = vmatprep.subr.mxu0 0.0
        %3530 = vmatpush1.msra.mxu0 0.0
        %3531 = vmatprep.subr.mxu0 0.0
        %3532 = vmatpush1.msra.mxu0 0.0
        %3533 = vmatprep.subr.mxu0 0.0
        %3534 = vmatpush1.msra.mxu0 0.0
        %3535 = vmatprep.subr.mxu0 0.0
        %3536 = vmatpush1.msra.mxu0 0.0
        %3537 = vmatprep.subr.mxu0 0.0
        %3538 = vmatpush1.msra.mxu0 0.0
        %3539 = vmatprep.subr.mxu0 0.0
        %3540 = vmatpush1.msra.mxu0 0.0
        %3541 = vmatprep.subr.mxu0 0.0
        %3542 = vmatpush1.msra.mxu0 0.0
        %3543 = vmatprep.subr.mxu0 0.0
        %3544 = vmatpush1.msra.mxu0 0.0
        %3545 = vmatprep.subr.mxu0 0.0
        %3546 = vmatpush1.msra.mxu0 0.0
        %3547 = vmatprep.subr.mxu0 0.0
        %3548 = vmatpush1.msra.mxu0 0.0
        %3549 = vmatprep.subr.mxu0 0.0
        %3550 = vmatpush1.msra.mxu0 0.0
        %3551 = vmatprep.subr.mxu0 0.0
        %3552 = vmatpush1.msra.mxu0 0.0
        %3553 = vmatprep.subr.mxu0 0.0
        %3554 = vmatpush1.msra.mxu0 0.0
        %3555 = vmatprep.subr.mxu0 0.0
        %3556 = vmatpush1.msra.mxu0 0.0
        %3557 = vmatprep.subr.mxu0 0.0
        %3558 = vmatpush1.msra.mxu0 0.0
        %3559 = vmatprep.subr.mxu0 0.0
        %3560 = vmatpush1.msra.mxu0 0.0
        %3561 = vmatprep.subr.mxu0 0.0
        %3562 = vmatpush1.msra.mxu0 0.0
        %3563 = vmatprep.subr.mxu0 0.0
        %3564 = vmatpush1.msra.mxu0 0.0
        %3565 = vmatprep.mubr.f32.mxu0 0.0
        %3566 = vmatmul.mubr.f32.gmra.mrb[0].mxu0 %v3487
        %v3567 = vpop.f32.mrb[0].mxu0
        %v3568 = vadd.f32 0.0, %v3567
        %v3569 = vpop.f32.mrb[0].mxu0
        %3570 = vmatprep.mubr.f32.mxu0 0.0
        %3571 = vmatmul.mubr.f32.gmra.mrb[0].mxu0 %v3490
        %v3572 = vpop.f32.mrb[0].mxu0
        %v3573 = vadd.f32 0.0, %v3572
        %v3574 = vpop.f32.mrb[0].mxu0
        %3575 = vmatprep.mubr.f32.mxu0 0.0
        %3576 = vmatmul.mubr.f32.gmra.mrb[0].mxu0 %v3493
        %v3577 = vpop.f32.mrb[0].mxu0
        %v3578 = vadd.f32 0.0, %v3577
        %v3579 = vpop.f32.mrb[0].mxu0
        %3580 = vmatprep.mubr.f32.mxu0 0.0
        %3581 = vmatmul.mubr.f32.gmra.mrb[0].mxu0 %v3496
        %v3582 = vpop.f32.mrb[0].mxu0
        %v3583 = vadd.f32 0.0, %v3582
        %v3584 = vpop.f32.mrb[0].mxu0
        %3585 = vmatprep.mubr.f32.mxu0 0.0
        %3586 = vmatmul.mubr.f32.gmra.mrb[0].mxu0 %v3499
        %v3587 = vpop.f32.mrb[0].mxu0
        %v3588 = vadd.f32 0.0, %v3587
        %v3589 = vpop.f32.mrb[0].mxu0
        %3590 = vdwg.mxu0
        %v3591 = vadd.f32 %v3467, %v3568
        %v3592 = vadd.f32 %v3468, %v3573
        %v3593 = vadd.f32 %v3469, %v3578
        %v3594 = vadd.f32 %v3470, %v3583
        %v3595 = vadd.f32 %v3471, %v3588
        %v3596 = vld [vmem:[#allocation2 + $0x4] sm:$0xff]
        %v3597 = vld [vmem:[#allocation2 + $0xc] sm:$0xff]
        %v3598 = vld [vmem:[#allocation2 + $0x14] sm:$0xff]
        %v3599 = vld [vmem:[#allocation2 + $0x1c] sm:$0xff]
        %v3600 = vld [vmem:[#allocation2 + $0x24] sm:$0xff]
        %s3601 = scalar_lea.vmem %s13, 256
        %v3602 = vld [vmem:[%s3601] sm:$0xff]
        %v3603 = vld [vmem:[%s3601 + $0x8] sm:$0xff]
        %v3604 = vld [vmem:[%s3601 + $0x10] sm:$0xff]
        %v3605 = vld [vmem:[%s3601 + $0x18] sm:$0xff]
        %v3606 = vld [vmem:[%s3601 + $0x20] sm:$0xff]
        %v3607 = vld [vmem:[%s3601 + $0x28] sm:$0xff]
        %v3608 = vld [vmem:[%s3601 + $0x30] sm:$0xff]
        %v3609 = vld [vmem:[%s3601 + $0x38] sm:$0xff]
        %v3611 = vsel %vm1176, %v3596, 0
        %v3614 = vsel %vm1176, %v3597, 0
        %v3617 = vsel %vm1176, %v3598, 0
        %v3620 = vsel %vm1176, %v3599, 0
        %v3623 = vsel %vm1176, %v3600, 0
        %3625 = vmatprep.subr.mxu0 0.0
        %3626 = vmatpush1.msra.mxu0 %v3602
        %3627 = vmatprep.subr.mxu0 0.0
        %3628 = vmatpush1.msra.mxu0 %v3603
        %3629 = vmatprep.subr.mxu0 0.0
        %3630 = vmatpush1.msra.mxu0 %v3604
        %3631 = vmatprep.subr.mxu0 0.0
        %3632 = vmatpush1.msra.mxu0 %v3605
        %3633 = vmatprep.subr.mxu0 0.0
        %3634 = vmatpush1.msra.mxu0 %v3606
        %3635 = vmatprep.subr.mxu0 0.0
        %3636 = vmatpush1.msra.mxu0 %v3607
        %3637 = vmatprep.subr.mxu0 0.0
        %3638 = vmatpush1.msra.mxu0 %v3608
        %3639 = vmatprep.subr.mxu0 0.0
        %3640 = vmatpush1.msra.mxu0 %v3609
        %3641 = vmatprep.subr.mxu0 0.0
        %3642 = vmatpush1.msra.mxu0 0.0
        %3643 = vmatprep.subr.mxu0 0.0
        %3644 = vmatpush1.msra.mxu0 0.0
        %3645 = vmatprep.subr.mxu0 0.0
        %3646 = vmatpush1.msra.mxu0 0.0
        %3647 = vmatprep.subr.mxu0 0.0
        %3648 = vmatpush1.msra.mxu0 0.0
        %3649 = vmatprep.subr.mxu0 0.0
        %3650 = vmatpush1.msra.mxu0 0.0
        %3651 = vmatprep.subr.mxu0 0.0
        %3652 = vmatpush1.msra.mxu0 0.0
        %3653 = vmatprep.subr.mxu0 0.0
        %3654 = vmatpush1.msra.mxu0 0.0
        %3655 = vmatprep.subr.mxu0 0.0
        %3656 = vmatpush1.msra.mxu0 0.0
        %3657 = vmatprep.subr.mxu0 0.0
        %3658 = vmatpush1.msra.mxu0 0.0
        %3659 = vmatprep.subr.mxu0 0.0
        %3660 = vmatpush1.msra.mxu0 0.0
        %3661 = vmatprep.subr.mxu0 0.0
        %3662 = vmatpush1.msra.mxu0 0.0
        %3663 = vmatprep.subr.mxu0 0.0
        %3664 = vmatpush1.msra.mxu0 0.0
        %3665 = vmatprep.subr.mxu0 0.0
        %3666 = vmatpush1.msra.mxu0 0.0
        %3667 = vmatprep.subr.mxu0 0.0
        %3668 = vmatpush1.msra.mxu0 0.0
        %3669 = vmatprep.subr.mxu0 0.0
        %3670 = vmatpush1.msra.mxu0 0.0
        %3671 = vmatprep.subr.mxu0 0.0
        %3672 = vmatpush1.msra.mxu0 0.0
        %3673 = vmatprep.subr.mxu0 0.0
        %3674 = vmatpush1.msra.mxu0 0.0
        %3675 = vmatprep.subr.mxu0 0.0
        %3676 = vmatpush1.msra.mxu0 0.0
        %3677 = vmatprep.subr.mxu0 0.0
        %3678 = vmatpush1.msra.mxu0 0.0
        %3679 = vmatprep.subr.mxu0 0.0
        %3680 = vmatpush1.msra.mxu0 0.0
        %3681 = vmatprep.subr.mxu0 0.0
        %3682 = vmatpush1.msra.mxu0 0.0
        %3683 = vmatprep.subr.mxu0 0.0
        %3684 = vmatpush1.msra.mxu0 0.0
        %3685 = vmatprep.subr.mxu0 0.0
        %3686 = vmatpush1.msra.mxu0 0.0
        %3687 = vmatprep.subr.mxu0 0.0
        %3688 = vmatpush1.msra.mxu0 0.0
        %3689 = vmatprep.mubr.f32.mxu0 0.0
        %3690 = vmatmul.mubr.f32.gmra.mrb[0].mxu0 %v3611
        %v3691 = vpop.f32.mrb[0].mxu0
        %v3692 = vadd.f32 0.0, %v3691
        %v3693 = vpop.f32.mrb[0].mxu0
        %3694 = vmatprep.mubr.f32.mxu0 0.0
        %3695 = vmatmul.mubr.f32.gmra.mrb[0].mxu0 %v3614
        %v3696 = vpop.f32.mrb[0].mxu0
        %v3697 = vadd.f32 0.0, %v3696
        %v3698 = vpop.f32.mrb[0].mxu0
        %3699 = vmatprep.mubr.f32.mxu0 0.0
        %3700 = vmatmul.mubr.f32.gmra.mrb[0].mxu0 %v3617
        %v3701 = vpop.f32.mrb[0].mxu0
        %v3702 = vadd.f32 0.0, %v3701
        %v3703 = vpop.f32.mrb[0].mxu0
        %3704 = vmatprep.mubr.f32.mxu0 0.0
        %3705 = vmatmul.mubr.f32.gmra.mrb[0].mxu0 %v3620
        %v3706 = vpop.f32.mrb[0].mxu0
        %v3707 = vadd.f32 0.0, %v3706
        %v3708 = vpop.f32.mrb[0].mxu0
        %3709 = vmatprep.mubr.f32.mxu0 0.0
        %3710 = vmatmul.mubr.f32.gmra.mrb[0].mxu0 %v3623
        %v3711 = vpop.f32.mrb[0].mxu0
        %v3712 = vadd.f32 0.0, %v3711
        %v3713 = vpop.f32.mrb[0].mxu0
        %3714 = vdwg.mxu0
        %v3715 = vadd.f32 %v3591, %v3692
        %v3716 = vadd.f32 %v3592, %v3697
        %v3717 = vadd.f32 %v3593, %v3702
        %v3718 = vadd.f32 %v3594, %v3707
        %v3719 = vadd.f32 %v3595, %v3712
        %v3720 = vld [vmem:[%s14] sm:$0x1]
        %v3722 = vlaneseq
        %v3723 = vshrl.u32 %v3722, 7
        %v3724 = vsub.s32 0, %v3723
        %v3725 = vrot.slane %v3720, %v3724
        %v3727 = vmul.f32 %v3715, %v3725
        %v3728 = vmul.f32 %v3716, %v3725
        %v3729 = vmul.f32 %v3717, %v3725
        %v3730 = vmul.f32 %v3718, %v3725
        %v3731 = vmul.f32 %v3719, %v3725
        %v3732 = vld [vmem:[%s15] sm:$0x1]
        %v3734 = vlaneseq
        %v3735 = vshrl.u32 %v3734, 7
        %v3736 = vsub.s32 0, %v3735
        %v3737 = vrot.slane %v3732, %v3736
        %v3739 = vadd.f32 %v3727, %v3737
        %v3740 = vadd.f32 %v3728, %v3737
        %v3741 = vadd.f32 %v3729, %v3737
        %v3742 = vadd.f32 %v3730, %v3737
        %v3743 = vadd.f32 %v3731, %v3737
        %3744 = vst.msk [vmem:[%s551] sm:$0xff] %vm562, %v3739
        %3745 = vst.msk [vmem:[%s551 + $0x8] sm:$0xff] %vm562, %v3740
        %3746 = vst.msk [vmem:[%s551 + $0x10] sm:$0xff] %vm562, %v3741
        %3747 = vst.msk [vmem:[%s551 + $0x18] sm:$0xff] %vm562, %v3742
        %3748 = vst.msk [vmem:[%s551 + $0x20] sm:$0xff] %vm562, %v3743
        %p3749 = scmp.lt.s32.totalorder %s29, 1
        %s3750 = scalar_select %p3749, %s29, 1
        %s3751 = smul.addr %s3750, 5
        %s3752 = smul.addr %s3751, 8
        %s3753 = scalar_lea.vmem %s16, %s3752
        // Predicated region
        $region93: #{tpu_custom_call.1} parent=83 // pred_check
          %p3754 = pneg %p388
        $region94: #{tpu_custom_call.1} parent=83 // pred_check_branch
          %3756 = sbr.rel (%p3754) target = $region96
        $region95: #{tpu_custom_call.1} parent=83 // pred_region
          _
        $region96: #{tpu_custom_call.1} parent=83 // pred_fallthru
          _
      $region84: #{tpu_custom_call.1} parent=5 // pred_fallthru
        _
      %p3757 = scmp.le.s32.totalorder 2, %s24
      // Predicated region
      $region97: #{tpu_custom_call.1} parent=5 // pred_check
        %p3758 = pneg %p3757
      $region98: #{tpu_custom_call.1} parent=5 // pred_check_branch
        %3760 = sbr.rel (%p3758) target = $region100
      $region99: #{tpu_custom_call.1} parent=5 // pred_region
        %s3761 = ssub.s32 %s24, 2
        // Predicated region
        $region101: #{tpu_custom_call.1} parent=99 // pred_check
          %p3762 = pneg %p394
        $region102: #{tpu_custom_call.1} parent=99 // pred_check_branch
          %3764 = sbr.rel (%p3762) target = $region104
        $region103: #{tpu_custom_call.1} parent=99 // pred_region
          %p3765 = scmp.lt.s32.totalorder %s30, 1
          %s3766 = scalar_select %p3765, %s30, 1
          %s3767 = smul.addr %s3766, 5
          %s3768 = smul.addr %s3767, 8
          %s3769 = scalar_lea.vmem %s16, %s3768
        $region104: #{tpu_custom_call.1} parent=99 // pred_fallthru
          _
      $region100: #{tpu_custom_call.1} parent=5 // pred_fallthru
        _
    $region6: #{tpu_custom_call.1} parent=1 // loop_footer
      %s28 = sadd.s32 1, %s24
    $region7: #{tpu_custom_call.1} parent=1 // loop_footer_branch
      %23 = sbr.rel target = $region3
    $region8: #{tpu_custom_call.1} parent=1 // loop_exit
      _
    %3770 = vsyncpa [#allocation5], 1
    %s3771 = scalar_lea.sflag [#allocation5], 1
    %3772 = vsyncpa %s3771, 1
    %3773 = vsyncpa [#allocation7], 1

</llo_original>
